<compile_context>
chip_gen: v6e
topology: v6e:2x2x1
jax: 0.10.0
libtpu: 0.0.40
codegen_flags: <defaults>
</compile_context>

<pallas_src>
import math
import jax
import jax.numpy as jnp
from jax.experimental import pallas as pl
from jax.experimental.pallas import tpu as pltpu

# ---- small BERT config (bert_config analogue) ----
VOCAB = 100
HIDDEN = 32
N_LAYERS = 2
N_HEADS = 4
HEAD_DIM = HIDDEN // N_HEADS
INTER = 64
MAX_POS = 64
TYPE_VOCAB = 2
LN_EPS = 1e-12


# ------------------------- fused encoder kernel -------------------------

def _bert_encoder_kernel(
    emb_ref, mask_ref,
    emb_g_ref, emb_b_ref,
    wqkv_ref, bqkv_ref,
    wo_ref, bo_ref,
    ln1g_ref, ln1b_ref,
    wi_ref, bi_ref,
    wo2_ref, bo2_ref,
    ln2g_ref, ln2b_ref,
    out_ref,
):
    B, S = mask_ref.shape

    def layernorm(y, g, b):
        mu = jnp.mean(y, axis=-1, keepdims=True)
        d = y - mu
        var = jnp.mean(d * d, axis=-1, keepdims=True)
        return d * jax.lax.rsqrt(var + LN_EPS) * g + b

    def matmul(x, w):
        # bf16 MXU inputs, f32 accumulate.
        return jnp.dot(x.astype(jnp.bfloat16), w, preferred_element_type=jnp.float32)

    # ---- embedding LayerNorm (no residual) ----
    h = layernorm(emb_ref[...], emb_g_ref[...], emb_b_ref[...])        # [B*S, H] f32

    # ---- additive attention mask bias, hoisted out of the layer loop ----
    bias = (1.0 - mask_ref[...]) * -10000.0                            # [B, S]
    scale = 1.0 / math.sqrt(HEAD_DIM)
    inv_sqrt2 = 1.0 / math.sqrt(2.0)

    # ---- N_LAYERS transformer layers, fully unrolled in VMEM ----
    for l in range(N_LAYERS):
        # fused QKV projection: [B*S, 3H]
        qkv = matmul(h, wqkv_ref[l]) + bqkv_ref[l]
        q = qkv[:, 0:HIDDEN]
        k = qkv[:, HIDDEN:2 * HIDDEN]
        v = qkv[:, 2 * HIDDEN:3 * HIDDEN]

        # multi-head self attention, all heads / batches inside this kernel
        ctx_rows = []
        for b in range(B):
            r0 = b * S
            bias_b = bias[b:b + 1, :]                                  # [1, S]
            head_outs = []
            for n in range(N_HEADS):
                c0 = n * HEAD_DIM
                qh = q[r0:r0 + S, c0:c0 + HEAD_DIM]                    # [S, HD]
                kh = k[r0:r0 + S, c0:c0 + HEAD_DIM]
                vh = v[r0:r0 + S, c0:c0 + HEAD_DIM]
                s = jnp.dot(qh, kh.T, preferred_element_type=jnp.float32) * scale
                s = s + bias_b
                s = s - jnp.max(s, axis=-1, keepdims=True)
                p = jnp.exp(s)
                p = p * pl.reciprocal(jnp.sum(p, axis=-1, keepdims=True), approx=True)
                head_outs.append(jnp.dot(p, vh, preferred_element_type=jnp.float32))
            # lane-dense per-batch context: [S, H]
            ctx_rows.append(jnp.concatenate(head_outs, axis=-1))
        ctx = jnp.concatenate(ctx_rows, axis=0)                        # [B*S, H]

        attn_out = matmul(ctx, wo_ref[l]) + bo_ref[l]
        h = layernorm(attn_out + h, ln1g_ref[l], ln1b_ref[l])

        inter = matmul(h, wi_ref[l]) + bi_ref[l]
        # exact GELU as in pytorch-pretrained-bert: x * 0.5 * (1 + erf(x/sqrt(2)))
        inter = inter * 0.5 * (1.0 + jax.lax.erf(inter * inv_sqrt2))
        ffn_out = matmul(inter, wo2_ref[l]) + bo2_ref[l]
        h = layernorm(ffn_out + h, ln2g_ref[l], ln2b_ref[l])

    out_ref[...] = h


def bert_encoder(emb, mask, params):
    """emb: [B*S, H] f32 summed embeddings; mask: [B, S] f32 (1 = keep)."""
    BS, H = emb.shape

    def full_spec(arr):
        nd = arr.ndim
        return pl.BlockSpec(arr.shape, lambda i, _n=nd: (0,) * _n)

    def w16(name):
        return params[name].astype(jnp.bfloat16)

    inputs = (
        emb, mask,
        params["emb_ln_g"], params["emb_ln_b"],
        w16("wqkv"), params["bqkv"],
        w16("wo"), params["bo"],
        params["ln1_g"], params["ln1_b"],
        w16("wi"), params["bi"],
        w16("wo2"), params["bo2"],
        params["ln2_g"], params["ln2_b"],
    )
    return pl.pallas_call(
        _bert_encoder_kernel,
        out_shape=jax.ShapeDtypeStruct((BS, H), jnp.float32),
        grid=(1,),
        in_specs=[full_spec(a) for a in inputs],
        out_specs=pl.BlockSpec((BS, H), lambda i: (0, 0)),
        compiler_params=pltpu.CompilerParams(
            dimension_semantics=("arbitrary",),
            vmem_limit_bytes=32 * 1024 * 1024,
        ),
    )(*inputs)


# ------------------------- parameters -------------------------

def init_params(key):
    std = 0.02
    L, H, I = N_LAYERS, HIDDEN, INTER

    def nrm(k, shape):
        return (jax.random.normal(k, shape, jnp.float32) * std).astype(jnp.float32)

    keys = iter(jax.random.split(key, 16))
    params = {
        "word_emb": nrm(next(keys), (VOCAB, H)),
        "pos_emb": nrm(next(keys), (MAX_POS, H)),
        "type_emb": nrm(next(keys), (TYPE_VOCAB, H)),
        "emb_ln_g": jnp.ones((1, H), jnp.float32),
        "emb_ln_b": jnp.zeros((1, H), jnp.float32),
        # fused QKV weight: wq|wk|wv concatenated along the output axis
        "wqkv": nrm(next(keys), (L, H, 3 * H)),
        "bqkv": jnp.zeros((L, 1, 3 * H), jnp.float32),
        "wo": nrm(next(keys), (L, H, H)),
        "bo": jnp.zeros((L, 1, H), jnp.float32),
        "ln1_g": jnp.ones((L, 1, H), jnp.float32),
        "ln1_b": jnp.zeros((L, 1, H), jnp.float32),
        "wi": nrm(next(keys), (L, H, I)),
        "bi": jnp.zeros((L, 1, I), jnp.float32),
        "wo2": nrm(next(keys), (L, I, H)),
        "bo2": jnp.zeros((L, 1, H), jnp.float32),
        "ln2_g": jnp.ones((L, 1, H), jnp.float32),
        "ln2_b": jnp.zeros((L, 1, H), jnp.float32),
    }
    return params


# ------------------------- forward -------------------------

def bert_forward(params, x, segs, mask):
    """x, segs: int32 [B, S]; mask: [B, S] (1 = keep).  Returns top_vec [B, S, H]."""
    B, S = x.shape

    # embeddings (gather glue in plain JAX); LayerNorm + encoder fused in Pallas
    emb = (
        jnp.take(params["word_emb"], x, axis=0)
        + params["pos_emb"][None, :S, :]
        + jnp.take(params["type_emb"], segs, axis=0)
    ).astype(jnp.float32)
    h = bert_encoder(emb.reshape(B * S, HIDDEN), mask.astype(jnp.float32), params)
    return h.reshape(B, S, HIDDEN)  # top_vec = encoded_layers[-1]
    # TODO(synk): pooled output (second return of BertModel) is unused by Bert.forward; not implemented.


if __name__ == "__main__":
    key = jax.random.PRNGKey(0)
    kp, kx, ks = jax.random.split(key, 3)

    B, S = 2, 8
    params = init_params(kp)
    x = jax.random.randint(kx, (B, S), 0, VOCAB, dtype=jnp.int32)
    segs = jax.random.randint(ks, (B, S), 0, TYPE_VOCAB, dtype=jnp.int32)
    # mask: first sequence fully valid, second sequence padded after 5 tokens
    mask = jnp.array(
        [[1, 1, 1, 1, 1, 1, 1, 1],
         [1, 1, 1, 1, 1, 0, 0, 0]],
        dtype=jnp.float32,
    )

    fwd = jax.jit(bert_forward)
    top_vec = fwd(params, x, segs, mask)
    jax.block_until_ready(top_vec)
    assert top_vec.shape == (B, S, HIDDEN)
    assert bool(jnp.all(jnp.isfinite(top_vec)))
    print("KERNEL_OK")
</pallas_src>

<mosaic_0001>
module attributes {stable_mosaic.version = 11 : i64} {
  func.func @_bert_encoder_kernel(%arg0: i32, %arg1: memref<16x32xf32, #tpu.memory_space<vmem>>, %arg2: memref<2x8xf32, #tpu.memory_space<vmem>>, %arg3: memref<1x32xf32, #tpu.memory_space<vmem>>, %arg4: memref<1x32xf32, #tpu.memory_space<vmem>>, %arg5: memref<2x32x96xbf16, #tpu.memory_space<vmem>>, %arg6: memref<2x1x96xf32, #tpu.memory_space<vmem>>, %arg7: memref<2x32x32xbf16, #tpu.memory_space<vmem>>, %arg8: memref<2x1x32xf32, #tpu.memory_space<vmem>>, %arg9: memref<2x1x32xf32, #tpu.memory_space<vmem>>, %arg10: memref<2x1x32xf32, #tpu.memory_space<vmem>>, %arg11: memref<2x32x64xbf16, #tpu.memory_space<vmem>>, %arg12: memref<2x1x64xf32, #tpu.memory_space<vmem>>, %arg13: memref<2x64x32xbf16, #tpu.memory_space<vmem>>, %arg14: memref<2x1x32xf32, #tpu.memory_space<vmem>>, %arg15: memref<2x1x32xf32, #tpu.memory_space<vmem>>, %arg16: memref<2x1x32xf32, #tpu.memory_space<vmem>>, %arg17: memref<16x32xf32, #tpu.memory_space<vmem>>) attributes {dimension_semantics = [#tpu.dimension_semantics<arbitrary>], iteration_bounds = array<i64: 1>, scalar_prefetch = 0 : i64, scratch_operands = 0 : i64, tpu.core_type = #tpu.core_type<tc>, window_params = [{pipeline_mode = #tpu.pipeline_mode<synchronous>, transform_indices = @transform_0, window_bounds = array<i64: 16, 32>}, {pipeline_mode = #tpu.pipeline_mode<synchronous>, transform_indices = @transform_1, window_bounds = array<i64: 2, 8>}, {pipeline_mode = #tpu.pipeline_mode<synchronous>, transform_indices = @transform_2, window_bounds = array<i64: 1, 32>}, {pipeline_mode = #tpu.pipeline_mode<synchronous>, transform_indices = @transform_3, window_bounds = array<i64: 1, 32>}, {pipeline_mode = #tpu.pipeline_mode<synchronous>, transform_indices = @transform_4, window_bounds = array<i64: 2, 32, 96>}, {pipeline_mode = #tpu.pipeline_mode<synchronous>, transform_indices = @transform_5, window_bounds = array<i64: 2, 1, 96>}, {pipeline_mode = #tpu.pipeline_mode<synchronous>, transform_indices = @transform_6, window_bounds = array<i64: 2, 32, 32>}, {pipeline_mode = #tpu.pipeline_mode<synchronous>, transform_indices = @transform_7, window_bounds = array<i64: 2, 1, 32>}, {pipeline_mode = #tpu.pipeline_mode<synchronous>, transform_indices = @transform_8, window_bounds = array<i64: 2, 1, 32>}, {pipeline_mode = #tpu.pipeline_mode<synchronous>, transform_indices = @transform_9, window_bounds = array<i64: 2, 1, 32>}, {pipeline_mode = #tpu.pipeline_mode<synchronous>, transform_indices = @transform_10, window_bounds = array<i64: 2, 32, 64>}, {pipeline_mode = #tpu.pipeline_mode<synchronous>, transform_indices = @transform_11, window_bounds = array<i64: 2, 1, 64>}, {pipeline_mode = #tpu.pipeline_mode<synchronous>, transform_indices = @transform_12, window_bounds = array<i64: 2, 64, 32>}, {pipeline_mode = #tpu.pipeline_mode<synchronous>, transform_indices = @transform_13, window_bounds = array<i64: 2, 1, 32>}, {pipeline_mode = #tpu.pipeline_mode<synchronous>, transform_indices = @transform_14, window_bounds = array<i64: 2, 1, 32>}, {pipeline_mode = #tpu.pipeline_mode<synchronous>, transform_indices = @transform_15, window_bounds = array<i64: 2, 1, 32>}, {pipeline_mode = #tpu.pipeline_mode<synchronous>, transform_indices = @transform_16, window_bounds = array<i64: 16, 32>}]} {
    %c0 = arith.constant 0 : index
    %c0_0 = arith.constant 0 : index
    %0 = vector.load %arg1[%c0, %c0_0] : memref<16x32xf32, #tpu.memory_space<vmem>>, vector<16x32xf32>
    %c0_1 = arith.constant 0 : index
    %c0_2 = arith.constant 0 : index
    %1 = vector.load %arg3[%c0_1, %c0_2] : memref<1x32xf32, #tpu.memory_space<vmem>>, vector<1x32xf32>
    %c0_3 = arith.constant 0 : index
    %c0_4 = arith.constant 0 : index
    %2 = vector.load %arg4[%c0_3, %c0_4] : memref<1x32xf32, #tpu.memory_space<vmem>>, vector<1x32xf32>
    %cst = arith.constant dense<0.000000e+00> : vector<16xf32>
    %3 = vector.multi_reduction <add>, %0, %cst [1] : vector<16x32xf32> to vector<16xf32>
    %4 = vector.shape_cast %3 : vector<16xf32> to vector<16x1xf32>
    %cst_5 = arith.constant 3.200000e+01 : f32
    %5 = vector.broadcast %cst_5 : f32 to vector<16x1xf32>
    %6 = arith.divf %4, %5 : vector<16x1xf32>
    %7 = vector.broadcast %6 : vector<16x1xf32> to vector<16x32xf32>
    %8 = arith.subf %0, %7 : vector<16x32xf32>
    %9 = arith.mulf %8, %8 : vector<16x32xf32>
    %cst_6 = arith.constant dense<0.000000e+00> : vector<16xf32>
    %10 = vector.multi_reduction <add>, %9, %cst_6 [1] : vector<16x32xf32> to vector<16xf32>
    %11 = vector.shape_cast %10 : vector<16xf32> to vector<16x1xf32>
    %cst_7 = arith.constant 3.200000e+01 : f32
    %12 = vector.broadcast %cst_7 : f32 to vector<16x1xf32>
    %13 = arith.divf %11, %12 : vector<16x1xf32>
    %cst_8 = arith.constant 9.99999996E-13 : f32
    %14 = vector.broadcast %cst_8 : f32 to vector<16x1xf32>
    %15 = arith.addf %13, %14 : vector<16x1xf32>
    %16 = math.rsqrt %15 : vector<16x1xf32>
    %17 = vector.broadcast %16 : vector<16x1xf32> to vector<16x32xf32>
    %18 = arith.mulf %8, %17 : vector<16x32xf32>
    %19 = vector.broadcast %1 : vector<1x32xf32> to vector<16x32xf32>
    %20 = arith.mulf %18, %19 : vector<16x32xf32>
    %21 = vector.broadcast %2 : vector<1x32xf32> to vector<16x32xf32>
    %22 = arith.addf %20, %21 : vector<16x32xf32>
    %c0_9 = arith.constant 0 : index
    %c0_10 = arith.constant 0 : index
    %23 = vector.load %arg2[%c0_9, %c0_10] : memref<2x8xf32, #tpu.memory_space<vmem>>, vector<2x8xf32>
    %cst_11 = arith.constant 1.000000e+00 : f32
    %24 = vector.broadcast %cst_11 : f32 to vector<2x8xf32>
    %25 = arith.subf %24, %23 : vector<2x8xf32>
    %cst_12 = arith.constant -1.000000e+04 : f32
    %26 = vector.broadcast %cst_12 : f32 to vector<2x8xf32>
    %27 = arith.mulf %25, %26 : vector<2x8xf32>
    %c0_13 = arith.constant 0 : index
    %c0_14 = arith.constant 0 : index
    %c0_15 = arith.constant 0 : index
    %28 = vector.load %arg5[%c0_13, %c0_14, %c0_15] : memref<2x32x96xbf16, #tpu.memory_space<vmem>>, vector<1x32x96xbf16>
    %29 = vector.shape_cast %28 : vector<1x32x96xbf16> to vector<32x96xbf16>
    %30 = arith.truncf %22 : vector<16x32xf32> to vector<16x32xbf16>
    %cst_16 = arith.constant dense<0.000000e+00> : vector<16x96xf32>
    %31 = tpu.matmul %30, %29, %cst_16 {dimension_numbers = #tpu.dot_dimension_numbers<[1], [0], [0], [1], [0, 0, 1, 1], [], []>} : vector<16x32xbf16>, vector<32x96xbf16>, vector<16x96xf32> -> vector<16x96xf32>
    %c0_17 = arith.constant 0 : index
    %c0_18 = arith.constant 0 : index
    %c0_19 = arith.constant 0 : index
    %32 = vector.load %arg6[%c0_17, %c0_18, %c0_19] : memref<2x1x96xf32, #tpu.memory_space<vmem>>, vector<1x1x96xf32>
    %33 = vector.shape_cast %32 : vector<1x1x96xf32> to vector<1x96xf32>
    %34 = vector.broadcast %33 : vector<1x96xf32> to vector<16x96xf32>
    %35 = arith.addf %31, %34 : vector<16x96xf32>
    %36 = vector.extract_strided_slice %35 {offsets = [0, 0], sizes = [16, 32], strides = [1, 1]} : vector<16x96xf32> to vector<16x32xf32>
    %37 = vector.extract_strided_slice %35 {offsets = [0, 32], sizes = [16, 32], strides = [1, 1]} : vector<16x96xf32> to vector<16x32xf32>
    %38 = vector.extract_strided_slice %35 {offsets = [0, 64], sizes = [16, 32], strides = [1, 1]} : vector<16x96xf32> to vector<16x32xf32>
    %39 = vector.extract_strided_slice %27 {offsets = [0, 0], sizes = [1, 8], strides = [1, 1]} : vector<2x8xf32> to vector<1x8xf32>
    %40 = vector.extract_strided_slice %36 {offsets = [0, 0], sizes = [8, 8], strides = [1, 1]} : vector<16x32xf32> to vector<8x8xf32>
    %41 = vector.extract_strided_slice %37 {offsets = [0, 0], sizes = [8, 8], strides = [1, 1]} : vector<16x32xf32> to vector<8x8xf32>
    %42 = vector.extract_strided_slice %38 {offsets = [0, 0], sizes = [8, 8], strides = [1, 1]} : vector<16x32xf32> to vector<8x8xf32>
    %43 = tpu.transpose %41, [1, 0] : vector<8x8xf32> -> vector<8x8xf32>
    %cst_20 = arith.constant dense<0.000000e+00> : vector<8x8xf32>
    %44 = tpu.matmul %40, %43, %cst_20 {dimension_numbers = #tpu.dot_dimension_numbers<[1], [0], [0], [1], [0, 0, 1, 1], [], []>} : vector<8x8xf32>, vector<8x8xf32>, vector<8x8xf32> -> vector<8x8xf32>
    %cst_21 = arith.constant 0.353553385 : f32
    %45 = vector.broadcast %cst_21 : f32 to vector<8x8xf32>
    %46 = arith.mulf %44, %45 : vector<8x8xf32>
    %47 = vector.broadcast %39 : vector<1x8xf32> to vector<8x8xf32>
    %48 = arith.addf %46, %47 : vector<8x8xf32>
    %cst_22 = arith.constant dense<0xFF800000> : vector<8xf32>
    %49 = vector.multi_reduction <maximumf>, %48, %cst_22 [1] : vector<8x8xf32> to vector<8xf32>
    %50 = vector.shape_cast %49 : vector<8xf32> to vector<8x1xf32>
    %51 = vector.broadcast %50 : vector<8x1xf32> to vector<8x8xf32>
    %52 = arith.subf %48, %51 : vector<8x8xf32>
    %53 = math.exp %52 : vector<8x8xf32>
    %cst_23 = arith.constant dense<0.000000e+00> : vector<8xf32>
    %54 = vector.multi_reduction <add>, %53, %cst_23 [1] : vector<8x8xf32> to vector<8xf32>
    %55 = vector.shape_cast %54 : vector<8xf32> to vector<8x1xf32>
    %56 = tpu.reciprocal %55 {approx = true} : vector<8x1xf32> -> vector<8x1xf32>
    %57 = vector.broadcast %56 : vector<8x1xf32> to vector<8x8xf32>
    %58 = arith.mulf %53, %57 : vector<8x8xf32>
    %cst_24 = arith.constant dense<0.000000e+00> : vector<8x8xf32>
    %59 = tpu.matmul %58, %42, %cst_24 {dimension_numbers = #tpu.dot_dimension_numbers<[1], [0], [0], [1], [0, 0, 1, 1], [], []>} : vector<8x8xf32>, vector<8x8xf32>, vector<8x8xf32> -> vector<8x8xf32>
    %60 = vector.extract_strided_slice %36 {offsets = [0, 8], sizes = [8, 8], strides = [1, 1]} : vector<16x32xf32> to vector<8x8xf32>
    %61 = vector.extract_strided_slice %37 {offsets = [0, 8], sizes = [8, 8], strides = [1, 1]} : vector<16x32xf32> to vector<8x8xf32>
    %62 = vector.extract_strided_slice %38 {offsets = [0, 8], sizes = [8, 8], strides = [1, 1]} : vector<16x32xf32> to vector<8x8xf32>
    %63 = tpu.transpose %61, [1, 0] : vector<8x8xf32> -> vector<8x8xf32>
    %cst_25 = arith.constant dense<0.000000e+00> : vector<8x8xf32>
    %64 = tpu.matmul %60, %63, %cst_25 {dimension_numbers = #tpu.dot_dimension_numbers<[1], [0], [0], [1], [0, 0, 1, 1], [], []>} : vector<8x8xf32>, vector<8x8xf32>, vector<8x8xf32> -> vector<8x8xf32>
    %cst_26 = arith.constant 0.353553385 : f32
    %65 = vector.broadcast %cst_26 : f32 to vector<8x8xf32>
    %66 = arith.mulf %64, %65 : vector<8x8xf32>
    %67 = vector.broadcast %39 : vector<1x8xf32> to vector<8x8xf32>
    %68 = arith.addf %66, %67 : vector<8x8xf32>
    %cst_27 = arith.constant dense<0xFF800000> : vector<8xf32>
    %69 = vector.multi_reduction <maximumf>, %68, %cst_27 [1] : vector<8x8xf32> to vector<8xf32>
    %70 = vector.shape_cast %69 : vector<8xf32> to vector<8x1xf32>
    %71 = vector.broadcast %70 : vector<8x1xf32> to vector<8x8xf32>
    %72 = arith.subf %68, %71 : vector<8x8xf32>
    %73 = math.exp %72 : vector<8x8xf32>
    %cst_28 = arith.constant dense<0.000000e+00> : vector<8xf32>
    %74 = vector.multi_reduction <add>, %73, %cst_28 [1] : vector<8x8xf32> to vector<8xf32>
    %75 = vector.shape_cast %74 : vector<8xf32> to vector<8x1xf32>
    %76 = tpu.reciprocal %75 {approx = true} : vector<8x1xf32> -> vector<8x1xf32>
    %77 = vector.broadcast %76 : vector<8x1xf32> to vector<8x8xf32>
    %78 = arith.mulf %73, %77 : vector<8x8xf32>
    %cst_29 = arith.constant dense<0.000000e+00> : vector<8x8xf32>
    %79 = tpu.matmul %78, %62, %cst_29 {dimension_numbers = #tpu.dot_dimension_numbers<[1], [0], [0], [1], [0, 0, 1, 1], [], []>} : vector<8x8xf32>, vector<8x8xf32>, vector<8x8xf32> -> vector<8x8xf32>
    %80 = vector.extract_strided_slice %36 {offsets = [0, 16], sizes = [8, 8], strides = [1, 1]} : vector<16x32xf32> to vector<8x8xf32>
    %81 = vector.extract_strided_slice %37 {offsets = [0, 16], sizes = [8, 8], strides = [1, 1]} : vector<16x32xf32> to vector<8x8xf32>
    %82 = vector.extract_strided_slice %38 {offsets = [0, 16], sizes = [8, 8], strides = [1, 1]} : vector<16x32xf32> to vector<8x8xf32>
    %83 = tpu.transpose %81, [1, 0] : vector<8x8xf32> -> vector<8x8xf32>
    %cst_30 = arith.constant dense<0.000000e+00> : vector<8x8xf32>
    %84 = tpu.matmul %80, %83, %cst_30 {dimension_numbers = #tpu.dot_dimension_numbers<[1], [0], [0], [1], [0, 0, 1, 1], [], []>} : vector<8x8xf32>, vector<8x8xf32>, vector<8x8xf32> -> vector<8x8xf32>
    %cst_31 = arith.constant 0.353553385 : f32
    %85 = vector.broadcast %cst_31 : f32 to vector<8x8xf32>
    %86 = arith.mulf %84, %85 : vector<8x8xf32>
    %87 = vector.broadcast %39 : vector<1x8xf32> to vector<8x8xf32>
    %88 = arith.addf %86, %87 : vector<8x8xf32>
    %cst_32 = arith.constant dense<0xFF800000> : vector<8xf32>
    %89 = vector.multi_reduction <maximumf>, %88, %cst_32 [1] : vector<8x8xf32> to vector<8xf32>
    %90 = vector.shape_cast %89 : vector<8xf32> to vector<8x1xf32>
    %91 = vector.broadcast %90 : vector<8x1xf32> to vector<8x8xf32>
    %92 = arith.subf %88, %91 : vector<8x8xf32>
    %93 = math.exp %92 : vector<8x8xf32>
    %cst_33 = arith.constant dense<0.000000e+00> : vector<8xf32>
    %94 = vector.multi_reduction <add>, %93, %cst_33 [1] : vector<8x8xf32> to vector<8xf32>
    %95 = vector.shape_cast %94 : vector<8xf32> to vector<8x1xf32>
    %96 = tpu.reciprocal %95 {approx = true} : vector<8x1xf32> -> vector<8x1xf32>
    %97 = vector.broadcast %96 : vector<8x1xf32> to vector<8x8xf32>
    %98 = arith.mulf %93, %97 : vector<8x8xf32>
    %cst_34 = arith.constant dense<0.000000e+00> : vector<8x8xf32>
    %99 = tpu.matmul %98, %82, %cst_34 {dimension_numbers = #tpu.dot_dimension_numbers<[1], [0], [0], [1], [0, 0, 1, 1], [], []>} : vector<8x8xf32>, vector<8x8xf32>, vector<8x8xf32> -> vector<8x8xf32>
    %100 = vector.extract_strided_slice %36 {offsets = [0, 24], sizes = [8, 8], strides = [1, 1]} : vector<16x32xf32> to vector<8x8xf32>
    %101 = vector.extract_strided_slice %37 {offsets = [0, 24], sizes = [8, 8], strides = [1, 1]} : vector<16x32xf32> to vector<8x8xf32>
    %102 = vector.extract_strided_slice %38 {offsets = [0, 24], sizes = [8, 8], strides = [1, 1]} : vector<16x32xf32> to vector<8x8xf32>
    %103 = tpu.transpose %101, [1, 0] : vector<8x8xf32> -> vector<8x8xf32>
    %cst_35 = arith.constant dense<0.000000e+00> : vector<8x8xf32>
    %104 = tpu.matmul %100, %103, %cst_35 {dimension_numbers = #tpu.dot_dimension_numbers<[1], [0], [0], [1], [0, 0, 1, 1], [], []>} : vector<8x8xf32>, vector<8x8xf32>, vector<8x8xf32> -> vector<8x8xf32>
    %cst_36 = arith.constant 0.353553385 : f32
    %105 = vector.broadcast %cst_36 : f32 to vector<8x8xf32>
    %106 = arith.mulf %104, %105 : vector<8x8xf32>
    %107 = vector.broadcast %39 : vector<1x8xf32> to vector<8x8xf32>
    %108 = arith.addf %106, %107 : vector<8x8xf32>
    %cst_37 = arith.constant dense<0xFF800000> : vector<8xf32>
    %109 = vector.multi_reduction <maximumf>, %108, %cst_37 [1] : vector<8x8xf32> to vector<8xf32>
    %110 = vector.shape_cast %109 : vector<8xf32> to vector<8x1xf32>
    %111 = vector.broadcast %110 : vector<8x1xf32> to vector<8x8xf32>
    %112 = arith.subf %108, %111 : vector<8x8xf32>
    %113 = math.exp %112 : vector<8x8xf32>
    %cst_38 = arith.constant dense<0.000000e+00> : vector<8xf32>
    %114 = vector.multi_reduction <add>, %113, %cst_38 [1] : vector<8x8xf32> to vector<8xf32>
    %115 = vector.shape_cast %114 : vector<8xf32> to vector<8x1xf32>
    %116 = tpu.reciprocal %115 {approx = true} : vector<8x1xf32> -> vector<8x1xf32>
    %117 = vector.broadcast %116 : vector<8x1xf32> to vector<8x8xf32>
    %118 = arith.mulf %113, %117 : vector<8x8xf32>
    %cst_39 = arith.constant dense<0.000000e+00> : vector<8x8xf32>
    %119 = tpu.matmul %118, %102, %cst_39 {dimension_numbers = #tpu.dot_dimension_numbers<[1], [0], [0], [1], [0, 0, 1, 1], [], []>} : vector<8x8xf32>, vector<8x8xf32>, vector<8x8xf32> -> vector<8x8xf32>
    %120 = tpu.concatenate %59, %79, %99, %119 in 1 : vector<8x8xf32>, vector<8x8xf32>, vector<8x8xf32>, vector<8x8xf32> -> vector<8x32xf32>
    %121 = vector.extract_strided_slice %27 {offsets = [1, 0], sizes = [1, 8], strides = [1, 1]} : vector<2x8xf32> to vector<1x8xf32>
    %122 = vector.extract_strided_slice %36 {offsets = [8, 0], sizes = [8, 8], strides = [1, 1]} : vector<16x32xf32> to vector<8x8xf32>
    %123 = vector.extract_strided_slice %37 {offsets = [8, 0], sizes = [8, 8], strides = [1, 1]} : vector<16x32xf32> to vector<8x8xf32>
    %124 = vector.extract_strided_slice %38 {offsets = [8, 0], sizes = [8, 8], strides = [1, 1]} : vector<16x32xf32> to vector<8x8xf32>
    %125 = tpu.transpose %123, [1, 0] : vector<8x8xf32> -> vector<8x8xf32>
    %cst_40 = arith.constant dense<0.000000e+00> : vector<8x8xf32>
    %126 = tpu.matmul %122, %125, %cst_40 {dimension_numbers = #tpu.dot_dimension_numbers<[1], [0], [0], [1], [0, 0, 1, 1], [], []>} : vector<8x8xf32>, vector<8x8xf32>, vector<8x8xf32> -> vector<8x8xf32>
    %cst_41 = arith.constant 0.353553385 : f32
    %127 = vector.broadcast %cst_41 : f32 to vector<8x8xf32>
    %128 = arith.mulf %126, %127 : vector<8x8xf32>
    %129 = vector.broadcast %121 : vector<1x8xf32> to vector<8x8xf32>
    %130 = arith.addf %128, %129 : vector<8x8xf32>
    %cst_42 = arith.constant dense<0xFF800000> : vector<8xf32>
    %131 = vector.multi_reduction <maximumf>, %130, %cst_42 [1] : vector<8x8xf32> to vector<8xf32>
    %132 = vector.shape_cast %131 : vector<8xf32> to vector<8x1xf32>
    %133 = vector.broadcast %132 : vector<8x1xf32> to vector<8x8xf32>
    %134 = arith.subf %130, %133 : vector<8x8xf32>
    %135 = math.exp %134 : vector<8x8xf32>
    %cst_43 = arith.constant dense<0.000000e+00> : vector<8xf32>
    %136 = vector.multi_reduction <add>, %135, %cst_43 [1] : vector<8x8xf32> to vector<8xf32>
    %137 = vector.shape_cast %136 : vector<8xf32> to vector<8x1xf32>
    %138 = tpu.reciprocal %137 {approx = true} : vector<8x1xf32> -> vector<8x1xf32>
    %139 = vector.broadcast %138 : vector<8x1xf32> to vector<8x8xf32>
    %140 = arith.mulf %135, %139 : vector<8x8xf32>
    %cst_44 = arith.constant dense<0.000000e+00> : vector<8x8xf32>
    %141 = tpu.matmul %140, %124, %cst_44 {dimension_numbers = #tpu.dot_dimension_numbers<[1], [0], [0], [1], [0, 0, 1, 1], [], []>} : vector<8x8xf32>, vector<8x8xf32>, vector<8x8xf32> -> vector<8x8xf32>
    %142 = vector.extract_strided_slice %36 {offsets = [8, 8], sizes = [8, 8], strides = [1, 1]} : vector<16x32xf32> to vector<8x8xf32>
    %143 = vector.extract_strided_slice %37 {offsets = [8, 8], sizes = [8, 8], strides = [1, 1]} : vector<16x32xf32> to vector<8x8xf32>
    %144 = vector.extract_strided_slice %38 {offsets = [8, 8], sizes = [8, 8], strides = [1, 1]} : vector<16x32xf32> to vector<8x8xf32>
    %145 = tpu.transpose %143, [1, 0] : vector<8x8xf32> -> vector<8x8xf32>
    %cst_45 = arith.constant dense<0.000000e+00> : vector<8x8xf32>
    %146 = tpu.matmul %142, %145, %cst_45 {dimension_numbers = #tpu.dot_dimension_numbers<[1], [0], [0], [1], [0, 0, 1, 1], [], []>} : vector<8x8xf32>, vector<8x8xf32>, vector<8x8xf32> -> vector<8x8xf32>
    %cst_46 = arith.constant 0.353553385 : f32
    %147 = vector.broadcast %cst_46 : f32 to vector<8x8xf32>
    %148 = arith.mulf %146, %147 : vector<8x8xf32>
    %149 = vector.broadcast %121 : vector<1x8xf32> to vector<8x8xf32>
    %150 = arith.addf %148, %149 : vector<8x8xf32>
    %cst_47 = arith.constant dense<0xFF800000> : vector<8xf32>
    %151 = vector.multi_reduction <maximumf>, %150, %cst_47 [1] : vector<8x8xf32> to vector<8xf32>
    %152 = vector.shape_cast %151 : vector<8xf32> to vector<8x1xf32>
    %153 = vector.broadcast %152 : vector<8x1xf32> to vector<8x8xf32>
    %154 = arith.subf %150, %153 : vector<8x8xf32>
    %155 = math.exp %154 : vector<8x8xf32>
    %cst_48 = arith.constant dense<0.000000e+00> : vector<8xf32>
    %156 = vector.multi_reduction <add>, %155, %cst_48 [1] : vector<8x8xf32> to vector<8xf32>
    %157 = vector.shape_cast %156 : vector<8xf32> to vector<8x1xf32>
    %158 = tpu.reciprocal %157 {approx = true} : vector<8x1xf32> -> vector<8x1xf32>
    %159 = vector.broadcast %158 : vector<8x1xf32> to vector<8x8xf32>
    %160 = arith.mulf %155, %159 : vector<8x8xf32>
    %cst_49 = arith.constant dense<0.000000e+00> : vector<8x8xf32>
    %161 = tpu.matmul %160, %144, %cst_49 {dimension_numbers = #tpu.dot_dimension_numbers<[1], [0], [0], [1], [0, 0, 1, 1], [], []>} : vector<8x8xf32>, vector<8x8xf32>, vector<8x8xf32> -> vector<8x8xf32>
    %162 = vector.extract_strided_slice %36 {offsets = [8, 16], sizes = [8, 8], strides = [1, 1]} : vector<16x32xf32> to vector<8x8xf32>
    %163 = vector.extract_strided_slice %37 {offsets = [8, 16], sizes = [8, 8], strides = [1, 1]} : vector<16x32xf32> to vector<8x8xf32>
    %164 = vector.extract_strided_slice %38 {offsets = [8, 16], sizes = [8, 8], strides = [1, 1]} : vector<16x32xf32> to vector<8x8xf32>
    %165 = tpu.transpose %163, [1, 0] : vector<8x8xf32> -> vector<8x8xf32>
    %cst_50 = arith.constant dense<0.000000e+00> : vector<8x8xf32>
    %166 = tpu.matmul %162, %165, %cst_50 {dimension_numbers = #tpu.dot_dimension_numbers<[1], [0], [0], [1], [0, 0, 1, 1], [], []>} : vector<8x8xf32>, vector<8x8xf32>, vector<8x8xf32> -> vector<8x8xf32>
    %cst_51 = arith.constant 0.353553385 : f32
    %167 = vector.broadcast %cst_51 : f32 to vector<8x8xf32>
    %168 = arith.mulf %166, %167 : vector<8x8xf32>
    %169 = vector.broadcast %121 : vector<1x8xf32> to vector<8x8xf32>
    %170 = arith.addf %168, %169 : vector<8x8xf32>
    %cst_52 = arith.constant dense<0xFF800000> : vector<8xf32>
    %171 = vector.multi_reduction <maximumf>, %170, %cst_52 [1] : vector<8x8xf32> to vector<8xf32>
    %172 = vector.shape_cast %171 : vector<8xf32> to vector<8x1xf32>
    %173 = vector.broadcast %172 : vector<8x1xf32> to vector<8x8xf32>
    %174 = arith.subf %170, %173 : vector<8x8xf32>
    %175 = math.exp %174 : vector<8x8xf32>
    %cst_53 = arith.constant dense<0.000000e+00> : vector<8xf32>
    %176 = vector.multi_reduction <add>, %175, %cst_53 [1] : vector<8x8xf32> to vector<8xf32>
    %177 = vector.shape_cast %176 : vector<8xf32> to vector<8x1xf32>
    %178 = tpu.reciprocal %177 {approx = true} : vector<8x1xf32> -> vector<8x1xf32>
    %179 = vector.broadcast %178 : vector<8x1xf32> to vector<8x8xf32>
    %180 = arith.mulf %175, %179 : vector<8x8xf32>
    %cst_54 = arith.constant dense<0.000000e+00> : vector<8x8xf32>
    %181 = tpu.matmul %180, %164, %cst_54 {dimension_numbers = #tpu.dot_dimension_numbers<[1], [0], [0], [1], [0, 0, 1, 1], [], []>} : vector<8x8xf32>, vector<8x8xf32>, vector<8x8xf32> -> vector<8x8xf32>
    %182 = vector.extract_strided_slice %36 {offsets = [8, 24], sizes = [8, 8], strides = [1, 1]} : vector<16x32xf32> to vector<8x8xf32>
    %183 = vector.extract_strided_slice %37 {offsets = [8, 24], sizes = [8, 8], strides = [1, 1]} : vector<16x32xf32> to vector<8x8xf32>
    %184 = vector.extract_strided_slice %38 {offsets = [8, 24], sizes = [8, 8], strides = [1, 1]} : vector<16x32xf32> to vector<8x8xf32>
    %185 = tpu.transpose %183, [1, 0] : vector<8x8xf32> -> vector<8x8xf32>
    %cst_55 = arith.constant dense<0.000000e+00> : vector<8x8xf32>
    %186 = tpu.matmul %182, %185, %cst_55 {dimension_numbers = #tpu.dot_dimension_numbers<[1], [0], [0], [1], [0, 0, 1, 1], [], []>} : vector<8x8xf32>, vector<8x8xf32>, vector<8x8xf32> -> vector<8x8xf32>
    %cst_56 = arith.constant 0.353553385 : f32
    %187 = vector.broadcast %cst_56 : f32 to vector<8x8xf32>
    %188 = arith.mulf %186, %187 : vector<8x8xf32>
    %189 = vector.broadcast %121 : vector<1x8xf32> to vector<8x8xf32>
    %190 = arith.addf %188, %189 : vector<8x8xf32>
    %cst_57 = arith.constant dense<0xFF800000> : vector<8xf32>
    %191 = vector.multi_reduction <maximumf>, %190, %cst_57 [1] : vector<8x8xf32> to vector<8xf32>
    %192 = vector.shape_cast %191 : vector<8xf32> to vector<8x1xf32>
    %193 = vector.broadcast %192 : vector<8x1xf32> to vector<8x8xf32>
    %194 = arith.subf %190, %193 : vector<8x8xf32>
    %195 = math.exp %194 : vector<8x8xf32>
    %cst_58 = arith.constant dense<0.000000e+00> : vector<8xf32>
    %196 = vector.multi_reduction <add>, %195, %cst_58 [1] : vector<8x8xf32> to vector<8xf32>
    %197 = vector.shape_cast %196 : vector<8xf32> to vector<8x1xf32>
    %198 = tpu.reciprocal %197 {approx = true} : vector<8x1xf32> -> vector<8x1xf32>
    %199 = vector.broadcast %198 : vector<8x1xf32> to vector<8x8xf32>
    %200 = arith.mulf %195, %199 : vector<8x8xf32>
    %cst_59 = arith.constant dense<0.000000e+00> : vector<8x8xf32>
    %201 = tpu.matmul %200, %184, %cst_59 {dimension_numbers = #tpu.dot_dimension_numbers<[1], [0], [0], [1], [0, 0, 1, 1], [], []>} : vector<8x8xf32>, vector<8x8xf32>, vector<8x8xf32> -> vector<8x8xf32>
    %202 = tpu.concatenate %141, %161, %181, %201 in 1 : vector<8x8xf32>, vector<8x8xf32>, vector<8x8xf32>, vector<8x8xf32> -> vector<8x32xf32>
    %203 = tpu.concatenate %120, %202 in 0 : vector<8x32xf32>, vector<8x32xf32> -> vector<16x32xf32>
    %c0_60 = arith.constant 0 : index
    %c0_61 = arith.constant 0 : index
    %c0_62 = arith.constant 0 : index
    %204 = vector.load %arg7[%c0_60, %c0_61, %c0_62] : memref<2x32x32xbf16, #tpu.memory_space<vmem>>, vector<1x32x32xbf16>
    %205 = vector.shape_cast %204 : vector<1x32x32xbf16> to vector<32x32xbf16>
    %206 = arith.truncf %203 : vector<16x32xf32> to vector<16x32xbf16>
    %cst_63 = arith.constant dense<0.000000e+00> : vector<16x32xf32>
    %207 = tpu.matmul %206, %205, %cst_63 {dimension_numbers = #tpu.dot_dimension_numbers<[1], [0], [0], [1], [0, 0, 1, 1], [], []>} : vector<16x32xbf16>, vector<32x32xbf16>, vector<16x32xf32> -> vector<16x32xf32>
    %c0_64 = arith.constant 0 : index
    %c0_65 = arith.constant 0 : index
    %c0_66 = arith.constant 0 : index
    %208 = vector.load %arg8[%c0_64, %c0_65, %c0_66] : memref<2x1x32xf32, #tpu.memory_space<vmem>>, vector<1x1x32xf32>
    %209 = vector.shape_cast %208 : vector<1x1x32xf32> to vector<1x32xf32>
    %210 = vector.broadcast %209 : vector<1x32xf32> to vector<16x32xf32>
    %211 = arith.addf %207, %210 : vector<16x32xf32>
    %212 = arith.addf %211, %22 : vector<16x32xf32>
    %c0_67 = arith.constant 0 : index
    %c0_68 = arith.constant 0 : index
    %c0_69 = arith.constant 0 : index
    %213 = vector.load %arg9[%c0_67, %c0_68, %c0_69] : memref<2x1x32xf32, #tpu.memory_space<vmem>>, vector<1x1x32xf32>
    %214 = vector.shape_cast %213 : vector<1x1x32xf32> to vector<1x32xf32>
    %c0_70 = arith.constant 0 : index
    %c0_71 = arith.constant 0 : index
    %c0_72 = arith.constant 0 : index
    %215 = vector.load %arg10[%c0_70, %c0_71, %c0_72] : memref<2x1x32xf32, #tpu.memory_space<vmem>>, vector<1x1x32xf32>
    %216 = vector.shape_cast %215 : vector<1x1x32xf32> to vector<1x32xf32>
    %cst_73 = arith.constant dense<0.000000e+00> : vector<16xf32>
    %217 = vector.multi_reduction <add>, %212, %cst_73 [1] : vector<16x32xf32> to vector<16xf32>
    %218 = vector.shape_cast %217 : vector<16xf32> to vector<16x1xf32>
    %cst_74 = arith.constant 3.200000e+01 : f32
    %219 = vector.broadcast %cst_74 : f32 to vector<16x1xf32>
    %220 = arith.divf %218, %219 : vector<16x1xf32>
    %221 = vector.broadcast %220 : vector<16x1xf32> to vector<16x32xf32>
    %222 = arith.subf %212, %221 : vector<16x32xf32>
    %223 = arith.mulf %222, %222 : vector<16x32xf32>
    %cst_75 = arith.constant dense<0.000000e+00> : vector<16xf32>
    %224 = vector.multi_reduction <add>, %223, %cst_75 [1] : vector<16x32xf32> to vector<16xf32>
    %225 = vector.shape_cast %224 : vector<16xf32> to vector<16x1xf32>
    %cst_76 = arith.constant 3.200000e+01 : f32
    %226 = vector.broadcast %cst_76 : f32 to vector<16x1xf32>
    %227 = arith.divf %225, %226 : vector<16x1xf32>
    %cst_77 = arith.constant 9.99999996E-13 : f32
    %228 = vector.broadcast %cst_77 : f32 to vector<16x1xf32>
    %229 = arith.addf %227, %228 : vector<16x1xf32>
    %230 = math.rsqrt %229 : vector<16x1xf32>
    %231 = vector.broadcast %230 : vector<16x1xf32> to vector<16x32xf32>
    %232 = arith.mulf %222, %231 : vector<16x32xf32>
    %233 = vector.broadcast %214 : vector<1x32xf32> to vector<16x32xf32>
    %234 = arith.mulf %232, %233 : vector<16x32xf32>
    %235 = vector.broadcast %216 : vector<1x32xf32> to vector<16x32xf32>
    %236 = arith.addf %234, %235 : vector<16x32xf32>
    %c0_78 = arith.constant 0 : index
    %c0_79 = arith.constant 0 : index
    %c0_80 = arith.constant 0 : index
    %237 = vector.load %arg11[%c0_78, %c0_79, %c0_80] : memref<2x32x64xbf16, #tpu.memory_space<vmem>>, vector<1x32x64xbf16>
    %238 = vector.shape_cast %237 : vector<1x32x64xbf16> to vector<32x64xbf16>
    %239 = arith.truncf %236 : vector<16x32xf32> to vector<16x32xbf16>
    %cst_81 = arith.constant dense<0.000000e+00> : vector<16x64xf32>
    %240 = tpu.matmul %239, %238, %cst_81 {dimension_numbers = #tpu.dot_dimension_numbers<[1], [0], [0], [1], [0, 0, 1, 1], [], []>} : vector<16x32xbf16>, vector<32x64xbf16>, vector<16x64xf32> -> vector<16x64xf32>
    %c0_82 = arith.constant 0 : index
    %c0_83 = arith.constant 0 : index
    %c0_84 = arith.constant 0 : index
    %241 = vector.load %arg12[%c0_82, %c0_83, %c0_84] : memref<2x1x64xf32, #tpu.memory_space<vmem>>, vector<1x1x64xf32>
    %242 = vector.shape_cast %241 : vector<1x1x64xf32> to vector<1x64xf32>
    %243 = vector.broadcast %242 : vector<1x64xf32> to vector<16x64xf32>
    %244 = arith.addf %240, %243 : vector<16x64xf32>
    %cst_85 = arith.constant 5.000000e-01 : f32
    %245 = vector.broadcast %cst_85 : f32 to vector<16x64xf32>
    %246 = arith.mulf %244, %245 : vector<16x64xf32>
    %cst_86 = arith.constant 0.707106769 : f32
    %247 = vector.broadcast %cst_86 : f32 to vector<16x64xf32>
    %248 = arith.mulf %244, %247 : vector<16x64xf32>
    %249 = math.erf %248 : vector<16x64xf32>
    %cst_87 = arith.constant 1.000000e+00 : f32
    %250 = vector.broadcast %cst_87 : f32 to vector<16x64xf32>
    %251 = arith.addf %250, %249 : vector<16x64xf32>
    %252 = arith.mulf %246, %251 : vector<16x64xf32>
    %c0_88 = arith.constant 0 : index
    %c0_89 = arith.constant 0 : index
    %c0_90 = arith.constant 0 : index
    %253 = vector.load %arg13[%c0_88, %c0_89, %c0_90] : memref<2x64x32xbf16, #tpu.memory_space<vmem>>, vector<1x64x32xbf16>
    %254 = vector.shape_cast %253 : vector<1x64x32xbf16> to vector<64x32xbf16>
    %255 = arith.truncf %252 : vector<16x64xf32> to vector<16x64xbf16>
    %cst_91 = arith.constant dense<0.000000e+00> : vector<16x32xf32>
    %256 = tpu.matmul %255, %254, %cst_91 {dimension_numbers = #tpu.dot_dimension_numbers<[1], [0], [0], [1], [0, 0, 1, 1], [], []>} : vector<16x64xbf16>, vector<64x32xbf16>, vector<16x32xf32> -> vector<16x32xf32>
    %c0_92 = arith.constant 0 : index
    %c0_93 = arith.constant 0 : index
    %c0_94 = arith.constant 0 : index
    %257 = vector.load %arg14[%c0_92, %c0_93, %c0_94] : memref<2x1x32xf32, #tpu.memory_space<vmem>>, vector<1x1x32xf32>
    %258 = vector.shape_cast %257 : vector<1x1x32xf32> to vector<1x32xf32>
    %259 = vector.broadcast %258 : vector<1x32xf32> to vector<16x32xf32>
    %260 = arith.addf %256, %259 : vector<16x32xf32>
    %261 = arith.addf %260, %236 : vector<16x32xf32>
    %c0_95 = arith.constant 0 : index
    %c0_96 = arith.constant 0 : index
    %c0_97 = arith.constant 0 : index
    %262 = vector.load %arg15[%c0_95, %c0_96, %c0_97] : memref<2x1x32xf32, #tpu.memory_space<vmem>>, vector<1x1x32xf32>
    %263 = vector.shape_cast %262 : vector<1x1x32xf32> to vector<1x32xf32>
    %c0_98 = arith.constant 0 : index
    %c0_99 = arith.constant 0 : index
    %c0_100 = arith.constant 0 : index
    %264 = vector.load %arg16[%c0_98, %c0_99, %c0_100] : memref<2x1x32xf32, #tpu.memory_space<vmem>>, vector<1x1x32xf32>
    %265 = vector.shape_cast %264 : vector<1x1x32xf32> to vector<1x32xf32>
    %cst_101 = arith.constant dense<0.000000e+00> : vector<16xf32>
    %266 = vector.multi_reduction <add>, %261, %cst_101 [1] : vector<16x32xf32> to vector<16xf32>
    %267 = vector.shape_cast %266 : vector<16xf32> to vector<16x1xf32>
    %cst_102 = arith.constant 3.200000e+01 : f32
    %268 = vector.broadcast %cst_102 : f32 to vector<16x1xf32>
    %269 = arith.divf %267, %268 : vector<16x1xf32>
    %270 = vector.broadcast %269 : vector<16x1xf32> to vector<16x32xf32>
    %271 = arith.subf %261, %270 : vector<16x32xf32>
    %272 = arith.mulf %271, %271 : vector<16x32xf32>
    %cst_103 = arith.constant dense<0.000000e+00> : vector<16xf32>
    %273 = vector.multi_reduction <add>, %272, %cst_103 [1] : vector<16x32xf32> to vector<16xf32>
    %274 = vector.shape_cast %273 : vector<16xf32> to vector<16x1xf32>
    %cst_104 = arith.constant 3.200000e+01 : f32
    %275 = vector.broadcast %cst_104 : f32 to vector<16x1xf32>
    %276 = arith.divf %274, %275 : vector<16x1xf32>
    %cst_105 = arith.constant 9.99999996E-13 : f32
    %277 = vector.broadcast %cst_105 : f32 to vector<16x1xf32>
    %278 = arith.addf %276, %277 : vector<16x1xf32>
    %279 = math.rsqrt %278 : vector<16x1xf32>
    %280 = vector.broadcast %279 : vector<16x1xf32> to vector<16x32xf32>
    %281 = arith.mulf %271, %280 : vector<16x32xf32>
    %282 = vector.broadcast %263 : vector<1x32xf32> to vector<16x32xf32>
    %283 = arith.mulf %281, %282 : vector<16x32xf32>
    %284 = vector.broadcast %265 : vector<1x32xf32> to vector<16x32xf32>
    %285 = arith.addf %283, %284 : vector<16x32xf32>
    %c1 = arith.constant 1 : index
    %c0_106 = arith.constant 0 : index
    %c0_107 = arith.constant 0 : index
    %286 = vector.load %arg5[%c1, %c0_106, %c0_107] : memref<2x32x96xbf16, #tpu.memory_space<vmem>>, vector<1x32x96xbf16>
    %287 = vector.shape_cast %286 : vector<1x32x96xbf16> to vector<32x96xbf16>
    %288 = arith.truncf %285 : vector<16x32xf32> to vector<16x32xbf16>
    %cst_108 = arith.constant dense<0.000000e+00> : vector<16x96xf32>
    %289 = tpu.matmul %288, %287, %cst_108 {dimension_numbers = #tpu.dot_dimension_numbers<[1], [0], [0], [1], [0, 0, 1, 1], [], []>} : vector<16x32xbf16>, vector<32x96xbf16>, vector<16x96xf32> -> vector<16x96xf32>
    %c1_109 = arith.constant 1 : index
    %c0_110 = arith.constant 0 : index
    %c0_111 = arith.constant 0 : index
    %290 = vector.load %arg6[%c1_109, %c0_110, %c0_111] : memref<2x1x96xf32, #tpu.memory_space<vmem>>, vector<1x1x96xf32>
    %291 = vector.shape_cast %290 : vector<1x1x96xf32> to vector<1x96xf32>
    %292 = vector.broadcast %291 : vector<1x96xf32> to vector<16x96xf32>
    %293 = arith.addf %289, %292 : vector<16x96xf32>
    %294 = vector.extract_strided_slice %293 {offsets = [0, 0], sizes = [16, 32], strides = [1, 1]} : vector<16x96xf32> to vector<16x32xf32>
    %295 = vector.extract_strided_slice %293 {offsets = [0, 32], sizes = [16, 32], strides = [1, 1]} : vector<16x96xf32> to vector<16x32xf32>
    %296 = vector.extract_strided_slice %293 {offsets = [0, 64], sizes = [16, 32], strides = [1, 1]} : vector<16x96xf32> to vector<16x32xf32>
    %297 = vector.extract_strided_slice %27 {offsets = [0, 0], sizes = [1, 8], strides = [1, 1]} : vector<2x8xf32> to vector<1x8xf32>
    %298 = vector.extract_strided_slice %294 {offsets = [0, 0], sizes = [8, 8], strides = [1, 1]} : vector<16x32xf32> to vector<8x8xf32>
    %299 = vector.extract_strided_slice %295 {offsets = [0, 0], sizes = [8, 8], strides = [1, 1]} : vector<16x32xf32> to vector<8x8xf32>
    %300 = vector.extract_strided_slice %296 {offsets = [0, 0], sizes = [8, 8], strides = [1, 1]} : vector<16x32xf32> to vector<8x8xf32>
    %301 = tpu.transpose %299, [1, 0] : vector<8x8xf32> -> vector<8x8xf32>
    %cst_112 = arith.constant dense<0.000000e+00> : vector<8x8xf32>
    %302 = tpu.matmul %298, %301, %cst_112 {dimension_numbers = #tpu.dot_dimension_numbers<[1], [0], [0], [1], [0, 0, 1, 1], [], []>} : vector<8x8xf32>, vector<8x8xf32>, vector<8x8xf32> -> vector<8x8xf32>
    %cst_113 = arith.constant 0.353553385 : f32
    %303 = vector.broadcast %cst_113 : f32 to vector<8x8xf32>
    %304 = arith.mulf %302, %303 : vector<8x8xf32>
    %305 = vector.broadcast %297 : vector<1x8xf32> to vector<8x8xf32>
    %306 = arith.addf %304, %305 : vector<8x8xf32>
    %cst_114 = arith.constant dense<0xFF800000> : vector<8xf32>
    %307 = vector.multi_reduction <maximumf>, %306, %cst_114 [1] : vector<8x8xf32> to vector<8xf32>
    %308 = vector.shape_cast %307 : vector<8xf32> to vector<8x1xf32>
    %309 = vector.broadcast %308 : vector<8x1xf32> to vector<8x8xf32>
    %310 = arith.subf %306, %309 : vector<8x8xf32>
    %311 = math.exp %310 : vector<8x8xf32>
    %cst_115 = arith.constant dense<0.000000e+00> : vector<8xf32>
    %312 = vector.multi_reduction <add>, %311, %cst_115 [1] : vector<8x8xf32> to vector<8xf32>
    %313 = vector.shape_cast %312 : vector<8xf32> to vector<8x1xf32>
    %314 = tpu.reciprocal %313 {approx = true} : vector<8x1xf32> -> vector<8x1xf32>
    %315 = vector.broadcast %314 : vector<8x1xf32> to vector<8x8xf32>
    %316 = arith.mulf %311, %315 : vector<8x8xf32>
    %cst_116 = arith.constant dense<0.000000e+00> : vector<8x8xf32>
    %317 = tpu.matmul %316, %300, %cst_116 {dimension_numbers = #tpu.dot_dimension_numbers<[1], [0], [0], [1], [0, 0, 1, 1], [], []>} : vector<8x8xf32>, vector<8x8xf32>, vector<8x8xf32> -> vector<8x8xf32>
    %318 = vector.extract_strided_slice %294 {offsets = [0, 8], sizes = [8, 8], strides = [1, 1]} : vector<16x32xf32> to vector<8x8xf32>
    %319 = vector.extract_strided_slice %295 {offsets = [0, 8], sizes = [8, 8], strides = [1, 1]} : vector<16x32xf32> to vector<8x8xf32>
    %320 = vector.extract_strided_slice %296 {offsets = [0, 8], sizes = [8, 8], strides = [1, 1]} : vector<16x32xf32> to vector<8x8xf32>
    %321 = tpu.transpose %319, [1, 0] : vector<8x8xf32> -> vector<8x8xf32>
    %cst_117 = arith.constant dense<0.000000e+00> : vector<8x8xf32>
    %322 = tpu.matmul %318, %321, %cst_117 {dimension_numbers = #tpu.dot_dimension_numbers<[1], [0], [0], [1], [0, 0, 1, 1], [], []>} : vector<8x8xf32>, vector<8x8xf32>, vector<8x8xf32> -> vector<8x8xf32>
    %cst_118 = arith.constant 0.353553385 : f32
    %323 = vector.broadcast %cst_118 : f32 to vector<8x8xf32>
    %324 = arith.mulf %322, %323 : vector<8x8xf32>
    %325 = vector.broadcast %297 : vector<1x8xf32> to vector<8x8xf32>
    %326 = arith.addf %324, %325 : vector<8x8xf32>
    %cst_119 = arith.constant dense<0xFF800000> : vector<8xf32>
    %327 = vector.multi_reduction <maximumf>, %326, %cst_119 [1] : vector<8x8xf32> to vector<8xf32>
    %328 = vector.shape_cast %327 : vector<8xf32> to vector<8x1xf32>
    %329 = vector.broadcast %328 : vector<8x1xf32> to vector<8x8xf32>
    %330 = arith.subf %326, %329 : vector<8x8xf32>
    %331 = math.exp %330 : vector<8x8xf32>
    %cst_120 = arith.constant dense<0.000000e+00> : vector<8xf32>
    %332 = vector.multi_reduction <add>, %331, %cst_120 [1] : vector<8x8xf32> to vector<8xf32>
    %333 = vector.shape_cast %332 : vector<8xf32> to vector<8x1xf32>
    %334 = tpu.reciprocal %333 {approx = true} : vector<8x1xf32> -> vector<8x1xf32>
    %335 = vector.broadcast %334 : vector<8x1xf32> to vector<8x8xf32>
    %336 = arith.mulf %331, %335 : vector<8x8xf32>
    %cst_121 = arith.constant dense<0.000000e+00> : vector<8x8xf32>
    %337 = tpu.matmul %336, %320, %cst_121 {dimension_numbers = #tpu.dot_dimension_numbers<[1], [0], [0], [1], [0, 0, 1, 1], [], []>} : vector<8x8xf32>, vector<8x8xf32>, vector<8x8xf32> -> vector<8x8xf32>
    %338 = vector.extract_strided_slice %294 {offsets = [0, 16], sizes = [8, 8], strides = [1, 1]} : vector<16x32xf32> to vector<8x8xf32>
    %339 = vector.extract_strided_slice %295 {offsets = [0, 16], sizes = [8, 8], strides = [1, 1]} : vector<16x32xf32> to vector<8x8xf32>
    %340 = vector.extract_strided_slice %296 {offsets = [0, 16], sizes = [8, 8], strides = [1, 1]} : vector<16x32xf32> to vector<8x8xf32>
    %341 = tpu.transpose %339, [1, 0] : vector<8x8xf32> -> vector<8x8xf32>
    %cst_122 = arith.constant dense<0.000000e+00> : vector<8x8xf32>
    %342 = tpu.matmul %338, %341, %cst_122 {dimension_numbers = #tpu.dot_dimension_numbers<[1], [0], [0], [1], [0, 0, 1, 1], [], []>} : vector<8x8xf32>, vector<8x8xf32>, vector<8x8xf32> -> vector<8x8xf32>
    %cst_123 = arith.constant 0.353553385 : f32
    %343 = vector.broadcast %cst_123 : f32 to vector<8x8xf32>
    %344 = arith.mulf %342, %343 : vector<8x8xf32>
    %345 = vector.broadcast %297 : vector<1x8xf32> to vector<8x8xf32>
    %346 = arith.addf %344, %345 : vector<8x8xf32>
    %cst_124 = arith.constant dense<0xFF800000> : vector<8xf32>
    %347 = vector.multi_reduction <maximumf>, %346, %cst_124 [1] : vector<8x8xf32> to vector<8xf32>
    %348 = vector.shape_cast %347 : vector<8xf32> to vector<8x1xf32>
    %349 = vector.broadcast %348 : vector<8x1xf32> to vector<8x8xf32>
    %350 = arith.subf %346, %349 : vector<8x8xf32>
    %351 = math.exp %350 : vector<8x8xf32>
    %cst_125 = arith.constant dense<0.000000e+00> : vector<8xf32>
    %352 = vector.multi_reduction <add>, %351, %cst_125 [1] : vector<8x8xf32> to vector<8xf32>
    %353 = vector.shape_cast %352 : vector<8xf32> to vector<8x1xf32>
    %354 = tpu.reciprocal %353 {approx = true} : vector<8x1xf32> -> vector<8x1xf32>
    %355 = vector.broadcast %354 : vector<8x1xf32> to vector<8x8xf32>
    %356 = arith.mulf %351, %355 : vector<8x8xf32>
    %cst_126 = arith.constant dense<0.000000e+00> : vector<8x8xf32>
    %357 = tpu.matmul %356, %340, %cst_126 {dimension_numbers = #tpu.dot_dimension_numbers<[1], [0], [0], [1], [0, 0, 1, 1], [], []>} : vector<8x8xf32>, vector<8x8xf32>, vector<8x8xf32> -> vector<8x8xf32>
    %358 = vector.extract_strided_slice %294 {offsets = [0, 24], sizes = [8, 8], strides = [1, 1]} : vector<16x32xf32> to vector<8x8xf32>
    %359 = vector.extract_strided_slice %295 {offsets = [0, 24], sizes = [8, 8], strides = [1, 1]} : vector<16x32xf32> to vector<8x8xf32>
    %360 = vector.extract_strided_slice %296 {offsets = [0, 24], sizes = [8, 8], strides = [1, 1]} : vector<16x32xf32> to vector<8x8xf32>
    %361 = tpu.transpose %359, [1, 0] : vector<8x8xf32> -> vector<8x8xf32>
    %cst_127 = arith.constant dense<0.000000e+00> : vector<8x8xf32>
    %362 = tpu.matmul %358, %361, %cst_127 {dimension_numbers = #tpu.dot_dimension_numbers<[1], [0], [0], [1], [0, 0, 1, 1], [], []>} : vector<8x8xf32>, vector<8x8xf32>, vector<8x8xf32> -> vector<8x8xf32>
    %cst_128 = arith.constant 0.353553385 : f32
    %363 = vector.broadcast %cst_128 : f32 to vector<8x8xf32>
    %364 = arith.mulf %362, %363 : vector<8x8xf32>
    %365 = vector.broadcast %297 : vector<1x8xf32> to vector<8x8xf32>
    %366 = arith.addf %364, %365 : vector<8x8xf32>
    %cst_129 = arith.constant dense<0xFF800000> : vector<8xf32>
    %367 = vector.multi_reduction <maximumf>, %366, %cst_129 [1] : vector<8x8xf32> to vector<8xf32>
    %368 = vector.shape_cast %367 : vector<8xf32> to vector<8x1xf32>
    %369 = vector.broadcast %368 : vector<8x1xf32> to vector<8x8xf32>
    %370 = arith.subf %366, %369 : vector<8x8xf32>
    %371 = math.exp %370 : vector<8x8xf32>
    %cst_130 = arith.constant dense<0.000000e+00> : vector<8xf32>
    %372 = vector.multi_reduction <add>, %371, %cst_130 [1] : vector<8x8xf32> to vector<8xf32>
    %373 = vector.shape_cast %372 : vector<8xf32> to vector<8x1xf32>
    %374 = tpu.reciprocal %373 {approx = true} : vector<8x1xf32> -> vector<8x1xf32>
    %375 = vector.broadcast %374 : vector<8x1xf32> to vector<8x8xf32>
    %376 = arith.mulf %371, %375 : vector<8x8xf32>
    %cst_131 = arith.constant dense<0.000000e+00> : vector<8x8xf32>
    %377 = tpu.matmul %376, %360, %cst_131 {dimension_numbers = #tpu.dot_dimension_numbers<[1], [0], [0], [1], [0, 0, 1, 1], [], []>} : vector<8x8xf32>, vector<8x8xf32>, vector<8x8xf32> -> vector<8x8xf32>
    %378 = tpu.concatenate %317, %337, %357, %377 in 1 : vector<8x8xf32>, vector<8x8xf32>, vector<8x8xf32>, vector<8x8xf32> -> vector<8x32xf32>
    %379 = vector.extract_strided_slice %27 {offsets = [1, 0], sizes = [1, 8], strides = [1, 1]} : vector<2x8xf32> to vector<1x8xf32>
    %380 = vector.extract_strided_slice %294 {offsets = [8, 0], sizes = [8, 8], strides = [1, 1]} : vector<16x32xf32> to vector<8x8xf32>
    %381 = vector.extract_strided_slice %295 {offsets = [8, 0], sizes = [8, 8], strides = [1, 1]} : vector<16x32xf32> to vector<8x8xf32>
    %382 = vector.extract_strided_slice %296 {offsets = [8, 0], sizes = [8, 8], strides = [1, 1]} : vector<16x32xf32> to vector<8x8xf32>
    %383 = tpu.transpose %381, [1, 0] : vector<8x8xf32> -> vector<8x8xf32>
    %cst_132 = arith.constant dense<0.000000e+00> : vector<8x8xf32>
    %384 = tpu.matmul %380, %383, %cst_132 {dimension_numbers = #tpu.dot_dimension_numbers<[1], [0], [0], [1], [0, 0, 1, 1], [], []>} : vector<8x8xf32>, vector<8x8xf32>, vector<8x8xf32> -> vector<8x8xf32>
    %cst_133 = arith.constant 0.353553385 : f32
    %385 = vector.broadcast %cst_133 : f32 to vector<8x8xf32>
    %386 = arith.mulf %384, %385 : vector<8x8xf32>
    %387 = vector.broadcast %379 : vector<1x8xf32> to vector<8x8xf32>
    %388 = arith.addf %386, %387 : vector<8x8xf32>
    %cst_134 = arith.constant dense<0xFF800000> : vector<8xf32>
    %389 = vector.multi_reduction <maximumf>, %388, %cst_134 [1] : vector<8x8xf32> to vector<8xf32>
    %390 = vector.shape_cast %389 : vector<8xf32> to vector<8x1xf32>
    %391 = vector.broadcast %390 : vector<8x1xf32> to vector<8x8xf32>
    %392 = arith.subf %388, %391 : vector<8x8xf32>
    %393 = math.exp %392 : vector<8x8xf32>
    %cst_135 = arith.constant dense<0.000000e+00> : vector<8xf32>
    %394 = vector.multi_reduction <add>, %393, %cst_135 [1] : vector<8x8xf32> to vector<8xf32>
    %395 = vector.shape_cast %394 : vector<8xf32> to vector<8x1xf32>
    %396 = tpu.reciprocal %395 {approx = true} : vector<8x1xf32> -> vector<8x1xf32>
    %397 = vector.broadcast %396 : vector<8x1xf32> to vector<8x8xf32>
    %398 = arith.mulf %393, %397 : vector<8x8xf32>
    %cst_136 = arith.constant dense<0.000000e+00> : vector<8x8xf32>
    %399 = tpu.matmul %398, %382, %cst_136 {dimension_numbers = #tpu.dot_dimension_numbers<[1], [0], [0], [1], [0, 0, 1, 1], [], []>} : vector<8x8xf32>, vector<8x8xf32>, vector<8x8xf32> -> vector<8x8xf32>
    %400 = vector.extract_strided_slice %294 {offsets = [8, 8], sizes = [8, 8], strides = [1, 1]} : vector<16x32xf32> to vector<8x8xf32>
    %401 = vector.extract_strided_slice %295 {offsets = [8, 8], sizes = [8, 8], strides = [1, 1]} : vector<16x32xf32> to vector<8x8xf32>
    %402 = vector.extract_strided_slice %296 {offsets = [8, 8], sizes = [8, 8], strides = [1, 1]} : vector<16x32xf32> to vector<8x8xf32>
    %403 = tpu.transpose %401, [1, 0] : vector<8x8xf32> -> vector<8x8xf32>
    %cst_137 = arith.constant dense<0.000000e+00> : vector<8x8xf32>
    %404 = tpu.matmul %400, %403, %cst_137 {dimension_numbers = #tpu.dot_dimension_numbers<[1], [0], [0], [1], [0, 0, 1, 1], [], []>} : vector<8x8xf32>, vector<8x8xf32>, vector<8x8xf32> -> vector<8x8xf32>
    %cst_138 = arith.constant 0.353553385 : f32
    %405 = vector.broadcast %cst_138 : f32 to vector<8x8xf32>
    %406 = arith.mulf %404, %405 : vector<8x8xf32>
    %407 = vector.broadcast %379 : vector<1x8xf32> to vector<8x8xf32>
    %408 = arith.addf %406, %407 : vector<8x8xf32>
    %cst_139 = arith.constant dense<0xFF800000> : vector<8xf32>
    %409 = vector.multi_reduction <maximumf>, %408, %cst_139 [1] : vector<8x8xf32> to vector<8xf32>
    %410 = vector.shape_cast %409 : vector<8xf32> to vector<8x1xf32>
    %411 = vector.broadcast %410 : vector<8x1xf32> to vector<8x8xf32>
    %412 = arith.subf %408, %411 : vector<8x8xf32>
    %413 = math.exp %412 : vector<8x8xf32>
    %cst_140 = arith.constant dense<0.000000e+00> : vector<8xf32>
    %414 = vector.multi_reduction <add>, %413, %cst_140 [1] : vector<8x8xf32> to vector<8xf32>
    %415 = vector.shape_cast %414 : vector<8xf32> to vector<8x1xf32>
    %416 = tpu.reciprocal %415 {approx = true} : vector<8x1xf32> -> vector<8x1xf32>
    %417 = vector.broadcast %416 : vector<8x1xf32> to vector<8x8xf32>
    %418 = arith.mulf %413, %417 : vector<8x8xf32>
    %cst_141 = arith.constant dense<0.000000e+00> : vector<8x8xf32>
    %419 = tpu.matmul %418, %402, %cst_141 {dimension_numbers = #tpu.dot_dimension_numbers<[1], [0], [0], [1], [0, 0, 1, 1], [], []>} : vector<8x8xf32>, vector<8x8xf32>, vector<8x8xf32> -> vector<8x8xf32>
    %420 = vector.extract_strided_slice %294 {offsets = [8, 16], sizes = [8, 8], strides = [1, 1]} : vector<16x32xf32> to vector<8x8xf32>
    %421 = vector.extract_strided_slice %295 {offsets = [8, 16], sizes = [8, 8], strides = [1, 1]} : vector<16x32xf32> to vector<8x8xf32>
    %422 = vector.extract_strided_slice %296 {offsets = [8, 16], sizes = [8, 8], strides = [1, 1]} : vector<16x32xf32> to vector<8x8xf32>
    %423 = tpu.transpose %421, [1, 0] : vector<8x8xf32> -> vector<8x8xf32>
    %cst_142 = arith.constant dense<0.000000e+00> : vector<8x8xf32>
    %424 = tpu.matmul %420, %423, %cst_142 {dimension_numbers = #tpu.dot_dimension_numbers<[1], [0], [0], [1], [0, 0, 1, 1], [], []>} : vector<8x8xf32>, vector<8x8xf32>, vector<8x8xf32> -> vector<8x8xf32>
    %cst_143 = arith.constant 0.353553385 : f32
    %425 = vector.broadcast %cst_143 : f32 to vector<8x8xf32>
    %426 = arith.mulf %424, %425 : vector<8x8xf32>
    %427 = vector.broadcast %379 : vector<1x8xf32> to vector<8x8xf32>
    %428 = arith.addf %426, %427 : vector<8x8xf32>
    %cst_144 = arith.constant dense<0xFF800000> : vector<8xf32>
    %429 = vector.multi_reduction <maximumf>, %428, %cst_144 [1] : vector<8x8xf32> to vector<8xf32>
    %430 = vector.shape_cast %429 : vector<8xf32> to vector<8x1xf32>
    %431 = vector.broadcast %430 : vector<8x1xf32> to vector<8x8xf32>
    %432 = arith.subf %428, %431 : vector<8x8xf32>
    %433 = math.exp %432 : vector<8x8xf32>
    %cst_145 = arith.constant dense<0.000000e+00> : vector<8xf32>
    %434 = vector.multi_reduction <add>, %433, %cst_145 [1] : vector<8x8xf32> to vector<8xf32>
    %435 = vector.shape_cast %434 : vector<8xf32> to vector<8x1xf32>
    %436 = tpu.reciprocal %435 {approx = true} : vector<8x1xf32> -> vector<8x1xf32>
    %437 = vector.broadcast %436 : vector<8x1xf32> to vector<8x8xf32>
    %438 = arith.mulf %433, %437 : vector<8x8xf32>
    %cst_146 = arith.constant dense<0.000000e+00> : vector<8x8xf32>
    %439 = tpu.matmul %438, %422, %cst_146 {dimension_numbers = #tpu.dot_dimension_numbers<[1], [0], [0], [1], [0, 0, 1, 1], [], []>} : vector<8x8xf32>, vector<8x8xf32>, vector<8x8xf32> -> vector<8x8xf32>
    %440 = vector.extract_strided_slice %294 {offsets = [8, 24], sizes = [8, 8], strides = [1, 1]} : vector<16x32xf32> to vector<8x8xf32>
    %441 = vector.extract_strided_slice %295 {offsets = [8, 24], sizes = [8, 8], strides = [1, 1]} : vector<16x32xf32> to vector<8x8xf32>
    %442 = vector.extract_strided_slice %296 {offsets = [8, 24], sizes = [8, 8], strides = [1, 1]} : vector<16x32xf32> to vector<8x8xf32>
    %443 = tpu.transpose %441, [1, 0] : vector<8x8xf32> -> vector<8x8xf32>
    %cst_147 = arith.constant dense<0.000000e+00> : vector<8x8xf32>
    %444 = tpu.matmul %440, %443, %cst_147 {dimension_numbers = #tpu.dot_dimension_numbers<[1], [0], [0], [1], [0, 0, 1, 1], [], []>} : vector<8x8xf32>, vector<8x8xf32>, vector<8x8xf32> -> vector<8x8xf32>
    %cst_148 = arith.constant 0.353553385 : f32
    %445 = vector.broadcast %cst_148 : f32 to vector<8x8xf32>
    %446 = arith.mulf %444, %445 : vector<8x8xf32>
    %447 = vector.broadcast %379 : vector<1x8xf32> to vector<8x8xf32>
    %448 = arith.addf %446, %447 : vector<8x8xf32>
    %cst_149 = arith.constant dense<0xFF800000> : vector<8xf32>
    %449 = vector.multi_reduction <maximumf>, %448, %cst_149 [1] : vector<8x8xf32> to vector<8xf32>
    %450 = vector.shape_cast %449 : vector<8xf32> to vector<8x1xf32>
    %451 = vector.broadcast %450 : vector<8x1xf32> to vector<8x8xf32>
    %452 = arith.subf %448, %451 : vector<8x8xf32>
    %453 = math.exp %452 : vector<8x8xf32>
    %cst_150 = arith.constant dense<0.000000e+00> : vector<8xf32>
    %454 = vector.multi_reduction <add>, %453, %cst_150 [1] : vector<8x8xf32> to vector<8xf32>
    %455 = vector.shape_cast %454 : vector<8xf32> to vector<8x1xf32>
    %456 = tpu.reciprocal %455 {approx = true} : vector<8x1xf32> -> vector<8x1xf32>
    %457 = vector.broadcast %456 : vector<8x1xf32> to vector<8x8xf32>
    %458 = arith.mulf %453, %457 : vector<8x8xf32>
    %cst_151 = arith.constant dense<0.000000e+00> : vector<8x8xf32>
    %459 = tpu.matmul %458, %442, %cst_151 {dimension_numbers = #tpu.dot_dimension_numbers<[1], [0], [0], [1], [0, 0, 1, 1], [], []>} : vector<8x8xf32>, vector<8x8xf32>, vector<8x8xf32> -> vector<8x8xf32>
    %460 = tpu.concatenate %399, %419, %439, %459 in 1 : vector<8x8xf32>, vector<8x8xf32>, vector<8x8xf32>, vector<8x8xf32> -> vector<8x32xf32>
    %461 = tpu.concatenate %378, %460 in 0 : vector<8x32xf32>, vector<8x32xf32> -> vector<16x32xf32>
    %c1_152 = arith.constant 1 : index
    %c0_153 = arith.constant 0 : index
    %c0_154 = arith.constant 0 : index
    %462 = vector.load %arg7[%c1_152, %c0_153, %c0_154] : memref<2x32x32xbf16, #tpu.memory_space<vmem>>, vector<1x32x32xbf16>
    %463 = vector.shape_cast %462 : vector<1x32x32xbf16> to vector<32x32xbf16>
    %464 = arith.truncf %461 : vector<16x32xf32> to vector<16x32xbf16>
    %cst_155 = arith.constant dense<0.000000e+00> : vector<16x32xf32>
    %465 = tpu.matmul %464, %463, %cst_155 {dimension_numbers = #tpu.dot_dimension_numbers<[1], [0], [0], [1], [0, 0, 1, 1], [], []>} : vector<16x32xbf16>, vector<32x32xbf16>, vector<16x32xf32> -> vector<16x32xf32>
    %c1_156 = arith.constant 1 : index
    %c0_157 = arith.constant 0 : index
    %c0_158 = arith.constant 0 : index
    %466 = vector.load %arg8[%c1_156, %c0_157, %c0_158] : memref<2x1x32xf32, #tpu.memory_space<vmem>>, vector<1x1x32xf32>
    %467 = vector.shape_cast %466 : vector<1x1x32xf32> to vector<1x32xf32>
    %468 = vector.broadcast %467 : vector<1x32xf32> to vector<16x32xf32>
    %469 = arith.addf %465, %468 : vector<16x32xf32>
    %470 = arith.addf %469, %285 : vector<16x32xf32>
    %c1_159 = arith.constant 1 : index
    %c0_160 = arith.constant 0 : index
    %c0_161 = arith.constant 0 : index
    %471 = vector.load %arg9[%c1_159, %c0_160, %c0_161] : memref<2x1x32xf32, #tpu.memory_space<vmem>>, vector<1x1x32xf32>
    %472 = vector.shape_cast %471 : vector<1x1x32xf32> to vector<1x32xf32>
    %c1_162 = arith.constant 1 : index
    %c0_163 = arith.constant 0 : index
    %c0_164 = arith.constant 0 : index
    %473 = vector.load %arg10[%c1_162, %c0_163, %c0_164] : memref<2x1x32xf32, #tpu.memory_space<vmem>>, vector<1x1x32xf32>
    %474 = vector.shape_cast %473 : vector<1x1x32xf32> to vector<1x32xf32>
    %cst_165 = arith.constant dense<0.000000e+00> : vector<16xf32>
    %475 = vector.multi_reduction <add>, %470, %cst_165 [1] : vector<16x32xf32> to vector<16xf32>
    %476 = vector.shape_cast %475 : vector<16xf32> to vector<16x1xf32>
    %cst_166 = arith.constant 3.200000e+01 : f32
    %477 = vector.broadcast %cst_166 : f32 to vector<16x1xf32>
    %478 = arith.divf %476, %477 : vector<16x1xf32>
    %479 = vector.broadcast %478 : vector<16x1xf32> to vector<16x32xf32>
    %480 = arith.subf %470, %479 : vector<16x32xf32>
    %481 = arith.mulf %480, %480 : vector<16x32xf32>
    %cst_167 = arith.constant dense<0.000000e+00> : vector<16xf32>
    %482 = vector.multi_reduction <add>, %481, %cst_167 [1] : vector<16x32xf32> to vector<16xf32>
    %483 = vector.shape_cast %482 : vector<16xf32> to vector<16x1xf32>
    %cst_168 = arith.constant 3.200000e+01 : f32
    %484 = vector.broadcast %cst_168 : f32 to vector<16x1xf32>
    %485 = arith.divf %483, %484 : vector<16x1xf32>
    %cst_169 = arith.constant 9.99999996E-13 : f32
    %486 = vector.broadcast %cst_169 : f32 to vector<16x1xf32>
    %487 = arith.addf %485, %486 : vector<16x1xf32>
    %488 = math.rsqrt %487 : vector<16x1xf32>
    %489 = vector.broadcast %488 : vector<16x1xf32> to vector<16x32xf32>
    %490 = arith.mulf %480, %489 : vector<16x32xf32>
    %491 = vector.broadcast %472 : vector<1x32xf32> to vector<16x32xf32>
    %492 = arith.mulf %490, %491 : vector<16x32xf32>
    %493 = vector.broadcast %474 : vector<1x32xf32> to vector<16x32xf32>
    %494 = arith.addf %492, %493 : vector<16x32xf32>
    %c1_170 = arith.constant 1 : index
    %c0_171 = arith.constant 0 : index
    %c0_172 = arith.constant 0 : index
    %495 = vector.load %arg11[%c1_170, %c0_171, %c0_172] : memref<2x32x64xbf16, #tpu.memory_space<vmem>>, vector<1x32x64xbf16>
    %496 = vector.shape_cast %495 : vector<1x32x64xbf16> to vector<32x64xbf16>
    %497 = arith.truncf %494 : vector<16x32xf32> to vector<16x32xbf16>
    %cst_173 = arith.constant dense<0.000000e+00> : vector<16x64xf32>
    %498 = tpu.matmul %497, %496, %cst_173 {dimension_numbers = #tpu.dot_dimension_numbers<[1], [0], [0], [1], [0, 0, 1, 1], [], []>} : vector<16x32xbf16>, vector<32x64xbf16>, vector<16x64xf32> -> vector<16x64xf32>
    %c1_174 = arith.constant 1 : index
    %c0_175 = arith.constant 0 : index
    %c0_176 = arith.constant 0 : index
    %499 = vector.load %arg12[%c1_174, %c0_175, %c0_176] : memref<2x1x64xf32, #tpu.memory_space<vmem>>, vector<1x1x64xf32>
    %500 = vector.shape_cast %499 : vector<1x1x64xf32> to vector<1x64xf32>
    %501 = vector.broadcast %500 : vector<1x64xf32> to vector<16x64xf32>
    %502 = arith.addf %498, %501 : vector<16x64xf32>
    %cst_177 = arith.constant 5.000000e-01 : f32
    %503 = vector.broadcast %cst_177 : f32 to vector<16x64xf32>
    %504 = arith.mulf %502, %503 : vector<16x64xf32>
    %cst_178 = arith.constant 0.707106769 : f32
    %505 = vector.broadcast %cst_178 : f32 to vector<16x64xf32>
    %506 = arith.mulf %502, %505 : vector<16x64xf32>
    %507 = math.erf %506 : vector<16x64xf32>
    %cst_179 = arith.constant 1.000000e+00 : f32
    %508 = vector.broadcast %cst_179 : f32 to vector<16x64xf32>
    %509 = arith.addf %508, %507 : vector<16x64xf32>
    %510 = arith.mulf %504, %509 : vector<16x64xf32>
    %c1_180 = arith.constant 1 : index
    %c0_181 = arith.constant 0 : index
    %c0_182 = arith.constant 0 : index
    %511 = vector.load %arg13[%c1_180, %c0_181, %c0_182] : memref<2x64x32xbf16, #tpu.memory_space<vmem>>, vector<1x64x32xbf16>
    %512 = vector.shape_cast %511 : vector<1x64x32xbf16> to vector<64x32xbf16>
    %513 = arith.truncf %510 : vector<16x64xf32> to vector<16x64xbf16>
    %cst_183 = arith.constant dense<0.000000e+00> : vector<16x32xf32>
    %514 = tpu.matmul %513, %512, %cst_183 {dimension_numbers = #tpu.dot_dimension_numbers<[1], [0], [0], [1], [0, 0, 1, 1], [], []>} : vector<16x64xbf16>, vector<64x32xbf16>, vector<16x32xf32> -> vector<16x32xf32>
    %c1_184 = arith.constant 1 : index
    %c0_185 = arith.constant 0 : index
    %c0_186 = arith.constant 0 : index
    %515 = vector.load %arg14[%c1_184, %c0_185, %c0_186] : memref<2x1x32xf32, #tpu.memory_space<vmem>>, vector<1x1x32xf32>
    %516 = vector.shape_cast %515 : vector<1x1x32xf32> to vector<1x32xf32>
    %517 = vector.broadcast %516 : vector<1x32xf32> to vector<16x32xf32>
    %518 = arith.addf %514, %517 : vector<16x32xf32>
    %519 = arith.addf %518, %494 : vector<16x32xf32>
    %c1_187 = arith.constant 1 : index
    %c0_188 = arith.constant 0 : index
    %c0_189 = arith.constant 0 : index
    %520 = vector.load %arg15[%c1_187, %c0_188, %c0_189] : memref<2x1x32xf32, #tpu.memory_space<vmem>>, vector<1x1x32xf32>
    %521 = vector.shape_cast %520 : vector<1x1x32xf32> to vector<1x32xf32>
    %c1_190 = arith.constant 1 : index
    %c0_191 = arith.constant 0 : index
    %c0_192 = arith.constant 0 : index
    %522 = vector.load %arg16[%c1_190, %c0_191, %c0_192] : memref<2x1x32xf32, #tpu.memory_space<vmem>>, vector<1x1x32xf32>
    %523 = vector.shape_cast %522 : vector<1x1x32xf32> to vector<1x32xf32>
    %cst_193 = arith.constant dense<0.000000e+00> : vector<16xf32>
    %524 = vector.multi_reduction <add>, %519, %cst_193 [1] : vector<16x32xf32> to vector<16xf32>
    %525 = vector.shape_cast %524 : vector<16xf32> to vector<16x1xf32>
    %cst_194 = arith.constant 3.200000e+01 : f32
    %526 = vector.broadcast %cst_194 : f32 to vector<16x1xf32>
    %527 = arith.divf %525, %526 : vector<16x1xf32>
    %528 = vector.broadcast %527 : vector<16x1xf32> to vector<16x32xf32>
    %529 = arith.subf %519, %528 : vector<16x32xf32>
    %530 = arith.mulf %529, %529 : vector<16x32xf32>
    %cst_195 = arith.constant dense<0.000000e+00> : vector<16xf32>
    %531 = vector.multi_reduction <add>, %530, %cst_195 [1] : vector<16x32xf32> to vector<16xf32>
    %532 = vector.shape_cast %531 : vector<16xf32> to vector<16x1xf32>
    %cst_196 = arith.constant 3.200000e+01 : f32
    %533 = vector.broadcast %cst_196 : f32 to vector<16x1xf32>
    %534 = arith.divf %532, %533 : vector<16x1xf32>
    %cst_197 = arith.constant 9.99999996E-13 : f32
    %535 = vector.broadcast %cst_197 : f32 to vector<16x1xf32>
    %536 = arith.addf %534, %535 : vector<16x1xf32>
    %537 = math.rsqrt %536 : vector<16x1xf32>
    %538 = vector.broadcast %537 : vector<16x1xf32> to vector<16x32xf32>
    %539 = arith.mulf %529, %538 : vector<16x32xf32>
    %540 = vector.broadcast %521 : vector<1x32xf32> to vector<16x32xf32>
    %541 = arith.mulf %539, %540 : vector<16x32xf32>
    %542 = vector.broadcast %523 : vector<1x32xf32> to vector<16x32xf32>
    %543 = arith.addf %541, %542 : vector<16x32xf32>
    %c0_198 = arith.constant 0 : index
    %c0_199 = arith.constant 0 : index
    %544 = vector.load %arg17[%c0_198, %c0_199] : memref<16x32xf32, #tpu.memory_space<vmem>>, vector<16x32xf32>
    tpu.vector_store %arg17[%c0_198, %c0_199], %543 {strides = array<i32>} : memref<16x32xf32, #tpu.memory_space<vmem>>, vector<16x32xf32>,
    return
  }
  func.func @transform_0(%arg0: i32) -> (i32, i32) {
    %c0_i32 = arith.constant 0 : i32
    %c0_i32_0 = arith.constant 0 : i32
    %c0_i32_1 = arith.constant 0 : i32
    return %c0_i32, %c0_i32_0 : i32, i32
  }
  func.func @transform_1(%arg0: i32) -> (i32, i32) {
    %c0_i32 = arith.constant 0 : i32
    %c0_i32_0 = arith.constant 0 : i32
    %c0_i32_1 = arith.constant 0 : i32
    return %c0_i32, %c0_i32_0 : i32, i32
  }
  func.func @transform_2(%arg0: i32) -> (i32, i32) {
    %c0_i32 = arith.constant 0 : i32
    %c0_i32_0 = arith.constant 0 : i32
    %c0_i32_1 = arith.constant 0 : i32
    return %c0_i32, %c0_i32_0 : i32, i32
  }
  func.func @transform_3(%arg0: i32) -> (i32, i32) {
    %c0_i32 = arith.constant 0 : i32
    %c0_i32_0 = arith.constant 0 : i32
    %c0_i32_1 = arith.constant 0 : i32
    return %c0_i32, %c0_i32_0 : i32, i32
  }
  func.func @transform_4(%arg0: i32) -> (i32, i32, i32) {
    %c0_i32 = arith.constant 0 : i32
    %c0_i32_0 = arith.constant 0 : i32
    %c0_i32_1 = arith.constant 0 : i32
    %c0_i32_2 = arith.constant 0 : i32
    return %c0_i32, %c0_i32_0, %c0_i32_1 : i32, i32, i32
  }
  func.func @transform_5(%arg0: i32) -> (i32, i32, i32) {
    %c0_i32 = arith.constant 0 : i32
    %c0_i32_0 = arith.constant 0 : i32
    %c0_i32_1 = arith.constant 0 : i32
    %c0_i32_2 = arith.constant 0 : i32
    return %c0_i32, %c0_i32_0, %c0_i32_1 : i32, i32, i32
  }
  func.func @transform_6(%arg0: i32) -> (i32, i32, i32) {
    %c0_i32 = arith.constant 0 : i32
    %c0_i32_0 = arith.constant 0 : i32
    %c0_i32_1 = arith.constant 0 : i32
    %c0_i32_2 = arith.constant 0 : i32
    return %c0_i32, %c0_i32_0, %c0_i32_1 : i32, i32, i32
  }
  func.func @transform_7(%arg0: i32) -> (i32, i32, i32) {
    %c0_i32 = arith.constant 0 : i32
    %c0_i32_0 = arith.constant 0 : i32
    %c0_i32_1 = arith.constant 0 : i32
    %c0_i32_2 = arith.constant 0 : i32
    return %c0_i32, %c0_i32_0, %c0_i32_1 : i32, i32, i32
  }
  func.func @transform_8(%arg0: i32) -> (i32, i32, i32) {
    %c0_i32 = arith.constant 0 : i32
    %c0_i32_0 = arith.constant 0 : i32
    %c0_i32_1 = arith.constant 0 : i32
    %c0_i32_2 = arith.constant 0 : i32
    return %c0_i32, %c0_i32_0, %c0_i32_1 : i32, i32, i32
  }
  func.func @transform_9(%arg0: i32) -> (i32, i32, i32) {
    %c0_i32 = arith.constant 0 : i32
    %c0_i32_0 = arith.constant 0 : i32
    %c0_i32_1 = arith.constant 0 : i32
    %c0_i32_2 = arith.constant 0 : i32
    return %c0_i32, %c0_i32_0, %c0_i32_1 : i32, i32, i32
  }
  func.func @transform_10(%arg0: i32) -> (i32, i32, i32) {
    %c0_i32 = arith.constant 0 : i32
    %c0_i32_0 = arith.constant 0 : i32
    %c0_i32_1 = arith.constant 0 : i32
    %c0_i32_2 = arith.constant 0 : i32
    return %c0_i32, %c0_i32_0, %c0_i32_1 : i32, i32, i32
  }
  func.func @transform_11(%arg0: i32) -> (i32, i32, i32) {
    %c0_i32 = arith.constant 0 : i32
    %c0_i32_0 = arith.constant 0 : i32
    %c0_i32_1 = arith.constant 0 : i32
    %c0_i32_2 = arith.constant 0 : i32
    return %c0_i32, %c0_i32_0, %c0_i32_1 : i32, i32, i32
  }
  func.func @transform_12(%arg0: i32) -> (i32, i32, i32) {
    %c0_i32 = arith.constant 0 : i32
    %c0_i32_0 = arith.constant 0 : i32
    %c0_i32_1 = arith.constant 0 : i32
    %c0_i32_2 = arith.constant 0 : i32
    return %c0_i32, %c0_i32_0, %c0_i32_1 : i32, i32, i32
  }
  func.func @transform_13(%arg0: i32) -> (i32, i32, i32) {
    %c0_i32 = arith.constant 0 : i32
    %c0_i32_0 = arith.constant 0 : i32
    %c0_i32_1 = arith.constant 0 : i32
    %c0_i32_2 = arith.constant 0 : i32
    return %c0_i32, %c0_i32_0, %c0_i32_1 : i32, i32, i32
  }
  func.func @transform_14(%arg0: i32) -> (i32, i32, i32) {
    %c0_i32 = arith.constant 0 : i32
    %c0_i32_0 = arith.constant 0 : i32
    %c0_i32_1 = arith.constant 0 : i32
    %c0_i32_2 = arith.constant 0 : i32
    return %c0_i32, %c0_i32_0, %c0_i32_1 : i32, i32, i32
  }
  func.func @transform_15(%arg0: i32) -> (i32, i32, i32) {
    %c0_i32 = arith.constant 0 : i32
    %c0_i32_0 = arith.constant 0 : i32
    %c0_i32_1 = arith.constant 0 : i32
    %c0_i32_2 = arith.constant 0 : i32
    return %c0_i32, %c0_i32_0, %c0_i32_1 : i32, i32, i32
  }
  func.func @transform_16(%arg0: i32) -> (i32, i32) {
    %c0_i32 = arith.constant 0 : i32
    %c0_i32_0 = arith.constant 0 : i32
    %c0_i32_1 = arith.constant 0 : i32
    return %c0_i32, %c0_i32_0 : i32, i32
  }
}

</mosaic_0001>

<llo_original>
// kernel: bert_forward.1
$region0: #{bert_forward.1}
  #allocation0 [shape = 'u32[]', space=smem, size = 0x4, offset = 0x4, fixed_abs, tag = 'smem constant byte address 0x4 - core index']
  #allocation1 [shape = 'u32[144,128]{1,0:T(1,128)}', space=vmem, size = 0x12000, scoped, tag = 'internal scratch']
  %s0 = inlined_call_operand.vmem [shape: f32[16,32], index: 0, kind: input, shape index: {}]
  %s1 = inlined_call_operand.vmem [shape: f32[2,8], index: 1, kind: input, shape index: {}]
  %s2 = inlined_call_operand.vmem [shape: f32[1,32], index: 2, kind: input, shape index: {}]
  %s3 = inlined_call_operand.vmem [shape: f32[1,32], index: 3, kind: input, shape index: {}]
  %s4 = inlined_call_operand.vmem [shape: bf16[2,32,96], index: 4, kind: input, shape index: {}]
  %s5 = inlined_call_operand.vmem [shape: f32[2,1,96], index: 5, kind: input, shape index: {}]
  %s6 = inlined_call_operand.vmem [shape: bf16[2,32,32], index: 6, kind: input, shape index: {}]
  %s7 = inlined_call_operand.vmem [shape: f32[2,1,32], index: 7, kind: input, shape index: {}]
  %s8 = inlined_call_operand.vmem [shape: f32[2,1,32], index: 8, kind: input, shape index: {}]
  %s9 = inlined_call_operand.vmem [shape: f32[2,1,32], index: 9, kind: input, shape index: {}]
  %s10 = inlined_call_operand.vmem [shape: bf16[2,32,64], index: 10, kind: input, shape index: {}]
  %s11 = inlined_call_operand.vmem [shape: f32[2,1,64], index: 11, kind: input, shape index: {}]
  %s12 = inlined_call_operand.vmem [shape: bf16[2,64,32], index: 12, kind: input, shape index: {}]
  %s13 = inlined_call_operand.vmem [shape: f32[2,1,32], index: 13, kind: input, shape index: {}]
  %s14 = inlined_call_operand.vmem [shape: f32[2,1,32], index: 14, kind: input, shape index: {}]
  %s15 = inlined_call_operand.vmem [shape: f32[2,1,32], index: 15, kind: input, shape index: {}]
  %s16 = inlined_call_operand.hbm [shape: f32[16,32], index: 16, kind: output, shape index: {}]
  %s17 = sld [smem:[#allocation0]]
  $region74: #{bert_forward.1} parent=0
    _
  %s19 = ssub.s32 1, %s17
  %s20 = scalar_select 0, %s19, %s17
  $region1: #{bert_forward.1} parent=0
    #allocation2 [shape = 'u8[8192]{0}', space=vmem, size = 0x2000, scoped, tag = 'output window, operand 0, single buffered']
    #allocation3 [shape = 's32[1]{0}', space=sflag, size = 0x4, scoped, tag = 'scoped memory for bert_forward.1']
    %21 = vsyncpa [#allocation3], 0
    // Predicated region
    $region2: #{bert_forward.1} parent=1 // pred_check
      _
    $region3: #{bert_forward.1} parent=1 // pred_check_branch
      %23 = sbr.rel (0) target = $region5
    $region4: #{bert_forward.1} parent=1 // pred_region
      _
    $region5: #{bert_forward.1} parent=1 // pred_fallthru
      _
    // Predicated region
    $region6: #{bert_forward.1} parent=1 // pred_check
      _
    $region7: #{bert_forward.1} parent=1 // pred_check_branch
      %25 = sbr.rel (0) target = $region9
    $region8: #{bert_forward.1} parent=1 // pred_region
      _
    $region9: #{bert_forward.1} parent=1 // pred_fallthru
      _
    // Predicated region
    $region10: #{bert_forward.1} parent=1 // pred_check
      _
    $region11: #{bert_forward.1} parent=1 // pred_check_branch
      %27 = sbr.rel (0) target = $region13
    $region12: #{bert_forward.1} parent=1 // pred_region
      _
    $region13: #{bert_forward.1} parent=1 // pred_fallthru
      _
    // Predicated region
    $region14: #{bert_forward.1} parent=1 // pred_check
      _
    $region15: #{bert_forward.1} parent=1 // pred_check_branch
      %29 = sbr.rel (0) target = $region17
    $region16: #{bert_forward.1} parent=1 // pred_region
      _
    $region17: #{bert_forward.1} parent=1 // pred_fallthru
      _
    // Predicated region
    $region18: #{bert_forward.1} parent=1 // pred_check
      _
    $region19: #{bert_forward.1} parent=1 // pred_check_branch
      %31 = sbr.rel (0) target = $region21
    $region20: #{bert_forward.1} parent=1 // pred_region
      _
    $region21: #{bert_forward.1} parent=1 // pred_fallthru
      _
    // Predicated region
    $region22: #{bert_forward.1} parent=1 // pred_check
      _
    $region23: #{bert_forward.1} parent=1 // pred_check_branch
      %33 = sbr.rel (0) target = $region25
    $region24: #{bert_forward.1} parent=1 // pred_region
      _
    $region25: #{bert_forward.1} parent=1 // pred_fallthru
      _
    // Predicated region
    $region26: #{bert_forward.1} parent=1 // pred_check
      _
    $region27: #{bert_forward.1} parent=1 // pred_check_branch
      %35 = sbr.rel (0) target = $region29
    $region28: #{bert_forward.1} parent=1 // pred_region
      _
    $region29: #{bert_forward.1} parent=1 // pred_fallthru
      _
    // Predicated region
    $region30: #{bert_forward.1} parent=1 // pred_check
      _
    $region31: #{bert_forward.1} parent=1 // pred_check_branch
      %37 = sbr.rel (0) target = $region33
    $region32: #{bert_forward.1} parent=1 // pred_region
      _
    $region33: #{bert_forward.1} parent=1 // pred_fallthru
      _
    // Predicated region
    $region34: #{bert_forward.1} parent=1 // pred_check
      _
    $region35: #{bert_forward.1} parent=1 // pred_check_branch
      %39 = sbr.rel (0) target = $region37
    $region36: #{bert_forward.1} parent=1 // pred_region
      _
    $region37: #{bert_forward.1} parent=1 // pred_fallthru
      _
    // Predicated region
    $region38: #{bert_forward.1} parent=1 // pred_check
      _
    $region39: #{bert_forward.1} parent=1 // pred_check_branch
      %41 = sbr.rel (0) target = $region41
    $region40: #{bert_forward.1} parent=1 // pred_region
      _
    $region41: #{bert_forward.1} parent=1 // pred_fallthru
      _
    // Predicated region
    $region42: #{bert_forward.1} parent=1 // pred_check
      _
    $region43: #{bert_forward.1} parent=1 // pred_check_branch
      %43 = sbr.rel (0) target = $region45
    $region44: #{bert_forward.1} parent=1 // pred_region
      _
    $region45: #{bert_forward.1} parent=1 // pred_fallthru
      _
    // Predicated region
    $region46: #{bert_forward.1} parent=1 // pred_check
      _
    $region47: #{bert_forward.1} parent=1 // pred_check_branch
      %45 = sbr.rel (0) target = $region49
    $region48: #{bert_forward.1} parent=1 // pred_region
      _
    $region49: #{bert_forward.1} parent=1 // pred_fallthru
      _
    // Predicated region
    $region50: #{bert_forward.1} parent=1 // pred_check
      _
    $region51: #{bert_forward.1} parent=1 // pred_check_branch
      %47 = sbr.rel (0) target = $region53
    $region52: #{bert_forward.1} parent=1 // pred_region
      _
    $region53: #{bert_forward.1} parent=1 // pred_fallthru
      _
    // Predicated region
    $region54: #{bert_forward.1} parent=1 // pred_check
      _
    $region55: #{bert_forward.1} parent=1 // pred_check_branch
      %49 = sbr.rel (0) target = $region57
    $region56: #{bert_forward.1} parent=1 // pred_region
      _
    $region57: #{bert_forward.1} parent=1 // pred_fallthru
      _
    // Predicated region
    $region58: #{bert_forward.1} parent=1 // pred_check
      _
    $region59: #{bert_forward.1} parent=1 // pred_check_branch
      %51 = sbr.rel (0) target = $region61
    $region60: #{bert_forward.1} parent=1 // pred_region
      _
    $region61: #{bert_forward.1} parent=1 // pred_fallthru
      _
    // Predicated region
    $region62: #{bert_forward.1} parent=1 // pred_check
      _
    $region63: #{bert_forward.1} parent=1 // pred_check_branch
      %53 = sbr.rel (0) target = $region65
    $region64: #{bert_forward.1} parent=1 // pred_region
      _
    $region65: #{bert_forward.1} parent=1 // pred_fallthru
      _
    %v55 = vld [vmem:[%s0] sm:$0xff]
    %v56 = vld [vmem:[%s0 + $0x8] sm:$0xff]
    %v57 = vld [vmem:[%s2] sm:$0x1]
    %v58 = vld [vmem:[%s3] sm:$0x1]
    %vm59 = vcmask 261120
    %v60 = vsel %vm59, %v55, 0.0
    %61 = vadd.xlane.f32.xlu0 %v60
    %v62 = vpop.xlane.xlu0 %61
    %v63 = vsel %vm59, %v56, 0.0
    %64 = vadd.xlane.f32.xlu0 %v63
    %v65 = vpop.xlane.xlu0 %64
    %v66 = vrcp.pop 32.0
    %v67 = vmul.f32 %v62, %v66
    %v68 = vmul.f32 %v65, %v66
    %v69 = vsub.f32 %v55, %v67
    %v70 = vsub.f32 %v56, %v68
    %v71 = vmul.f32 %v69, %v69
    %v72 = vmul.f32 %v70, %v70
    %v73 = vsel %vm59, %v71, 0.0
    %74 = vadd.xlane.f32.xlu0 %v73
    %v75 = vpop.xlane.xlu0 %74
    %v76 = vsel %vm59, %v72, 0.0
    %77 = vadd.xlane.f32.xlu0 %v76
    %v78 = vpop.xlane.xlu0 %77
    %v79 = vmul.f32 %v75, %v66
    %v80 = vmul.f32 %v78, %v66
    %v81 = vadd.f32 %v79, 1e-12
    %v82 = vadd.f32 %v80, 1e-12
    %v83 = vrsqrt.pop %v81
    %v84 = vrsqrt.pop %v82
    %v85 = vmul.f32 %v69, %v83
    %v86 = vmul.f32 %v70, %v84
    %v88 = vlaneseq
    %v89 = vshrl.u32 %v88, 7
    %v90 = vsub.s32 0, %v89
    %v91 = vrot.slane %v57, %v90
    %v93 = vmul.f32 %v85, %v91
    %v94 = vmul.f32 %v86, %v91
    %v96 = vlaneseq
    %v97 = vshrl.u32 %v96, 7
    %v98 = vsub.s32 0, %v97
    %v99 = vrot.slane %v58, %v98
    %v101 = vadd.f32 %v93, %v99
    %v102 = vadd.f32 %v94, %v99
    %v103 = vld [vmem:[%s1] sm:$0x3]
    %v104 = vsub.f32 1.0, %v103
    %v105 = vmul.f32 %v104, -10000.0
    %v106 = vld [vmem:[%s4] sm:$0xf]
    %v107 = vld [vmem:[%s4 + $0x4] sm:$0xf]
    %v108 = vld [vmem:[%s4 + $0x8] sm:$0xf]
    %v109 = vld [vmem:[%s4 + $0xc] sm:$0xf]
    %v110 = vpack.c.bf16 %v102, %v101
    %v111 = vld [vmem:[%s5] sm:$0x1]
    %v113 = vlaneseq
    %v114 = vshrl.u32 %v113, 7
    %v115 = vsub.s32 0, %v114
    %v116 = vrot.slane %v111, %v115
    %v122 = vunpack.c.l.b16 %v106
    %v123 = vunpack.c.l.b16 %v107
    %v124 = vunpack.c.l.b16 %v108
    %v125 = vunpack.c.l.b16 %v109
    %v126 = vpack.c.b16 %v123, %v122
    %v127 = vpack.c.b16 %v125, %v124
    %v131 = vsel %vm59, %v110, 0
    %133 = vmatprep.subr.bf16.mxu0 0
    %134 = vmatpush1.bf16.msra.mxu0 0
    %135 = vmatprep.subr.bf16.mxu0 0
    %136 = vmatpush1.bf16.msra.mxu0 0
    %137 = vmatprep.subr.bf16.mxu0 0
    %138 = vmatpush1.bf16.msra.mxu0 0
    %139 = vmatprep.subr.bf16.mxu0 0
    %140 = vmatpush1.bf16.msra.mxu0 0
    %141 = vmatprep.subr.bf16.mxu0 0
    %142 = vmatpush1.bf16.msra.mxu0 0
    %143 = vmatprep.subr.bf16.mxu0 0
    %144 = vmatpush1.bf16.msra.mxu0 0
    %145 = vmatprep.subr.bf16.mxu0 0
    %146 = vmatpush1.bf16.msra.mxu0 %v127
    %147 = vmatprep.subr.bf16.mxu0 0
    %148 = vmatpush1.bf16.msra.mxu0 %v126
    %149 = vmatprep.subr.bf16.mxu0 0
    %150 = vmatpush2.bf16.msra.mxu0 0
    %151 = vmatprep.subr.bf16.mxu0 0
    %152 = vmatpush2.bf16.msra.mxu0 0
    %153 = vmatprep.subr.bf16.mxu0 0
    %154 = vmatpush2.bf16.msra.mxu0 0
    %155 = vmatprep.subr.bf16.mxu0 0
    %156 = vmatpush2.bf16.msra.mxu0 0
    %157 = vmatprep.subr.bf16.mxu0 0
    %158 = vmatpush2.bf16.msra.mxu0 0
    %159 = vmatprep.subr.bf16.mxu0 0
    %160 = vmatpush2.bf16.msra.mxu0 0
    %161 = vmatprep.subr.bf16.mxu0 0
    %162 = vmatpush2.bf16.msra.mxu0 0
    %163 = vmatprep.subr.bf16.mxu0 0
    %164 = vmatpush2.bf16.msra.mxu0 0
    %165 = vmatprep.mubr.bf16.mxu0 0
    %166 = vmatmul.mubr.bf16.gmra.mxu0 %v131
    %v167 = vpop.f32.mrf.mxu0
    %v168 = vadd.f32 %v116, %v167
    %v169 = vpop.f32.mrf.mxu0
    %v170 = vpop.f32.mrf.mxu0
    %v171 = vadd.f32 %v116, %v170
    %v172 = vpop.f32.mrf.mxu0
    %173 = vdwg.mxu0
    %175 = vrot.lane.b32.xlu0 %v168, 96
    %v176 = vpop.permute.xlu0 %175
    %vm177 = vcmask 64512
    %v178 = vsel %vm177, %v168, 0
    %v180 = vsel %vm177, %v176, 0
    %182 = vmatprep.subr.mxu0 0.0
    %183 = vmatpush1.xpose.msra.mxu0 0.0
    %184 = vmatprep.subr.mxu0 0.0
    %185 = vmatpush1.xpose.msra.mxu0 0.0
    %186 = vmatprep.subr.mxu0 0.0
    %187 = vmatpush1.xpose.msra.mxu0 0.0
    %188 = vmatprep.subr.mxu0 0.0
    %189 = vmatpush1.xpose.msra.mxu0 0.0
    %190 = vmatprep.subr.mxu0 0.0
    %191 = vmatpush1.xpose.msra.mxu0 0.0
    %192 = vmatprep.subr.mxu0 0.0
    %193 = vmatpush1.xpose.msra.mxu0 0.0
    %194 = vmatprep.subr.mxu0 0.0
    %195 = vmatpush1.xpose.msra.mxu0 0.0
    %196 = vmatprep.subr.mxu0 0.0
    %197 = vmatpush1.xpose.msra.mxu0 0.0
    %198 = vmatprep.subr.mxu0 0.0
    %199 = vmatpush1.xpose.msra.mxu0 0.0
    %200 = vmatprep.subr.mxu0 0.0
    %201 = vmatpush1.xpose.msra.mxu0 0.0
    %202 = vmatprep.subr.mxu0 0.0
    %203 = vmatpush1.xpose.msra.mxu0 0.0
    %204 = vmatprep.subr.mxu0 0.0
    %205 = vmatpush1.xpose.msra.mxu0 0.0
    %206 = vmatprep.subr.mxu0 0.0
    %207 = vmatpush1.xpose.msra.mxu0 0.0
    %208 = vmatprep.subr.mxu0 0.0
    %209 = vmatpush1.xpose.msra.mxu0 0.0
    %210 = vmatprep.subr.mxu0 0.0
    %211 = vmatpush1.xpose.msra.mxu0 0.0
    %212 = vmatprep.subr.mxu0 0.0
    %213 = vmatpush1.xpose.msra.mxu0 %v180
    %214 = vmatprep.subr.mxu0 0.0
    %215 = vmatpush2.xpose.msra.mxu0 0.0
    %216 = vmatprep.subr.mxu0 0.0
    %217 = vmatpush2.xpose.msra.mxu0 0.0
    %218 = vmatprep.subr.mxu0 0.0
    %219 = vmatpush2.xpose.msra.mxu0 0.0
    %220 = vmatprep.subr.mxu0 0.0
    %221 = vmatpush2.xpose.msra.mxu0 0.0
    %222 = vmatprep.subr.mxu0 0.0
    %223 = vmatpush2.xpose.msra.mxu0 0.0
    %224 = vmatprep.subr.mxu0 0.0
    %225 = vmatpush2.xpose.msra.mxu0 0.0
    %226 = vmatprep.subr.mxu0 0.0
    %227 = vmatpush2.xpose.msra.mxu0 0.0
    %228 = vmatprep.subr.mxu0 0.0
    %229 = vmatpush2.xpose.msra.mxu0 0.0
    %230 = vmatprep.subr.mxu0 0.0
    %231 = vmatpush2.xpose.msra.mxu0 0.0
    %232 = vmatprep.subr.mxu0 0.0
    %233 = vmatpush2.xpose.msra.mxu0 0.0
    %234 = vmatprep.subr.mxu0 0.0
    %235 = vmatpush2.xpose.msra.mxu0 0.0
    %236 = vmatprep.subr.mxu0 0.0
    %237 = vmatpush2.xpose.msra.mxu0 0.0
    %238 = vmatprep.subr.mxu0 0.0
    %239 = vmatpush2.xpose.msra.mxu0 0.0
    %240 = vmatprep.subr.mxu0 0.0
    %241 = vmatpush2.xpose.msra.mxu0 0.0
    %242 = vmatprep.subr.mxu0 0.0
    %243 = vmatpush2.xpose.msra.mxu0 0.0
    %244 = vmatprep.subr.mxu0 0.0
    %245 = vmatpush2.xpose.msra.mxu0 0.0
    %246 = vmatprep.mubr.f32.mxu0 0.0
    %247 = vmatmul.mubr.f32.gmra.mxu0 %v178
    %v248 = vpop.f32.mrf.mxu0
    %v249 = vadd.f32 0.0, %v248
    %v250 = vpop.f32.mrf.mxu0
    %251 = vdwg.mxu0
    %v252 = vmul.f32 %v249, 0.35355338
    %v253 = vlaneseq
    %v254 = vshrl.u32 %v253, 7
    %v255 = vsub.s32 0, %v254
    %v256 = vrot.slane %v105, %v255
    %v257 = vadd.f32 %v252, %v256
    %v258 = vsel %vm177, %v257, -inf
    %259 = vmax.xlane.f32.xlu0 %v258
    %v260 = vpop.xlane.xlu0 %259
    %v261 = vsub.f32 %v257, %v260
    %v262 = vmul.f32 %v261, 1.442695
    %v263 = vpow.pop %v262
    %v264 = vsel %vm177, %v263, 0.0
    %265 = vadd.xlane.f32.xlu0 %v264
    %v266 = vpop.xlane.xlu0 %265
    %v267 = vrcp.pop %v266
    %v268 = vmul.f32 %v263, %v267
    %269 = vrot.lane.b32.xlu0 %v168, 64
    %v270 = vpop.permute.xlu0 %269
    %v273 = vsel %vm177, %v268, 0
    %275 = vmatprep.subr.mxu0 0.0
    %276 = vmatpush1.msra.mxu0 0.0
    %277 = vmatprep.subr.mxu0 0.0
    %278 = vmatpush1.msra.mxu0 0.0
    %279 = vmatprep.subr.mxu0 0.0
    %280 = vmatpush1.msra.mxu0 0.0
    %281 = vmatprep.subr.mxu0 0.0
    %282 = vmatpush1.msra.mxu0 0.0
    %283 = vmatprep.subr.mxu0 0.0
    %284 = vmatpush1.msra.mxu0 0.0
    %285 = vmatprep.subr.mxu0 0.0
    %286 = vmatpush1.msra.mxu0 0.0
    %287 = vmatprep.subr.mxu0 0.0
    %288 = vmatpush1.msra.mxu0 0.0
    %289 = vmatprep.subr.mxu0 0.0
    %290 = vmatpush1.msra.mxu0 0.0
    %291 = vmatprep.subr.mxu0 0.0
    %292 = vmatpush1.msra.mxu0 0.0
    %293 = vmatprep.subr.mxu0 0.0
    %294 = vmatpush1.msra.mxu0 0.0
    %295 = vmatprep.subr.mxu0 0.0
    %296 = vmatpush1.msra.mxu0 0.0
    %297 = vmatprep.subr.mxu0 0.0
    %298 = vmatpush1.msra.mxu0 0.0
    %299 = vmatprep.subr.mxu0 0.0
    %300 = vmatpush1.msra.mxu0 0.0
    %301 = vmatprep.subr.mxu0 0.0
    %302 = vmatpush1.msra.mxu0 0.0
    %303 = vmatprep.subr.mxu0 0.0
    %304 = vmatpush1.msra.mxu0 0.0
    %305 = vmatprep.subr.mxu0 0.0
    %306 = vmatpush1.msra.mxu0 %v270
    %307 = vmatprep.subr.mxu0 0.0
    %308 = vmatpush2.msra.mxu0 0.0
    %309 = vmatprep.subr.mxu0 0.0
    %310 = vmatpush2.msra.mxu0 0.0
    %311 = vmatprep.subr.mxu0 0.0
    %312 = vmatpush2.msra.mxu0 0.0
    %313 = vmatprep.subr.mxu0 0.0
    %314 = vmatpush2.msra.mxu0 0.0
    %315 = vmatprep.subr.mxu0 0.0
    %316 = vmatpush2.msra.mxu0 0.0
    %317 = vmatprep.subr.mxu0 0.0
    %318 = vmatpush2.msra.mxu0 0.0
    %319 = vmatprep.subr.mxu0 0.0
    %320 = vmatpush2.msra.mxu0 0.0
    %321 = vmatprep.subr.mxu0 0.0
    %322 = vmatpush2.msra.mxu0 0.0
    %323 = vmatprep.subr.mxu0 0.0
    %324 = vmatpush2.msra.mxu0 0.0
    %325 = vmatprep.subr.mxu0 0.0
    %326 = vmatpush2.msra.mxu0 0.0
    %327 = vmatprep.subr.mxu0 0.0
    %328 = vmatpush2.msra.mxu0 0.0
    %329 = vmatprep.subr.mxu0 0.0
    %330 = vmatpush2.msra.mxu0 0.0
    %331 = vmatprep.subr.mxu0 0.0
    %332 = vmatpush2.msra.mxu0 0.0
    %333 = vmatprep.subr.mxu0 0.0
    %334 = vmatpush2.msra.mxu0 0.0
    %335 = vmatprep.subr.mxu0 0.0
    %336 = vmatpush2.msra.mxu0 0.0
    %337 = vmatprep.subr.mxu0 0.0
    %338 = vmatpush2.msra.mxu0 0.0
    %339 = vmatprep.mubr.f32.mxu0 0.0
    %340 = vmatmul.mubr.f32.gmra.mxu0 %v273
    %v341 = vpop.f32.mrf.mxu0
    %v342 = vadd.f32 0.0, %v341
    %v343 = vpop.f32.mrf.mxu0
    %344 = vdwg.mxu0
    %345 = vrot.lane.b32.xlu0 %v168, 120
    %v346 = vpop.permute.xlu0 %345
    %347 = vrot.lane.b32.xlu0 %v168, 88
    %v348 = vpop.permute.xlu0 %347
    %v349 = vsel %vm177, %v346, 0
    %v351 = vsel %vm177, %v348, 0
    %353 = vmatprep.subr.mxu0 0.0
    %354 = vmatpush1.xpose.msra.mxu0 0.0
    %355 = vmatprep.subr.mxu0 0.0
    %356 = vmatpush1.xpose.msra.mxu0 0.0
    %357 = vmatprep.subr.mxu0 0.0
    %358 = vmatpush1.xpose.msra.mxu0 0.0
    %359 = vmatprep.subr.mxu0 0.0
    %360 = vmatpush1.xpose.msra.mxu0 0.0
    %361 = vmatprep.subr.mxu0 0.0
    %362 = vmatpush1.xpose.msra.mxu0 0.0
    %363 = vmatprep.subr.mxu0 0.0
    %364 = vmatpush1.xpose.msra.mxu0 0.0
    %365 = vmatprep.subr.mxu0 0.0
    %366 = vmatpush1.xpose.msra.mxu0 0.0
    %367 = vmatprep.subr.mxu0 0.0
    %368 = vmatpush1.xpose.msra.mxu0 0.0
    %369 = vmatprep.subr.mxu0 0.0
    %370 = vmatpush1.xpose.msra.mxu0 0.0
    %371 = vmatprep.subr.mxu0 0.0
    %372 = vmatpush1.xpose.msra.mxu0 0.0
    %373 = vmatprep.subr.mxu0 0.0
    %374 = vmatpush1.xpose.msra.mxu0 0.0
    %375 = vmatprep.subr.mxu0 0.0
    %376 = vmatpush1.xpose.msra.mxu0 0.0
    %377 = vmatprep.subr.mxu0 0.0
    %378 = vmatpush1.xpose.msra.mxu0 0.0
    %379 = vmatprep.subr.mxu0 0.0
    %380 = vmatpush1.xpose.msra.mxu0 0.0
    %381 = vmatprep.subr.mxu0 0.0
    %382 = vmatpush1.xpose.msra.mxu0 0.0
    %383 = vmatprep.subr.mxu0 0.0
    %384 = vmatpush1.xpose.msra.mxu0 %v351
    %385 = vmatprep.subr.mxu0 0.0
    %386 = vmatpush2.xpose.msra.mxu0 0.0
    %387 = vmatprep.subr.mxu0 0.0
    %388 = vmatpush2.xpose.msra.mxu0 0.0
    %389 = vmatprep.subr.mxu0 0.0
    %390 = vmatpush2.xpose.msra.mxu0 0.0
    %391 = vmatprep.subr.mxu0 0.0
    %392 = vmatpush2.xpose.msra.mxu0 0.0
    %393 = vmatprep.subr.mxu0 0.0
    %394 = vmatpush2.xpose.msra.mxu0 0.0
    %395 = vmatprep.subr.mxu0 0.0
    %396 = vmatpush2.xpose.msra.mxu0 0.0
    %397 = vmatprep.subr.mxu0 0.0
    %398 = vmatpush2.xpose.msra.mxu0 0.0
    %399 = vmatprep.subr.mxu0 0.0
    %400 = vmatpush2.xpose.msra.mxu0 0.0
    %401 = vmatprep.subr.mxu0 0.0
    %402 = vmatpush2.xpose.msra.mxu0 0.0
    %403 = vmatprep.subr.mxu0 0.0
    %404 = vmatpush2.xpose.msra.mxu0 0.0
    %405 = vmatprep.subr.mxu0 0.0
    %406 = vmatpush2.xpose.msra.mxu0 0.0
    %407 = vmatprep.subr.mxu0 0.0
    %408 = vmatpush2.xpose.msra.mxu0 0.0
    %409 = vmatprep.subr.mxu0 0.0
    %410 = vmatpush2.xpose.msra.mxu0 0.0
    %411 = vmatprep.subr.mxu0 0.0
    %412 = vmatpush2.xpose.msra.mxu0 0.0
    %413 = vmatprep.subr.mxu0 0.0
    %414 = vmatpush2.xpose.msra.mxu0 0.0
    %415 = vmatprep.subr.mxu0 0.0
    %416 = vmatpush2.xpose.msra.mxu0 0.0
    %417 = vmatprep.mubr.f32.mxu0 0.0
    %418 = vmatmul.mubr.f32.gmra.mxu0 %v349
    %v419 = vpop.f32.mrf.mxu0
    %v420 = vadd.f32 0.0, %v419
    %v421 = vpop.f32.mrf.mxu0
    %422 = vdwg.mxu0
    %v423 = vmul.f32 %v420, 0.35355338
    %v424 = vadd.f32 %v423, %v256
    %v425 = vsel %vm177, %v424, -inf
    %426 = vmax.xlane.f32.xlu0 %v425
    %v427 = vpop.xlane.xlu0 %426
    %v428 = vsub.f32 %v424, %v427
    %v429 = vmul.f32 %v428, 1.442695
    %v430 = vpow.pop %v429
    %v431 = vsel %vm177, %v430, 0.0
    %432 = vadd.xlane.f32.xlu0 %v431
    %v433 = vpop.xlane.xlu0 %432
    %v434 = vrcp.pop %v433
    %v435 = vmul.f32 %v430, %v434
    %436 = vrot.lane.b32.xlu0 %v168, 56
    %v437 = vpop.permute.xlu0 %436
    %v440 = vsel %vm177, %v435, 0
    %442 = vmatprep.subr.mxu0 0.0
    %443 = vmatpush1.msra.mxu0 0.0
    %444 = vmatprep.subr.mxu0 0.0
    %445 = vmatpush1.msra.mxu0 0.0
    %446 = vmatprep.subr.mxu0 0.0
    %447 = vmatpush1.msra.mxu0 0.0
    %448 = vmatprep.subr.mxu0 0.0
    %449 = vmatpush1.msra.mxu0 0.0
    %450 = vmatprep.subr.mxu0 0.0
    %451 = vmatpush1.msra.mxu0 0.0
    %452 = vmatprep.subr.mxu0 0.0
    %453 = vmatpush1.msra.mxu0 0.0
    %454 = vmatprep.subr.mxu0 0.0
    %455 = vmatpush1.msra.mxu0 0.0
    %456 = vmatprep.subr.mxu0 0.0
    %457 = vmatpush1.msra.mxu0 0.0
    %458 = vmatprep.subr.mxu0 0.0
    %459 = vmatpush1.msra.mxu0 0.0
    %460 = vmatprep.subr.mxu0 0.0
    %461 = vmatpush1.msra.mxu0 0.0
    %462 = vmatprep.subr.mxu0 0.0
    %463 = vmatpush1.msra.mxu0 0.0
    %464 = vmatprep.subr.mxu0 0.0
    %465 = vmatpush1.msra.mxu0 0.0
    %466 = vmatprep.subr.mxu0 0.0
    %467 = vmatpush1.msra.mxu0 0.0
    %468 = vmatprep.subr.mxu0 0.0
    %469 = vmatpush1.msra.mxu0 0.0
    %470 = vmatprep.subr.mxu0 0.0
    %471 = vmatpush1.msra.mxu0 0.0
    %472 = vmatprep.subr.mxu0 0.0
    %473 = vmatpush1.msra.mxu0 %v437
    %474 = vmatprep.subr.mxu0 0.0
    %475 = vmatpush2.msra.mxu0 0.0
    %476 = vmatprep.subr.mxu0 0.0
    %477 = vmatpush2.msra.mxu0 0.0
    %478 = vmatprep.subr.mxu0 0.0
    %479 = vmatpush2.msra.mxu0 0.0
    %480 = vmatprep.subr.mxu0 0.0
    %481 = vmatpush2.msra.mxu0 0.0
    %482 = vmatprep.subr.mxu0 0.0
    %483 = vmatpush2.msra.mxu0 0.0
    %484 = vmatprep.subr.mxu0 0.0
    %485 = vmatpush2.msra.mxu0 0.0
    %486 = vmatprep.subr.mxu0 0.0
    %487 = vmatpush2.msra.mxu0 0.0
    %488 = vmatprep.subr.mxu0 0.0
    %489 = vmatpush2.msra.mxu0 0.0
    %490 = vmatprep.subr.mxu0 0.0
    %491 = vmatpush2.msra.mxu0 0.0
    %492 = vmatprep.subr.mxu0 0.0
    %493 = vmatpush2.msra.mxu0 0.0
    %494 = vmatprep.subr.mxu0 0.0
    %495 = vmatpush2.msra.mxu0 0.0
    %496 = vmatprep.subr.mxu0 0.0
    %497 = vmatpush2.msra.mxu0 0.0
    %498 = vmatprep.subr.mxu0 0.0
    %499 = vmatpush2.msra.mxu0 0.0
    %500 = vmatprep.subr.mxu0 0.0
    %501 = vmatpush2.msra.mxu0 0.0
    %502 = vmatprep.subr.mxu0 0.0
    %503 = vmatpush2.msra.mxu0 0.0
    %504 = vmatprep.subr.mxu0 0.0
    %505 = vmatpush2.msra.mxu0 0.0
    %506 = vmatprep.mubr.f32.mxu0 0.0
    %507 = vmatmul.mubr.f32.gmra.mxu0 %v440
    %v508 = vpop.f32.mrf.mxu0
    %v509 = vadd.f32 0.0, %v508
    %v510 = vpop.f32.mrf.mxu0
    %511 = vdwg.mxu0
    %512 = vrot.lane.b32.xlu0 %v168, 112
    %v513 = vpop.permute.xlu0 %512
    %514 = vrot.lane.b32.xlu0 %v168, 80
    %v515 = vpop.permute.xlu0 %514
    %v516 = vsel %vm177, %v513, 0
    %v518 = vsel %vm177, %v515, 0
    %520 = vmatprep.subr.mxu0 0.0
    %521 = vmatpush1.xpose.msra.mxu0 0.0
    %522 = vmatprep.subr.mxu0 0.0
    %523 = vmatpush1.xpose.msra.mxu0 0.0
    %524 = vmatprep.subr.mxu0 0.0
    %525 = vmatpush1.xpose.msra.mxu0 0.0
    %526 = vmatprep.subr.mxu0 0.0
    %527 = vmatpush1.xpose.msra.mxu0 0.0
    %528 = vmatprep.subr.mxu0 0.0
    %529 = vmatpush1.xpose.msra.mxu0 0.0
    %530 = vmatprep.subr.mxu0 0.0
    %531 = vmatpush1.xpose.msra.mxu0 0.0
    %532 = vmatprep.subr.mxu0 0.0
    %533 = vmatpush1.xpose.msra.mxu0 0.0
    %534 = vmatprep.subr.mxu0 0.0
    %535 = vmatpush1.xpose.msra.mxu0 0.0
    %536 = vmatprep.subr.mxu0 0.0
    %537 = vmatpush1.xpose.msra.mxu0 0.0
    %538 = vmatprep.subr.mxu0 0.0
    %539 = vmatpush1.xpose.msra.mxu0 0.0
    %540 = vmatprep.subr.mxu0 0.0
    %541 = vmatpush1.xpose.msra.mxu0 0.0
    %542 = vmatprep.subr.mxu0 0.0
    %543 = vmatpush1.xpose.msra.mxu0 0.0
    %544 = vmatprep.subr.mxu0 0.0
    %545 = vmatpush1.xpose.msra.mxu0 0.0
    %546 = vmatprep.subr.mxu0 0.0
    %547 = vmatpush1.xpose.msra.mxu0 0.0
    %548 = vmatprep.subr.mxu0 0.0
    %549 = vmatpush1.xpose.msra.mxu0 0.0
    %550 = vmatprep.subr.mxu0 0.0
    %551 = vmatpush1.xpose.msra.mxu0 %v518
    %552 = vmatprep.subr.mxu0 0.0
    %553 = vmatpush2.xpose.msra.mxu0 0.0
    %554 = vmatprep.subr.mxu0 0.0
    %555 = vmatpush2.xpose.msra.mxu0 0.0
    %556 = vmatprep.subr.mxu0 0.0
    %557 = vmatpush2.xpose.msra.mxu0 0.0
    %558 = vmatprep.subr.mxu0 0.0
    %559 = vmatpush2.xpose.msra.mxu0 0.0
    %560 = vmatprep.subr.mxu0 0.0
    %561 = vmatpush2.xpose.msra.mxu0 0.0
    %562 = vmatprep.subr.mxu0 0.0
    %563 = vmatpush2.xpose.msra.mxu0 0.0
    %564 = vmatprep.subr.mxu0 0.0
    %565 = vmatpush2.xpose.msra.mxu0 0.0
    %566 = vmatprep.subr.mxu0 0.0
    %567 = vmatpush2.xpose.msra.mxu0 0.0
    %568 = vmatprep.subr.mxu0 0.0
    %569 = vmatpush2.xpose.msra.mxu0 0.0
    %570 = vmatprep.subr.mxu0 0.0
    %571 = vmatpush2.xpose.msra.mxu0 0.0
    %572 = vmatprep.subr.mxu0 0.0
    %573 = vmatpush2.xpose.msra.mxu0 0.0
    %574 = vmatprep.subr.mxu0 0.0
    %575 = vmatpush2.xpose.msra.mxu0 0.0
    %576 = vmatprep.subr.mxu0 0.0
    %577 = vmatpush2.xpose.msra.mxu0 0.0
    %578 = vmatprep.subr.mxu0 0.0
    %579 = vmatpush2.xpose.msra.mxu0 0.0
    %580 = vmatprep.subr.mxu0 0.0
    %581 = vmatpush2.xpose.msra.mxu0 0.0
    %582 = vmatprep.subr.mxu0 0.0
    %583 = vmatpush2.xpose.msra.mxu0 0.0
    %584 = vmatprep.mubr.f32.mxu0 0.0
    %585 = vmatmul.mubr.f32.gmra.mxu0 %v516
    %v586 = vpop.f32.mrf.mxu0
    %v587 = vadd.f32 0.0, %v586
    %v588 = vpop.f32.mrf.mxu0
    %589 = vdwg.mxu0
    %v590 = vmul.f32 %v587, 0.35355338
    %v591 = vadd.f32 %v590, %v256
    %v592 = vsel %vm177, %v591, -inf
    %593 = vmax.xlane.f32.xlu0 %v592
    %v594 = vpop.xlane.xlu0 %593
    %v595 = vsub.f32 %v591, %v594
    %v596 = vmul.f32 %v595, 1.442695
    %v597 = vpow.pop %v596
    %v598 = vsel %vm177, %v597, 0.0
    %599 = vadd.xlane.f32.xlu0 %v598
    %v600 = vpop.xlane.xlu0 %599
    %v601 = vrcp.pop %v600
    %v602 = vmul.f32 %v597, %v601
    %603 = vrot.lane.b32.xlu0 %v168, 48
    %v604 = vpop.permute.xlu0 %603
    %v607 = vsel %vm177, %v602, 0
    %609 = vmatprep.subr.mxu0 0.0
    %610 = vmatpush1.msra.mxu0 0.0
    %611 = vmatprep.subr.mxu0 0.0
    %612 = vmatpush1.msra.mxu0 0.0
    %613 = vmatprep.subr.mxu0 0.0
    %614 = vmatpush1.msra.mxu0 0.0
    %615 = vmatprep.subr.mxu0 0.0
    %616 = vmatpush1.msra.mxu0 0.0
    %617 = vmatprep.subr.mxu0 0.0
    %618 = vmatpush1.msra.mxu0 0.0
    %619 = vmatprep.subr.mxu0 0.0
    %620 = vmatpush1.msra.mxu0 0.0
    %621 = vmatprep.subr.mxu0 0.0
    %622 = vmatpush1.msra.mxu0 0.0
    %623 = vmatprep.subr.mxu0 0.0
    %624 = vmatpush1.msra.mxu0 0.0
    %625 = vmatprep.subr.mxu0 0.0
    %626 = vmatpush1.msra.mxu0 0.0
    %627 = vmatprep.subr.mxu0 0.0
    %628 = vmatpush1.msra.mxu0 0.0
    %629 = vmatprep.subr.mxu0 0.0
    %630 = vmatpush1.msra.mxu0 0.0
    %631 = vmatprep.subr.mxu0 0.0
    %632 = vmatpush1.msra.mxu0 0.0
    %633 = vmatprep.subr.mxu0 0.0
    %634 = vmatpush1.msra.mxu0 0.0
    %635 = vmatprep.subr.mxu0 0.0
    %636 = vmatpush1.msra.mxu0 0.0
    %637 = vmatprep.subr.mxu0 0.0
    %638 = vmatpush1.msra.mxu0 0.0
    %639 = vmatprep.subr.mxu0 0.0
    %640 = vmatpush1.msra.mxu0 %v604
    %641 = vmatprep.subr.mxu0 0.0
    %642 = vmatpush2.msra.mxu0 0.0
    %643 = vmatprep.subr.mxu0 0.0
    %644 = vmatpush2.msra.mxu0 0.0
    %645 = vmatprep.subr.mxu0 0.0
    %646 = vmatpush2.msra.mxu0 0.0
    %647 = vmatprep.subr.mxu0 0.0
    %648 = vmatpush2.msra.mxu0 0.0
    %649 = vmatprep.subr.mxu0 0.0
    %650 = vmatpush2.msra.mxu0 0.0
    %651 = vmatprep.subr.mxu0 0.0
    %652 = vmatpush2.msra.mxu0 0.0
    %653 = vmatprep.subr.mxu0 0.0
    %654 = vmatpush2.msra.mxu0 0.0
    %655 = vmatprep.subr.mxu0 0.0
    %656 = vmatpush2.msra.mxu0 0.0
    %657 = vmatprep.subr.mxu0 0.0
    %658 = vmatpush2.msra.mxu0 0.0
    %659 = vmatprep.subr.mxu0 0.0
    %660 = vmatpush2.msra.mxu0 0.0
    %661 = vmatprep.subr.mxu0 0.0
    %662 = vmatpush2.msra.mxu0 0.0
    %663 = vmatprep.subr.mxu0 0.0
    %664 = vmatpush2.msra.mxu0 0.0
    %665 = vmatprep.subr.mxu0 0.0
    %666 = vmatpush2.msra.mxu0 0.0
    %667 = vmatprep.subr.mxu0 0.0
    %668 = vmatpush2.msra.mxu0 0.0
    %669 = vmatprep.subr.mxu0 0.0
    %670 = vmatpush2.msra.mxu0 0.0
    %671 = vmatprep.subr.mxu0 0.0
    %672 = vmatpush2.msra.mxu0 0.0
    %673 = vmatprep.mubr.f32.mxu0 0.0
    %674 = vmatmul.mubr.f32.gmra.mxu0 %v607
    %v675 = vpop.f32.mrf.mxu0
    %v676 = vadd.f32 0.0, %v675
    %v677 = vpop.f32.mrf.mxu0
    %678 = vdwg.mxu0
    %679 = vrot.lane.b32.xlu0 %v168, 104
    %v680 = vpop.permute.xlu0 %679
    %681 = vrot.lane.b32.xlu0 %v168, 72
    %v682 = vpop.permute.xlu0 %681
    %v683 = vsel %vm177, %v680, 0
    %v685 = vsel %vm177, %v682, 0
    %687 = vmatprep.subr.mxu0 0.0
    %688 = vmatpush1.xpose.msra.mxu0 0.0
    %689 = vmatprep.subr.mxu0 0.0
    %690 = vmatpush1.xpose.msra.mxu0 0.0
    %691 = vmatprep.subr.mxu0 0.0
    %692 = vmatpush1.xpose.msra.mxu0 0.0
    %693 = vmatprep.subr.mxu0 0.0
    %694 = vmatpush1.xpose.msra.mxu0 0.0
    %695 = vmatprep.subr.mxu0 0.0
    %696 = vmatpush1.xpose.msra.mxu0 0.0
    %697 = vmatprep.subr.mxu0 0.0
    %698 = vmatpush1.xpose.msra.mxu0 0.0
    %699 = vmatprep.subr.mxu0 0.0
    %700 = vmatpush1.xpose.msra.mxu0 0.0
    %701 = vmatprep.subr.mxu0 0.0
    %702 = vmatpush1.xpose.msra.mxu0 0.0
    %703 = vmatprep.subr.mxu0 0.0
    %704 = vmatpush1.xpose.msra.mxu0 0.0
    %705 = vmatprep.subr.mxu0 0.0
    %706 = vmatpush1.xpose.msra.mxu0 0.0
    %707 = vmatprep.subr.mxu0 0.0
    %708 = vmatpush1.xpose.msra.mxu0 0.0
    %709 = vmatprep.subr.mxu0 0.0
    %710 = vmatpush1.xpose.msra.mxu0 0.0
    %711 = vmatprep.subr.mxu0 0.0
    %712 = vmatpush1.xpose.msra.mxu0 0.0
    %713 = vmatprep.subr.mxu0 0.0
    %714 = vmatpush1.xpose.msra.mxu0 0.0
    %715 = vmatprep.subr.mxu0 0.0
    %716 = vmatpush1.xpose.msra.mxu0 0.0
    %717 = vmatprep.subr.mxu0 0.0
    %718 = vmatpush1.xpose.msra.mxu0 %v685
    %719 = vmatprep.subr.mxu0 0.0
    %720 = vmatpush2.xpose.msra.mxu0 0.0
    %721 = vmatprep.subr.mxu0 0.0
    %722 = vmatpush2.xpose.msra.mxu0 0.0
    %723 = vmatprep.subr.mxu0 0.0
    %724 = vmatpush2.xpose.msra.mxu0 0.0
    %725 = vmatprep.subr.mxu0 0.0
    %726 = vmatpush2.xpose.msra.mxu0 0.0
    %727 = vmatprep.subr.mxu0 0.0
    %728 = vmatpush2.xpose.msra.mxu0 0.0
    %729 = vmatprep.subr.mxu0 0.0
    %730 = vmatpush2.xpose.msra.mxu0 0.0
    %731 = vmatprep.subr.mxu0 0.0
    %732 = vmatpush2.xpose.msra.mxu0 0.0
    %733 = vmatprep.subr.mxu0 0.0
    %734 = vmatpush2.xpose.msra.mxu0 0.0
    %735 = vmatprep.subr.mxu0 0.0
    %736 = vmatpush2.xpose.msra.mxu0 0.0
    %737 = vmatprep.subr.mxu0 0.0
    %738 = vmatpush2.xpose.msra.mxu0 0.0
    %739 = vmatprep.subr.mxu0 0.0
    %740 = vmatpush2.xpose.msra.mxu0 0.0
    %741 = vmatprep.subr.mxu0 0.0
    %742 = vmatpush2.xpose.msra.mxu0 0.0
    %743 = vmatprep.subr.mxu0 0.0
    %744 = vmatpush2.xpose.msra.mxu0 0.0
    %745 = vmatprep.subr.mxu0 0.0
    %746 = vmatpush2.xpose.msra.mxu0 0.0
    %747 = vmatprep.subr.mxu0 0.0
    %748 = vmatpush2.xpose.msra.mxu0 0.0
    %749 = vmatprep.subr.mxu0 0.0
    %750 = vmatpush2.xpose.msra.mxu0 0.0
    %751 = vmatprep.mubr.f32.mxu0 0.0
    %752 = vmatmul.mubr.f32.gmra.mxu0 %v683
    %v753 = vpop.f32.mrf.mxu0
    %v754 = vadd.f32 0.0, %v753
    %v755 = vpop.f32.mrf.mxu0
    %756 = vdwg.mxu0
    %v757 = vmul.f32 %v754, 0.35355338
    %v758 = vadd.f32 %v757, %v256
    %v759 = vsel %vm177, %v758, -inf
    %760 = vmax.xlane.f32.xlu0 %v759
    %v761 = vpop.xlane.xlu0 %760
    %v762 = vsub.f32 %v758, %v761
    %v763 = vmul.f32 %v762, 1.442695
    %v764 = vpow.pop %v763
    %v765 = vsel %vm177, %v764, 0.0
    %766 = vadd.xlane.f32.xlu0 %v765
    %v767 = vpop.xlane.xlu0 %766
    %v768 = vrcp.pop %v767
    %v769 = vmul.f32 %v764, %v768
    %770 = vrot.lane.b32.xlu0 %v168, 40
    %v771 = vpop.permute.xlu0 %770
    %v774 = vsel %vm177, %v769, 0
    %776 = vmatprep.subr.mxu0 0.0
    %777 = vmatpush1.msra.mxu0 0.0
    %778 = vmatprep.subr.mxu0 0.0
    %779 = vmatpush1.msra.mxu0 0.0
    %780 = vmatprep.subr.mxu0 0.0
    %781 = vmatpush1.msra.mxu0 0.0
    %782 = vmatprep.subr.mxu0 0.0
    %783 = vmatpush1.msra.mxu0 0.0
    %784 = vmatprep.subr.mxu0 0.0
    %785 = vmatpush1.msra.mxu0 0.0
    %786 = vmatprep.subr.mxu0 0.0
    %787 = vmatpush1.msra.mxu0 0.0
    %788 = vmatprep.subr.mxu0 0.0
    %789 = vmatpush1.msra.mxu0 0.0
    %790 = vmatprep.subr.mxu0 0.0
    %791 = vmatpush1.msra.mxu0 0.0
    %792 = vmatprep.subr.mxu0 0.0
    %793 = vmatpush1.msra.mxu0 0.0
    %794 = vmatprep.subr.mxu0 0.0
    %795 = vmatpush1.msra.mxu0 0.0
    %796 = vmatprep.subr.mxu0 0.0
    %797 = vmatpush1.msra.mxu0 0.0
    %798 = vmatprep.subr.mxu0 0.0
    %799 = vmatpush1.msra.mxu0 0.0
    %800 = vmatprep.subr.mxu0 0.0
    %801 = vmatpush1.msra.mxu0 0.0
    %802 = vmatprep.subr.mxu0 0.0
    %803 = vmatpush1.msra.mxu0 0.0
    %804 = vmatprep.subr.mxu0 0.0
    %805 = vmatpush1.msra.mxu0 0.0
    %806 = vmatprep.subr.mxu0 0.0
    %807 = vmatpush1.msra.mxu0 %v771
    %808 = vmatprep.subr.mxu0 0.0
    %809 = vmatpush2.msra.mxu0 0.0
    %810 = vmatprep.subr.mxu0 0.0
    %811 = vmatpush2.msra.mxu0 0.0
    %812 = vmatprep.subr.mxu0 0.0
    %813 = vmatpush2.msra.mxu0 0.0
    %814 = vmatprep.subr.mxu0 0.0
    %815 = vmatpush2.msra.mxu0 0.0
    %816 = vmatprep.subr.mxu0 0.0
    %817 = vmatpush2.msra.mxu0 0.0
    %818 = vmatprep.subr.mxu0 0.0
    %819 = vmatpush2.msra.mxu0 0.0
    %820 = vmatprep.subr.mxu0 0.0
    %821 = vmatpush2.msra.mxu0 0.0
    %822 = vmatprep.subr.mxu0 0.0
    %823 = vmatpush2.msra.mxu0 0.0
    %824 = vmatprep.subr.mxu0 0.0
    %825 = vmatpush2.msra.mxu0 0.0
    %826 = vmatprep.subr.mxu0 0.0
    %827 = vmatpush2.msra.mxu0 0.0
    %828 = vmatprep.subr.mxu0 0.0
    %829 = vmatpush2.msra.mxu0 0.0
    %830 = vmatprep.subr.mxu0 0.0
    %831 = vmatpush2.msra.mxu0 0.0
    %832 = vmatprep.subr.mxu0 0.0
    %833 = vmatpush2.msra.mxu0 0.0
    %834 = vmatprep.subr.mxu0 0.0
    %835 = vmatpush2.msra.mxu0 0.0
    %836 = vmatprep.subr.mxu0 0.0
    %837 = vmatpush2.msra.mxu0 0.0
    %838 = vmatprep.subr.mxu0 0.0
    %839 = vmatpush2.msra.mxu0 0.0
    %840 = vmatprep.mubr.f32.mxu0 0.0
    %841 = vmatmul.mubr.f32.gmra.mxu0 %v774
    %v842 = vpop.f32.mrf.mxu0
    %v843 = vadd.f32 0.0, %v842
    %v844 = vpop.f32.mrf.mxu0
    %845 = vdwg.mxu0
    %847 = vrot.lane.b32.xlu0 %v509, 8
    %v848 = vpop.permute.xlu0 %847
    %851 = vrot.lane.b32.xlu0 %v676, 16
    %v852 = vpop.permute.xlu0 %851
    %855 = vrot.lane.b32.xlu0 %v843, 24
    %v856 = vpop.permute.xlu0 %855
    %v858 = vsel %vm177, %v342, %v848
    %vm859 = vcmask 130048
    %v860 = vsel %vm859, %v858, %v852
    %vm861 = vcmask 195584
    %v862 = vsel %vm861, %v860, %v856
    %864 = vrot.lane.b32.xlu0 %v171, 96
    %v865 = vpop.permute.xlu0 %864
    %v866 = vsel %vm177, %v171, 0
    %v868 = vsel %vm177, %v865, 0
    %870 = vmatprep.subr.mxu0 0.0
    %871 = vmatpush1.xpose.msra.mxu0 0.0
    %872 = vmatprep.subr.mxu0 0.0
    %873 = vmatpush1.xpose.msra.mxu0 0.0
    %874 = vmatprep.subr.mxu0 0.0
    %875 = vmatpush1.xpose.msra.mxu0 0.0
    %876 = vmatprep.subr.mxu0 0.0
    %877 = vmatpush1.xpose.msra.mxu0 0.0
    %878 = vmatprep.subr.mxu0 0.0
    %879 = vmatpush1.xpose.msra.mxu0 0.0
    %880 = vmatprep.subr.mxu0 0.0
    %881 = vmatpush1.xpose.msra.mxu0 0.0
    %882 = vmatprep.subr.mxu0 0.0
    %883 = vmatpush1.xpose.msra.mxu0 0.0
    %884 = vmatprep.subr.mxu0 0.0
    %885 = vmatpush1.xpose.msra.mxu0 0.0
    %886 = vmatprep.subr.mxu0 0.0
    %887 = vmatpush1.xpose.msra.mxu0 0.0
    %888 = vmatprep.subr.mxu0 0.0
    %889 = vmatpush1.xpose.msra.mxu0 0.0
    %890 = vmatprep.subr.mxu0 0.0
    %891 = vmatpush1.xpose.msra.mxu0 0.0
    %892 = vmatprep.subr.mxu0 0.0
    %893 = vmatpush1.xpose.msra.mxu0 0.0
    %894 = vmatprep.subr.mxu0 0.0
    %895 = vmatpush1.xpose.msra.mxu0 0.0
    %896 = vmatprep.subr.mxu0 0.0
    %897 = vmatpush1.xpose.msra.mxu0 0.0
    %898 = vmatprep.subr.mxu0 0.0
    %899 = vmatpush1.xpose.msra.mxu0 0.0
    %900 = vmatprep.subr.mxu0 0.0
    %901 = vmatpush1.xpose.msra.mxu0 %v868
    %902 = vmatprep.subr.mxu0 0.0
    %903 = vmatpush2.xpose.msra.mxu0 0.0
    %904 = vmatprep.subr.mxu0 0.0
    %905 = vmatpush2.xpose.msra.mxu0 0.0
    %906 = vmatprep.subr.mxu0 0.0
    %907 = vmatpush2.xpose.msra.mxu0 0.0
    %908 = vmatprep.subr.mxu0 0.0
    %909 = vmatpush2.xpose.msra.mxu0 0.0
    %910 = vmatprep.subr.mxu0 0.0
    %911 = vmatpush2.xpose.msra.mxu0 0.0
    %912 = vmatprep.subr.mxu0 0.0
    %913 = vmatpush2.xpose.msra.mxu0 0.0
    %914 = vmatprep.subr.mxu0 0.0
    %915 = vmatpush2.xpose.msra.mxu0 0.0
    %916 = vmatprep.subr.mxu0 0.0
    %917 = vmatpush2.xpose.msra.mxu0 0.0
    %918 = vmatprep.subr.mxu0 0.0
    %919 = vmatpush2.xpose.msra.mxu0 0.0
    %920 = vmatprep.subr.mxu0 0.0
    %921 = vmatpush2.xpose.msra.mxu0 0.0
    %922 = vmatprep.subr.mxu0 0.0
    %923 = vmatpush2.xpose.msra.mxu0 0.0
    %924 = vmatprep.subr.mxu0 0.0
    %925 = vmatpush2.xpose.msra.mxu0 0.0
    %926 = vmatprep.subr.mxu0 0.0
    %927 = vmatpush2.xpose.msra.mxu0 0.0
    %928 = vmatprep.subr.mxu0 0.0
    %929 = vmatpush2.xpose.msra.mxu0 0.0
    %930 = vmatprep.subr.mxu0 0.0
    %931 = vmatpush2.xpose.msra.mxu0 0.0
    %932 = vmatprep.subr.mxu0 0.0
    %933 = vmatpush2.xpose.msra.mxu0 0.0
    %934 = vmatprep.mubr.f32.mxu0 0.0
    %935 = vmatmul.mubr.f32.gmra.mxu0 %v866
    %v936 = vpop.f32.mrf.mxu0
    %v937 = vadd.f32 0.0, %v936
    %v938 = vpop.f32.mrf.mxu0
    %939 = vdwg.mxu0
    %v940 = vmul.f32 %v937, 0.35355338
    %v941 = vlaneseq
    %v942 = vshrl.u32 %v941, 7
    %v943 = vsub.s32 1, %v942
    %v944 = vrot.slane %v105, %v943
    %v945 = vadd.f32 %v940, %v944
    %v946 = vsel %vm177, %v945, -inf
    %947 = vmax.xlane.f32.xlu0 %v946
    %v948 = vpop.xlane.xlu0 %947
    %v949 = vsub.f32 %v945, %v948
    %v950 = vmul.f32 %v949, 1.442695
    %v951 = vpow.pop %v950
    %v952 = vsel %vm177, %v951, 0.0
    %953 = vadd.xlane.f32.xlu0 %v952
    %v954 = vpop.xlane.xlu0 %953
    %v955 = vrcp.pop %v954
    %v956 = vmul.f32 %v951, %v955
    %957 = vrot.lane.b32.xlu0 %v171, 64
    %v958 = vpop.permute.xlu0 %957
    %v961 = vsel %vm177, %v956, 0
    %963 = vmatprep.subr.mxu0 0.0
    %964 = vmatpush1.msra.mxu0 0.0
    %965 = vmatprep.subr.mxu0 0.0
    %966 = vmatpush1.msra.mxu0 0.0
    %967 = vmatprep.subr.mxu0 0.0
    %968 = vmatpush1.msra.mxu0 0.0
    %969 = vmatprep.subr.mxu0 0.0
    %970 = vmatpush1.msra.mxu0 0.0
    %971 = vmatprep.subr.mxu0 0.0
    %972 = vmatpush1.msra.mxu0 0.0
    %973 = vmatprep.subr.mxu0 0.0
    %974 = vmatpush1.msra.mxu0 0.0
    %975 = vmatprep.subr.mxu0 0.0
    %976 = vmatpush1.msra.mxu0 0.0
    %977 = vmatprep.subr.mxu0 0.0
    %978 = vmatpush1.msra.mxu0 0.0
    %979 = vmatprep.subr.mxu0 0.0
    %980 = vmatpush1.msra.mxu0 0.0
    %981 = vmatprep.subr.mxu0 0.0
    %982 = vmatpush1.msra.mxu0 0.0
    %983 = vmatprep.subr.mxu0 0.0
    %984 = vmatpush1.msra.mxu0 0.0
    %985 = vmatprep.subr.mxu0 0.0
    %986 = vmatpush1.msra.mxu0 0.0
    %987 = vmatprep.subr.mxu0 0.0
    %988 = vmatpush1.msra.mxu0 0.0
    %989 = vmatprep.subr.mxu0 0.0
    %990 = vmatpush1.msra.mxu0 0.0
    %991 = vmatprep.subr.mxu0 0.0
    %992 = vmatpush1.msra.mxu0 0.0
    %993 = vmatprep.subr.mxu0 0.0
    %994 = vmatpush1.msra.mxu0 %v958
    %995 = vmatprep.subr.mxu0 0.0
    %996 = vmatpush2.msra.mxu0 0.0
    %997 = vmatprep.subr.mxu0 0.0
    %998 = vmatpush2.msra.mxu0 0.0
    %999 = vmatprep.subr.mxu0 0.0
    %1000 = vmatpush2.msra.mxu0 0.0
    %1001 = vmatprep.subr.mxu0 0.0
    %1002 = vmatpush2.msra.mxu0 0.0
    %1003 = vmatprep.subr.mxu0 0.0
    %1004 = vmatpush2.msra.mxu0 0.0
    %1005 = vmatprep.subr.mxu0 0.0
    %1006 = vmatpush2.msra.mxu0 0.0
    %1007 = vmatprep.subr.mxu0 0.0
    %1008 = vmatpush2.msra.mxu0 0.0
    %1009 = vmatprep.subr.mxu0 0.0
    %1010 = vmatpush2.msra.mxu0 0.0
    %1011 = vmatprep.subr.mxu0 0.0
    %1012 = vmatpush2.msra.mxu0 0.0
    %1013 = vmatprep.subr.mxu0 0.0
    %1014 = vmatpush2.msra.mxu0 0.0
    %1015 = vmatprep.subr.mxu0 0.0
    %1016 = vmatpush2.msra.mxu0 0.0
    %1017 = vmatprep.subr.mxu0 0.0
    %1018 = vmatpush2.msra.mxu0 0.0
    %1019 = vmatprep.subr.mxu0 0.0
    %1020 = vmatpush2.msra.mxu0 0.0
    %1021 = vmatprep.subr.mxu0 0.0
    %1022 = vmatpush2.msra.mxu0 0.0
    %1023 = vmatprep.subr.mxu0 0.0
    %1024 = vmatpush2.msra.mxu0 0.0
    %1025 = vmatprep.subr.mxu0 0.0
    %1026 = vmatpush2.msra.mxu0 0.0
    %1027 = vmatprep.mubr.f32.mxu0 0.0
    %1028 = vmatmul.mubr.f32.gmra.mxu0 %v961
    %v1029 = vpop.f32.mrf.mxu0
    %v1030 = vadd.f32 0.0, %v1029
    %v1031 = vpop.f32.mrf.mxu0
    %1032 = vdwg.mxu0
    %1033 = vrot.lane.b32.xlu0 %v171, 120
    %v1034 = vpop.permute.xlu0 %1033
    %1035 = vrot.lane.b32.xlu0 %v171, 88
    %v1036 = vpop.permute.xlu0 %1035
    %v1037 = vsel %vm177, %v1034, 0
    %v1039 = vsel %vm177, %v1036, 0
    %1041 = vmatprep.subr.mxu0 0.0
    %1042 = vmatpush1.xpose.msra.mxu0 0.0
    %1043 = vmatprep.subr.mxu0 0.0
    %1044 = vmatpush1.xpose.msra.mxu0 0.0
    %1045 = vmatprep.subr.mxu0 0.0
    %1046 = vmatpush1.xpose.msra.mxu0 0.0
    %1047 = vmatprep.subr.mxu0 0.0
    %1048 = vmatpush1.xpose.msra.mxu0 0.0
    %1049 = vmatprep.subr.mxu0 0.0
    %1050 = vmatpush1.xpose.msra.mxu0 0.0
    %1051 = vmatprep.subr.mxu0 0.0
    %1052 = vmatpush1.xpose.msra.mxu0 0.0
    %1053 = vmatprep.subr.mxu0 0.0
    %1054 = vmatpush1.xpose.msra.mxu0 0.0
    %1055 = vmatprep.subr.mxu0 0.0
    %1056 = vmatpush1.xpose.msra.mxu0 0.0
    %1057 = vmatprep.subr.mxu0 0.0
    %1058 = vmatpush1.xpose.msra.mxu0 0.0
    %1059 = vmatprep.subr.mxu0 0.0
    %1060 = vmatpush1.xpose.msra.mxu0 0.0
    %1061 = vmatprep.subr.mxu0 0.0
    %1062 = vmatpush1.xpose.msra.mxu0 0.0
    %1063 = vmatprep.subr.mxu0 0.0
    %1064 = vmatpush1.xpose.msra.mxu0 0.0
    %1065 = vmatprep.subr.mxu0 0.0
    %1066 = vmatpush1.xpose.msra.mxu0 0.0
    %1067 = vmatprep.subr.mxu0 0.0
    %1068 = vmatpush1.xpose.msra.mxu0 0.0
    %1069 = vmatprep.subr.mxu0 0.0
    %1070 = vmatpush1.xpose.msra.mxu0 0.0
    %1071 = vmatprep.subr.mxu0 0.0
    %1072 = vmatpush1.xpose.msra.mxu0 %v1039
    %1073 = vmatprep.subr.mxu0 0.0
    %1074 = vmatpush2.xpose.msra.mxu0 0.0
    %1075 = vmatprep.subr.mxu0 0.0
    %1076 = vmatpush2.xpose.msra.mxu0 0.0
    %1077 = vmatprep.subr.mxu0 0.0
    %1078 = vmatpush2.xpose.msra.mxu0 0.0
    %1079 = vmatprep.subr.mxu0 0.0
    %1080 = vmatpush2.xpose.msra.mxu0 0.0
    %1081 = vmatprep.subr.mxu0 0.0
    %1082 = vmatpush2.xpose.msra.mxu0 0.0
    %1083 = vmatprep.subr.mxu0 0.0
    %1084 = vmatpush2.xpose.msra.mxu0 0.0
    %1085 = vmatprep.subr.mxu0 0.0
    %1086 = vmatpush2.xpose.msra.mxu0 0.0
    %1087 = vmatprep.subr.mxu0 0.0
    %1088 = vmatpush2.xpose.msra.mxu0 0.0
    %1089 = vmatprep.subr.mxu0 0.0
    %1090 = vmatpush2.xpose.msra.mxu0 0.0
    %1091 = vmatprep.subr.mxu0 0.0
    %1092 = vmatpush2.xpose.msra.mxu0 0.0
    %1093 = vmatprep.subr.mxu0 0.0
    %1094 = vmatpush2.xpose.msra.mxu0 0.0
    %1095 = vmatprep.subr.mxu0 0.0
    %1096 = vmatpush2.xpose.msra.mxu0 0.0
    %1097 = vmatprep.subr.mxu0 0.0
    %1098 = vmatpush2.xpose.msra.mxu0 0.0
    %1099 = vmatprep.subr.mxu0 0.0
    %1100 = vmatpush2.xpose.msra.mxu0 0.0
    %1101 = vmatprep.subr.mxu0 0.0
    %1102 = vmatpush2.xpose.msra.mxu0 0.0
    %1103 = vmatprep.subr.mxu0 0.0
    %1104 = vmatpush2.xpose.msra.mxu0 0.0
    %1105 = vmatprep.mubr.f32.mxu0 0.0
    %1106 = vmatmul.mubr.f32.gmra.mxu0 %v1037
    %v1107 = vpop.f32.mrf.mxu0
    %v1108 = vadd.f32 0.0, %v1107
    %v1109 = vpop.f32.mrf.mxu0
    %1110 = vdwg.mxu0
    %v1111 = vmul.f32 %v1108, 0.35355338
    %v1112 = vadd.f32 %v1111, %v944
    %v1113 = vsel %vm177, %v1112, -inf
    %1114 = vmax.xlane.f32.xlu0 %v1113
    %v1115 = vpop.xlane.xlu0 %1114
    %v1116 = vsub.f32 %v1112, %v1115
    %v1117 = vmul.f32 %v1116, 1.442695
    %v1118 = vpow.pop %v1117
    %v1119 = vsel %vm177, %v1118, 0.0
    %1120 = vadd.xlane.f32.xlu0 %v1119
    %v1121 = vpop.xlane.xlu0 %1120
    %v1122 = vrcp.pop %v1121
    %v1123 = vmul.f32 %v1118, %v1122
    %1124 = vrot.lane.b32.xlu0 %v171, 56
    %v1125 = vpop.permute.xlu0 %1124
    %v1128 = vsel %vm177, %v1123, 0
    %1130 = vmatprep.subr.mxu0 0.0
    %1131 = vmatpush1.msra.mxu0 0.0
    %1132 = vmatprep.subr.mxu0 0.0
    %1133 = vmatpush1.msra.mxu0 0.0
    %1134 = vmatprep.subr.mxu0 0.0
    %1135 = vmatpush1.msra.mxu0 0.0
    %1136 = vmatprep.subr.mxu0 0.0
    %1137 = vmatpush1.msra.mxu0 0.0
    %1138 = vmatprep.subr.mxu0 0.0
    %1139 = vmatpush1.msra.mxu0 0.0
    %1140 = vmatprep.subr.mxu0 0.0
    %1141 = vmatpush1.msra.mxu0 0.0
    %1142 = vmatprep.subr.mxu0 0.0
    %1143 = vmatpush1.msra.mxu0 0.0
    %1144 = vmatprep.subr.mxu0 0.0
    %1145 = vmatpush1.msra.mxu0 0.0
    %1146 = vmatprep.subr.mxu0 0.0
    %1147 = vmatpush1.msra.mxu0 0.0
    %1148 = vmatprep.subr.mxu0 0.0
    %1149 = vmatpush1.msra.mxu0 0.0
    %1150 = vmatprep.subr.mxu0 0.0
    %1151 = vmatpush1.msra.mxu0 0.0
    %1152 = vmatprep.subr.mxu0 0.0
    %1153 = vmatpush1.msra.mxu0 0.0
    %1154 = vmatprep.subr.mxu0 0.0
    %1155 = vmatpush1.msra.mxu0 0.0
    %1156 = vmatprep.subr.mxu0 0.0
    %1157 = vmatpush1.msra.mxu0 0.0
    %1158 = vmatprep.subr.mxu0 0.0
    %1159 = vmatpush1.msra.mxu0 0.0
    %1160 = vmatprep.subr.mxu0 0.0
    %1161 = vmatpush1.msra.mxu0 %v1125
    %1162 = vmatprep.subr.mxu0 0.0
    %1163 = vmatpush2.msra.mxu0 0.0
    %1164 = vmatprep.subr.mxu0 0.0
    %1165 = vmatpush2.msra.mxu0 0.0
    %1166 = vmatprep.subr.mxu0 0.0
    %1167 = vmatpush2.msra.mxu0 0.0
    %1168 = vmatprep.subr.mxu0 0.0
    %1169 = vmatpush2.msra.mxu0 0.0
    %1170 = vmatprep.subr.mxu0 0.0
    %1171 = vmatpush2.msra.mxu0 0.0
    %1172 = vmatprep.subr.mxu0 0.0
    %1173 = vmatpush2.msra.mxu0 0.0
    %1174 = vmatprep.subr.mxu0 0.0
    %1175 = vmatpush2.msra.mxu0 0.0
    %1176 = vmatprep.subr.mxu0 0.0
    %1177 = vmatpush2.msra.mxu0 0.0
    %1178 = vmatprep.subr.mxu0 0.0
    %1179 = vmatpush2.msra.mxu0 0.0
    %1180 = vmatprep.subr.mxu0 0.0
    %1181 = vmatpush2.msra.mxu0 0.0
    %1182 = vmatprep.subr.mxu0 0.0
    %1183 = vmatpush2.msra.mxu0 0.0
    %1184 = vmatprep.subr.mxu0 0.0
    %1185 = vmatpush2.msra.mxu0 0.0
    %1186 = vmatprep.subr.mxu0 0.0
    %1187 = vmatpush2.msra.mxu0 0.0
    %1188 = vmatprep.subr.mxu0 0.0
    %1189 = vmatpush2.msra.mxu0 0.0
    %1190 = vmatprep.subr.mxu0 0.0
    %1191 = vmatpush2.msra.mxu0 0.0
    %1192 = vmatprep.subr.mxu0 0.0
    %1193 = vmatpush2.msra.mxu0 0.0
    %1194 = vmatprep.mubr.f32.mxu0 0.0
    %1195 = vmatmul.mubr.f32.gmra.mxu0 %v1128
    %v1196 = vpop.f32.mrf.mxu0
    %v1197 = vadd.f32 0.0, %v1196
    %v1198 = vpop.f32.mrf.mxu0
    %1199 = vdwg.mxu0
    %1200 = vrot.lane.b32.xlu0 %v171, 112
    %v1201 = vpop.permute.xlu0 %1200
    %1202 = vrot.lane.b32.xlu0 %v171, 80
    %v1203 = vpop.permute.xlu0 %1202
    %v1204 = vsel %vm177, %v1201, 0
    %v1206 = vsel %vm177, %v1203, 0
    %1208 = vmatprep.subr.mxu0 0.0
    %1209 = vmatpush1.xpose.msra.mxu0 0.0
    %1210 = vmatprep.subr.mxu0 0.0
    %1211 = vmatpush1.xpose.msra.mxu0 0.0
    %1212 = vmatprep.subr.mxu0 0.0
    %1213 = vmatpush1.xpose.msra.mxu0 0.0
    %1214 = vmatprep.subr.mxu0 0.0
    %1215 = vmatpush1.xpose.msra.mxu0 0.0
    %1216 = vmatprep.subr.mxu0 0.0
    %1217 = vmatpush1.xpose.msra.mxu0 0.0
    %1218 = vmatprep.subr.mxu0 0.0
    %1219 = vmatpush1.xpose.msra.mxu0 0.0
    %1220 = vmatprep.subr.mxu0 0.0
    %1221 = vmatpush1.xpose.msra.mxu0 0.0
    %1222 = vmatprep.subr.mxu0 0.0
    %1223 = vmatpush1.xpose.msra.mxu0 0.0
    %1224 = vmatprep.subr.mxu0 0.0
    %1225 = vmatpush1.xpose.msra.mxu0 0.0
    %1226 = vmatprep.subr.mxu0 0.0
    %1227 = vmatpush1.xpose.msra.mxu0 0.0
    %1228 = vmatprep.subr.mxu0 0.0
    %1229 = vmatpush1.xpose.msra.mxu0 0.0
    %1230 = vmatprep.subr.mxu0 0.0
    %1231 = vmatpush1.xpose.msra.mxu0 0.0
    %1232 = vmatprep.subr.mxu0 0.0
    %1233 = vmatpush1.xpose.msra.mxu0 0.0
    %1234 = vmatprep.subr.mxu0 0.0
    %1235 = vmatpush1.xpose.msra.mxu0 0.0
    %1236 = vmatprep.subr.mxu0 0.0
    %1237 = vmatpush1.xpose.msra.mxu0 0.0
    %1238 = vmatprep.subr.mxu0 0.0
    %1239 = vmatpush1.xpose.msra.mxu0 %v1206
    %1240 = vmatprep.subr.mxu0 0.0
    %1241 = vmatpush2.xpose.msra.mxu0 0.0
    %1242 = vmatprep.subr.mxu0 0.0
    %1243 = vmatpush2.xpose.msra.mxu0 0.0
    %1244 = vmatprep.subr.mxu0 0.0
    %1245 = vmatpush2.xpose.msra.mxu0 0.0
    %1246 = vmatprep.subr.mxu0 0.0
    %1247 = vmatpush2.xpose.msra.mxu0 0.0
    %1248 = vmatprep.subr.mxu0 0.0
    %1249 = vmatpush2.xpose.msra.mxu0 0.0
    %1250 = vmatprep.subr.mxu0 0.0
    %1251 = vmatpush2.xpose.msra.mxu0 0.0
    %1252 = vmatprep.subr.mxu0 0.0
    %1253 = vmatpush2.xpose.msra.mxu0 0.0
    %1254 = vmatprep.subr.mxu0 0.0
    %1255 = vmatpush2.xpose.msra.mxu0 0.0
    %1256 = vmatprep.subr.mxu0 0.0
    %1257 = vmatpush2.xpose.msra.mxu0 0.0
    %1258 = vmatprep.subr.mxu0 0.0
    %1259 = vmatpush2.xpose.msra.mxu0 0.0
    %1260 = vmatprep.subr.mxu0 0.0
    %1261 = vmatpush2.xpose.msra.mxu0 0.0
    %1262 = vmatprep.subr.mxu0 0.0
    %1263 = vmatpush2.xpose.msra.mxu0 0.0
    %1264 = vmatprep.subr.mxu0 0.0
    %1265 = vmatpush2.xpose.msra.mxu0 0.0
    %1266 = vmatprep.subr.mxu0 0.0
    %1267 = vmatpush2.xpose.msra.mxu0 0.0
    %1268 = vmatprep.subr.mxu0 0.0
    %1269 = vmatpush2.xpose.msra.mxu0 0.0
    %1270 = vmatprep.subr.mxu0 0.0
    %1271 = vmatpush2.xpose.msra.mxu0 0.0
    %1272 = vmatprep.mubr.f32.mxu0 0.0
    %1273 = vmatmul.mubr.f32.gmra.mxu0 %v1204
    %v1274 = vpop.f32.mrf.mxu0
    %v1275 = vadd.f32 0.0, %v1274
    %v1276 = vpop.f32.mrf.mxu0
    %1277 = vdwg.mxu0
    %v1278 = vmul.f32 %v1275, 0.35355338
    %v1279 = vadd.f32 %v1278, %v944
    %v1280 = vsel %vm177, %v1279, -inf
    %1281 = vmax.xlane.f32.xlu0 %v1280
    %v1282 = vpop.xlane.xlu0 %1281
    %v1283 = vsub.f32 %v1279, %v1282
    %v1284 = vmul.f32 %v1283, 1.442695
    %v1285 = vpow.pop %v1284
    %v1286 = vsel %vm177, %v1285, 0.0
    %1287 = vadd.xlane.f32.xlu0 %v1286
    %v1288 = vpop.xlane.xlu0 %1287
    %v1289 = vrcp.pop %v1288
    %v1290 = vmul.f32 %v1285, %v1289
    %1291 = vrot.lane.b32.xlu0 %v171, 48
    %v1292 = vpop.permute.xlu0 %1291
    %v1295 = vsel %vm177, %v1290, 0
    %1297 = vmatprep.subr.mxu0 0.0
    %1298 = vmatpush1.msra.mxu0 0.0
    %1299 = vmatprep.subr.mxu0 0.0
    %1300 = vmatpush1.msra.mxu0 0.0
    %1301 = vmatprep.subr.mxu0 0.0
    %1302 = vmatpush1.msra.mxu0 0.0
    %1303 = vmatprep.subr.mxu0 0.0
    %1304 = vmatpush1.msra.mxu0 0.0
    %1305 = vmatprep.subr.mxu0 0.0
    %1306 = vmatpush1.msra.mxu0 0.0
    %1307 = vmatprep.subr.mxu0 0.0
    %1308 = vmatpush1.msra.mxu0 0.0
    %1309 = vmatprep.subr.mxu0 0.0
    %1310 = vmatpush1.msra.mxu0 0.0
    %1311 = vmatprep.subr.mxu0 0.0
    %1312 = vmatpush1.msra.mxu0 0.0
    %1313 = vmatprep.subr.mxu0 0.0
    %1314 = vmatpush1.msra.mxu0 0.0
    %1315 = vmatprep.subr.mxu0 0.0
    %1316 = vmatpush1.msra.mxu0 0.0
    %1317 = vmatprep.subr.mxu0 0.0
    %1318 = vmatpush1.msra.mxu0 0.0
    %1319 = vmatprep.subr.mxu0 0.0
    %1320 = vmatpush1.msra.mxu0 0.0
    %1321 = vmatprep.subr.mxu0 0.0
    %1322 = vmatpush1.msra.mxu0 0.0
    %1323 = vmatprep.subr.mxu0 0.0
    %1324 = vmatpush1.msra.mxu0 0.0
    %1325 = vmatprep.subr.mxu0 0.0
    %1326 = vmatpush1.msra.mxu0 0.0
    %1327 = vmatprep.subr.mxu0 0.0
    %1328 = vmatpush1.msra.mxu0 %v1292
    %1329 = vmatprep.subr.mxu0 0.0
    %1330 = vmatpush2.msra.mxu0 0.0
    %1331 = vmatprep.subr.mxu0 0.0
    %1332 = vmatpush2.msra.mxu0 0.0
    %1333 = vmatprep.subr.mxu0 0.0
    %1334 = vmatpush2.msra.mxu0 0.0
    %1335 = vmatprep.subr.mxu0 0.0
    %1336 = vmatpush2.msra.mxu0 0.0
    %1337 = vmatprep.subr.mxu0 0.0
    %1338 = vmatpush2.msra.mxu0 0.0
    %1339 = vmatprep.subr.mxu0 0.0
    %1340 = vmatpush2.msra.mxu0 0.0
    %1341 = vmatprep.subr.mxu0 0.0
    %1342 = vmatpush2.msra.mxu0 0.0
    %1343 = vmatprep.subr.mxu0 0.0
    %1344 = vmatpush2.msra.mxu0 0.0
    %1345 = vmatprep.subr.mxu0 0.0
    %1346 = vmatpush2.msra.mxu0 0.0
    %1347 = vmatprep.subr.mxu0 0.0
    %1348 = vmatpush2.msra.mxu0 0.0
    %1349 = vmatprep.subr.mxu0 0.0
    %1350 = vmatpush2.msra.mxu0 0.0
    %1351 = vmatprep.subr.mxu0 0.0
    %1352 = vmatpush2.msra.mxu0 0.0
    %1353 = vmatprep.subr.mxu0 0.0
    %1354 = vmatpush2.msra.mxu0 0.0
    %1355 = vmatprep.subr.mxu0 0.0
    %1356 = vmatpush2.msra.mxu0 0.0
    %1357 = vmatprep.subr.mxu0 0.0
    %1358 = vmatpush2.msra.mxu0 0.0
    %1359 = vmatprep.subr.mxu0 0.0
    %1360 = vmatpush2.msra.mxu0 0.0
    %1361 = vmatprep.mubr.f32.mxu0 0.0
    %1362 = vmatmul.mubr.f32.gmra.mxu0 %v1295
    %v1363 = vpop.f32.mrf.mxu0
    %v1364 = vadd.f32 0.0, %v1363
    %v1365 = vpop.f32.mrf.mxu0
    %1366 = vdwg.mxu0
    %1367 = vrot.lane.b32.xlu0 %v171, 104
    %v1368 = vpop.permute.xlu0 %1367
    %1369 = vrot.lane.b32.xlu0 %v171, 72
    %v1370 = vpop.permute.xlu0 %1369
    %v1371 = vsel %vm177, %v1368, 0
    %v1373 = vsel %vm177, %v1370, 0
    %1375 = vmatprep.subr.mxu0 0.0
    %1376 = vmatpush1.xpose.msra.mxu0 0.0
    %1377 = vmatprep.subr.mxu0 0.0
    %1378 = vmatpush1.xpose.msra.mxu0 0.0
    %1379 = vmatprep.subr.mxu0 0.0
    %1380 = vmatpush1.xpose.msra.mxu0 0.0
    %1381 = vmatprep.subr.mxu0 0.0
    %1382 = vmatpush1.xpose.msra.mxu0 0.0
    %1383 = vmatprep.subr.mxu0 0.0
    %1384 = vmatpush1.xpose.msra.mxu0 0.0
    %1385 = vmatprep.subr.mxu0 0.0
    %1386 = vmatpush1.xpose.msra.mxu0 0.0
    %1387 = vmatprep.subr.mxu0 0.0
    %1388 = vmatpush1.xpose.msra.mxu0 0.0
    %1389 = vmatprep.subr.mxu0 0.0
    %1390 = vmatpush1.xpose.msra.mxu0 0.0
    %1391 = vmatprep.subr.mxu0 0.0
    %1392 = vmatpush1.xpose.msra.mxu0 0.0
    %1393 = vmatprep.subr.mxu0 0.0
    %1394 = vmatpush1.xpose.msra.mxu0 0.0
    %1395 = vmatprep.subr.mxu0 0.0
    %1396 = vmatpush1.xpose.msra.mxu0 0.0
    %1397 = vmatprep.subr.mxu0 0.0
    %1398 = vmatpush1.xpose.msra.mxu0 0.0
    %1399 = vmatprep.subr.mxu0 0.0
    %1400 = vmatpush1.xpose.msra.mxu0 0.0
    %1401 = vmatprep.subr.mxu0 0.0
    %1402 = vmatpush1.xpose.msra.mxu0 0.0
    %1403 = vmatprep.subr.mxu0 0.0
    %1404 = vmatpush1.xpose.msra.mxu0 0.0
    %1405 = vmatprep.subr.mxu0 0.0
    %1406 = vmatpush1.xpose.msra.mxu0 %v1373
    %1407 = vmatprep.subr.mxu0 0.0
    %1408 = vmatpush2.xpose.msra.mxu0 0.0
    %1409 = vmatprep.subr.mxu0 0.0
    %1410 = vmatpush2.xpose.msra.mxu0 0.0
    %1411 = vmatprep.subr.mxu0 0.0
    %1412 = vmatpush2.xpose.msra.mxu0 0.0
    %1413 = vmatprep.subr.mxu0 0.0
    %1414 = vmatpush2.xpose.msra.mxu0 0.0
    %1415 = vmatprep.subr.mxu0 0.0
    %1416 = vmatpush2.xpose.msra.mxu0 0.0
    %1417 = vmatprep.subr.mxu0 0.0
    %1418 = vmatpush2.xpose.msra.mxu0 0.0
    %1419 = vmatprep.subr.mxu0 0.0
    %1420 = vmatpush2.xpose.msra.mxu0 0.0
    %1421 = vmatprep.subr.mxu0 0.0
    %1422 = vmatpush2.xpose.msra.mxu0 0.0
    %1423 = vmatprep.subr.mxu0 0.0
    %1424 = vmatpush2.xpose.msra.mxu0 0.0
    %1425 = vmatprep.subr.mxu0 0.0
    %1426 = vmatpush2.xpose.msra.mxu0 0.0
    %1427 = vmatprep.subr.mxu0 0.0
    %1428 = vmatpush2.xpose.msra.mxu0 0.0
    %1429 = vmatprep.subr.mxu0 0.0
    %1430 = vmatpush2.xpose.msra.mxu0 0.0
    %1431 = vmatprep.subr.mxu0 0.0
    %1432 = vmatpush2.xpose.msra.mxu0 0.0
    %1433 = vmatprep.subr.mxu0 0.0
    %1434 = vmatpush2.xpose.msra.mxu0 0.0
    %1435 = vmatprep.subr.mxu0 0.0
    %1436 = vmatpush2.xpose.msra.mxu0 0.0
    %1437 = vmatprep.subr.mxu0 0.0
    %1438 = vmatpush2.xpose.msra.mxu0 0.0
    %1439 = vmatprep.mubr.f32.mxu0 0.0
    %1440 = vmatmul.mubr.f32.gmra.mxu0 %v1371
    %v1441 = vpop.f32.mrf.mxu0
    %v1442 = vadd.f32 0.0, %v1441
    %v1443 = vpop.f32.mrf.mxu0
    %1444 = vdwg.mxu0
    %v1445 = vmul.f32 %v1442, 0.35355338
    %v1446 = vadd.f32 %v1445, %v944
    %v1447 = vsel %vm177, %v1446, -inf
    %1448 = vmax.xlane.f32.xlu0 %v1447
    %v1449 = vpop.xlane.xlu0 %1448
    %v1450 = vsub.f32 %v1446, %v1449
    %v1451 = vmul.f32 %v1450, 1.442695
    %v1452 = vpow.pop %v1451
    %v1453 = vsel %vm177, %v1452, 0.0
    %1454 = vadd.xlane.f32.xlu0 %v1453
    %v1455 = vpop.xlane.xlu0 %1454
    %v1456 = vrcp.pop %v1455
    %v1457 = vmul.f32 %v1452, %v1456
    %1458 = vrot.lane.b32.xlu0 %v171, 40
    %v1459 = vpop.permute.xlu0 %1458
    %v1462 = vsel %vm177, %v1457, 0
    %1464 = vmatprep.subr.mxu0 0.0
    %1465 = vmatpush1.msra.mxu0 0.0
    %1466 = vmatprep.subr.mxu0 0.0
    %1467 = vmatpush1.msra.mxu0 0.0
    %1468 = vmatprep.subr.mxu0 0.0
    %1469 = vmatpush1.msra.mxu0 0.0
    %1470 = vmatprep.subr.mxu0 0.0
    %1471 = vmatpush1.msra.mxu0 0.0
    %1472 = vmatprep.subr.mxu0 0.0
    %1473 = vmatpush1.msra.mxu0 0.0
    %1474 = vmatprep.subr.mxu0 0.0
    %1475 = vmatpush1.msra.mxu0 0.0
    %1476 = vmatprep.subr.mxu0 0.0
    %1477 = vmatpush1.msra.mxu0 0.0
    %1478 = vmatprep.subr.mxu0 0.0
    %1479 = vmatpush1.msra.mxu0 0.0
    %1480 = vmatprep.subr.mxu0 0.0
    %1481 = vmatpush1.msra.mxu0 0.0
    %1482 = vmatprep.subr.mxu0 0.0
    %1483 = vmatpush1.msra.mxu0 0.0
    %1484 = vmatprep.subr.mxu0 0.0
    %1485 = vmatpush1.msra.mxu0 0.0
    %1486 = vmatprep.subr.mxu0 0.0
    %1487 = vmatpush1.msra.mxu0 0.0
    %1488 = vmatprep.subr.mxu0 0.0
    %1489 = vmatpush1.msra.mxu0 0.0
    %1490 = vmatprep.subr.mxu0 0.0
    %1491 = vmatpush1.msra.mxu0 0.0
    %1492 = vmatprep.subr.mxu0 0.0
    %1493 = vmatpush1.msra.mxu0 0.0
    %1494 = vmatprep.subr.mxu0 0.0
    %1495 = vmatpush1.msra.mxu0 %v1459
    %1496 = vmatprep.subr.mxu0 0.0
    %1497 = vmatpush2.msra.mxu0 0.0
    %1498 = vmatprep.subr.mxu0 0.0
    %1499 = vmatpush2.msra.mxu0 0.0
    %1500 = vmatprep.subr.mxu0 0.0
    %1501 = vmatpush2.msra.mxu0 0.0
    %1502 = vmatprep.subr.mxu0 0.0
    %1503 = vmatpush2.msra.mxu0 0.0
    %1504 = vmatprep.subr.mxu0 0.0
    %1505 = vmatpush2.msra.mxu0 0.0
    %1506 = vmatprep.subr.mxu0 0.0
    %1507 = vmatpush2.msra.mxu0 0.0
    %1508 = vmatprep.subr.mxu0 0.0
    %1509 = vmatpush2.msra.mxu0 0.0
    %1510 = vmatprep.subr.mxu0 0.0
    %1511 = vmatpush2.msra.mxu0 0.0
    %1512 = vmatprep.subr.mxu0 0.0
    %1513 = vmatpush2.msra.mxu0 0.0
    %1514 = vmatprep.subr.mxu0 0.0
    %1515 = vmatpush2.msra.mxu0 0.0
    %1516 = vmatprep.subr.mxu0 0.0
    %1517 = vmatpush2.msra.mxu0 0.0
    %1518 = vmatprep.subr.mxu0 0.0
    %1519 = vmatpush2.msra.mxu0 0.0
    %1520 = vmatprep.subr.mxu0 0.0
    %1521 = vmatpush2.msra.mxu0 0.0
    %1522 = vmatprep.subr.mxu0 0.0
    %1523 = vmatpush2.msra.mxu0 0.0
    %1524 = vmatprep.subr.mxu0 0.0
    %1525 = vmatpush2.msra.mxu0 0.0
    %1526 = vmatprep.subr.mxu0 0.0
    %1527 = vmatpush2.msra.mxu0 0.0
    %1528 = vmatprep.mubr.f32.mxu0 0.0
    %1529 = vmatmul.mubr.f32.gmra.mxu0 %v1462
    %v1530 = vpop.f32.mrf.mxu0
    %v1531 = vadd.f32 0.0, %v1530
    %v1532 = vpop.f32.mrf.mxu0
    %1533 = vdwg.mxu0
    %1535 = vrot.lane.b32.xlu0 %v1197, 8
    %v1536 = vpop.permute.xlu0 %1535
    %1539 = vrot.lane.b32.xlu0 %v1364, 16
    %v1540 = vpop.permute.xlu0 %1539
    %1543 = vrot.lane.b32.xlu0 %v1531, 24
    %v1544 = vpop.permute.xlu0 %1543
    %v1546 = vsel %vm177, %v1030, %v1536
    %v1547 = vsel %vm859, %v1546, %v1540
    %v1548 = vsel %vm861, %v1547, %v1544
    %v1549 = vld [vmem:[%s6] sm:$0xf]
    %v1550 = vld [vmem:[%s6 + $0x4] sm:$0xf]
    %v1551 = vld [vmem:[%s6 + $0x8] sm:$0xf]
    %v1552 = vld [vmem:[%s6 + $0xc] sm:$0xf]
    %v1553 = vpack.c.bf16 %v1548, %v862
    %v1554 = vld [vmem:[%s7] sm:$0x1]
    %v1556 = vlaneseq
    %v1557 = vshrl.u32 %v1556, 7
    %v1558 = vsub.s32 0, %v1557
    %v1559 = vrot.slane %v1554, %v1558
    %v1565 = vunpack.c.l.b16 %v1549
    %v1566 = vunpack.c.l.b16 %v1550
    %v1567 = vunpack.c.l.b16 %v1551
    %v1568 = vunpack.c.l.b16 %v1552
    %v1569 = vpack.c.b16 %v1566, %v1565
    %v1570 = vpack.c.b16 %v1568, %v1567
    %v1574 = vsel %vm59, %v1553, 0
    %1576 = vmatprep.subr.bf16.mxu0 0
    %1577 = vmatpush1.bf16.msra.mxu0 0
    %1578 = vmatprep.subr.bf16.mxu0 0
    %1579 = vmatpush1.bf16.msra.mxu0 0
    %1580 = vmatprep.subr.bf16.mxu0 0
    %1581 = vmatpush1.bf16.msra.mxu0 0
    %1582 = vmatprep.subr.bf16.mxu0 0
    %1583 = vmatpush1.bf16.msra.mxu0 0
    %1584 = vmatprep.subr.bf16.mxu0 0
    %1585 = vmatpush1.bf16.msra.mxu0 0
    %1586 = vmatprep.subr.bf16.mxu0 0
    %1587 = vmatpush1.bf16.msra.mxu0 0
    %1588 = vmatprep.subr.bf16.mxu0 0
    %1589 = vmatpush1.bf16.msra.mxu0 %v1570
    %1590 = vmatprep.subr.bf16.mxu0 0
    %1591 = vmatpush1.bf16.msra.mxu0 %v1569
    %1592 = vmatprep.subr.bf16.mxu0 0
    %1593 = vmatpush2.bf16.msra.mxu0 0
    %1594 = vmatprep.subr.bf16.mxu0 0
    %1595 = vmatpush2.bf16.msra.mxu0 0
    %1596 = vmatprep.subr.bf16.mxu0 0
    %1597 = vmatpush2.bf16.msra.mxu0 0
    %1598 = vmatprep.subr.bf16.mxu0 0
    %1599 = vmatpush2.bf16.msra.mxu0 0
    %1600 = vmatprep.subr.bf16.mxu0 0
    %1601 = vmatpush2.bf16.msra.mxu0 0
    %1602 = vmatprep.subr.bf16.mxu0 0
    %1603 = vmatpush2.bf16.msra.mxu0 0
    %1604 = vmatprep.subr.bf16.mxu0 0
    %1605 = vmatpush2.bf16.msra.mxu0 0
    %1606 = vmatprep.subr.bf16.mxu0 0
    %1607 = vmatpush2.bf16.msra.mxu0 0
    %1608 = vmatprep.mubr.bf16.mxu0 0
    %1609 = vmatmul.mubr.bf16.gmra.mxu0 %v1574
    %v1610 = vpop.f32.mrf.mxu0
    %v1611 = vadd.f32 %v1559, %v1610
    %v1612 = vpop.f32.mrf.mxu0
    %v1613 = vpop.f32.mrf.mxu0
    %v1614 = vadd.f32 %v1559, %v1613
    %v1615 = vpop.f32.mrf.mxu0
    %1616 = vdwg.mxu0
    %v1617 = vadd.f32 %v1611, %v101
    %v1618 = vadd.f32 %v1614, %v102
    %v1619 = vld [vmem:[%s8] sm:$0x1]
    %v1620 = vld [vmem:[%s9] sm:$0x1]
    %v1621 = vsel %vm59, %v1617, 0.0
    %1622 = vadd.xlane.f32.xlu0 %v1621
    %v1623 = vpop.xlane.xlu0 %1622
    %v1624 = vsel %vm59, %v1618, 0.0
    %1625 = vadd.xlane.f32.xlu0 %v1624
    %v1626 = vpop.xlane.xlu0 %1625
    %v1627 = vmul.f32 %v1623, %v66
    %v1628 = vmul.f32 %v1626, %v66
    %v1629 = vsub.f32 %v1617, %v1627
    %v1630 = vsub.f32 %v1618, %v1628
    %v1631 = vmul.f32 %v1629, %v1629
    %v1632 = vmul.f32 %v1630, %v1630
    %v1633 = vsel %vm59, %v1631, 0.0
    %1634 = vadd.xlane.f32.xlu0 %v1633
    %v1635 = vpop.xlane.xlu0 %1634
    %v1636 = vsel %vm59, %v1632, 0.0
    %1637 = vadd.xlane.f32.xlu0 %v1636
    %v1638 = vpop.xlane.xlu0 %1637
    %v1639 = vmul.f32 %v1635, %v66
    %v1640 = vmul.f32 %v1638, %v66
    %v1641 = vadd.f32 %v1639, 1e-12
    %v1642 = vadd.f32 %v1640, 1e-12
    %v1643 = vrsqrt.pop %v1641
    %v1644 = vrsqrt.pop %v1642
    %v1645 = vmul.f32 %v1629, %v1643
    %v1646 = vmul.f32 %v1630, %v1644
    %v1648 = vlaneseq
    %v1649 = vshrl.u32 %v1648, 7
    %v1650 = vsub.s32 0, %v1649
    %v1651 = vrot.slane %v1619, %v1650
    %v1653 = vmul.f32 %v1645, %v1651
    %v1654 = vmul.f32 %v1646, %v1651
    %v1656 = vlaneseq
    %v1657 = vshrl.u32 %v1656, 7
    %v1658 = vsub.s32 0, %v1657
    %v1659 = vrot.slane %v1620, %v1658
    %v1661 = vadd.f32 %v1653, %v1659
    %v1662 = vadd.f32 %v1654, %v1659
    %v1663 = vld [vmem:[%s10] sm:$0xf]
    %v1664 = vld [vmem:[%s10 + $0x4] sm:$0xf]
    %v1665 = vld [vmem:[%s10 + $0x8] sm:$0xf]
    %v1666 = vld [vmem:[%s10 + $0xc] sm:$0xf]
    %v1667 = vpack.c.bf16 %v1662, %v1661
    %v1668 = vld [vmem:[%s11] sm:$0x1]
    %v1670 = vlaneseq
    %v1671 = vshrl.u32 %v1670, 7
    %v1672 = vsub.s32 0, %v1671
    %v1673 = vrot.slane %v1668, %v1672
    %v1679 = vunpack.c.l.b16 %v1663
    %v1680 = vunpack.c.l.b16 %v1664
    %v1681 = vunpack.c.l.b16 %v1665
    %v1682 = vunpack.c.l.b16 %v1666
    %v1683 = vpack.c.b16 %v1680, %v1679
    %v1684 = vpack.c.b16 %v1682, %v1681
    %v1688 = vsel %vm59, %v1667, 0
    %1690 = vmatprep.subr.bf16.mxu0 0
    %1691 = vmatpush1.bf16.msra.mxu0 0
    %1692 = vmatprep.subr.bf16.mxu0 0
    %1693 = vmatpush1.bf16.msra.mxu0 0
    %1694 = vmatprep.subr.bf16.mxu0 0
    %1695 = vmatpush1.bf16.msra.mxu0 0
    %1696 = vmatprep.subr.bf16.mxu0 0
    %1697 = vmatpush1.bf16.msra.mxu0 0
    %1698 = vmatprep.subr.bf16.mxu0 0
    %1699 = vmatpush1.bf16.msra.mxu0 0
    %1700 = vmatprep.subr.bf16.mxu0 0
    %1701 = vmatpush1.bf16.msra.mxu0 0
    %1702 = vmatprep.subr.bf16.mxu0 0
    %1703 = vmatpush1.bf16.msra.mxu0 %v1684
    %1704 = vmatprep.subr.bf16.mxu0 0
    %1705 = vmatpush1.bf16.msra.mxu0 %v1683
    %1706 = vmatprep.subr.bf16.mxu0 0
    %1707 = vmatpush2.bf16.msra.mxu0 0
    %1708 = vmatprep.subr.bf16.mxu0 0
    %1709 = vmatpush2.bf16.msra.mxu0 0
    %1710 = vmatprep.subr.bf16.mxu0 0
    %1711 = vmatpush2.bf16.msra.mxu0 0
    %1712 = vmatprep.subr.bf16.mxu0 0
    %1713 = vmatpush2.bf16.msra.mxu0 0
    %1714 = vmatprep.subr.bf16.mxu0 0
    %1715 = vmatpush2.bf16.msra.mxu0 0
    %1716 = vmatprep.subr.bf16.mxu0 0
    %1717 = vmatpush2.bf16.msra.mxu0 0
    %1718 = vmatprep.subr.bf16.mxu0 0
    %1719 = vmatpush2.bf16.msra.mxu0 0
    %1720 = vmatprep.subr.bf16.mxu0 0
    %1721 = vmatpush2.bf16.msra.mxu0 0
    %1722 = vmatprep.mubr.bf16.mxu0 0
    %1723 = vmatmul.mubr.bf16.gmra.mxu0 %v1688
    %v1724 = vpop.f32.mrf.mxu0
    %v1725 = vadd.f32 %v1673, %v1724
    %v1726 = vpop.f32.mrf.mxu0
    %v1727 = vpop.f32.mrf.mxu0
    %v1728 = vadd.f32 %v1673, %v1727
    %v1729 = vpop.f32.mrf.mxu0
    %1730 = vdwg.mxu0
    %v1731 = vmul.f32 %v1725, 0.5
    %v1732 = vmul.f32 %v1728, 0.5
    %v1733 = vmul.f32 %v1725, 0.70710677
    %v1734 = vmul.f32 %v1728, 0.70710677
    %v1735 = verf.f32.pop %v1733
    %v1736 = verf.f32.pop %v1734
    %v1737 = vadd.f32 %v1735, 1.0
    %v1738 = vadd.f32 %v1736, 1.0
    %v1739 = vmul.f32 %v1731, %v1737
    %v1740 = vmul.f32 %v1732, %v1738
    %v1741 = vld [vmem:[%s12] sm:$0xf]
    %v1742 = vld [vmem:[%s12 + $0x4] sm:$0xf]
    %v1743 = vld [vmem:[%s12 + $0x8] sm:$0xf]
    %v1744 = vld [vmem:[%s12 + $0xc] sm:$0xf]
    %v1745 = vld [vmem:[%s12 + $0x10] sm:$0xf]
    %v1746 = vld [vmem:[%s12 + $0x14] sm:$0xf]
    %v1747 = vld [vmem:[%s12 + $0x18] sm:$0xf]
    %v1748 = vld [vmem:[%s12 + $0x1c] sm:$0xf]
    %v1749 = vpack.c.bf16 %v1740, %v1739
    %v1750 = vld [vmem:[%s13] sm:$0x1]
    %v1752 = vlaneseq
    %v1753 = vshrl.u32 %v1752, 7
    %v1754 = vsub.s32 0, %v1753
    %v1755 = vrot.slane %v1750, %v1754
    %v1765 = vunpack.c.l.b16 %v1741
    %v1766 = vunpack.c.l.b16 %v1742
    %v1767 = vunpack.c.l.b16 %v1743
    %v1768 = vunpack.c.l.b16 %v1744
    %v1769 = vunpack.c.l.b16 %v1745
    %v1770 = vunpack.c.l.b16 %v1746
    %v1771 = vunpack.c.l.b16 %v1747
    %v1772 = vunpack.c.l.b16 %v1748
    %v1773 = vpack.c.b16 %v1766, %v1765
    %v1774 = vpack.c.b16 %v1768, %v1767
    %v1775 = vpack.c.b16 %v1770, %v1769
    %v1776 = vpack.c.b16 %v1772, %v1771
    %vm1781 = vcmask 523264
    %v1783 = vsel %vm1781, %v1749, 0
    %1785 = vmatprep.subr.bf16.mxu0 0
    %1786 = vmatpush1.bf16.msra.mxu0 0
    %1787 = vmatprep.subr.bf16.mxu0 0
    %1788 = vmatpush1.bf16.msra.mxu0 0
    %1789 = vmatprep.subr.bf16.mxu0 0
    %1790 = vmatpush1.bf16.msra.mxu0 0
    %1791 = vmatprep.subr.bf16.mxu0 0
    %1792 = vmatpush1.bf16.msra.mxu0 0
    %1793 = vmatprep.subr.bf16.mxu0 0
    %1794 = vmatpush1.bf16.msra.mxu0 %v1776
    %1795 = vmatprep.subr.bf16.mxu0 0
    %1796 = vmatpush1.bf16.msra.mxu0 %v1775
    %1797 = vmatprep.subr.bf16.mxu0 0
    %1798 = vmatpush1.bf16.msra.mxu0 %v1774
    %1799 = vmatprep.subr.bf16.mxu0 0
    %1800 = vmatpush1.bf16.msra.mxu0 %v1773
    %1801 = vmatprep.subr.bf16.mxu0 0
    %1802 = vmatpush2.bf16.msra.mxu0 0
    %1803 = vmatprep.subr.bf16.mxu0 0
    %1804 = vmatpush2.bf16.msra.mxu0 0
    %1805 = vmatprep.subr.bf16.mxu0 0
    %1806 = vmatpush2.bf16.msra.mxu0 0
    %1807 = vmatprep.subr.bf16.mxu0 0
    %1808 = vmatpush2.bf16.msra.mxu0 0
    %1809 = vmatprep.subr.bf16.mxu0 0
    %1810 = vmatpush2.bf16.msra.mxu0 0
    %1811 = vmatprep.subr.bf16.mxu0 0
    %1812 = vmatpush2.bf16.msra.mxu0 0
    %1813 = vmatprep.subr.bf16.mxu0 0
    %1814 = vmatpush2.bf16.msra.mxu0 0
    %1815 = vmatprep.subr.bf16.mxu0 0
    %1816 = vmatpush2.bf16.msra.mxu0 0
    %1817 = vmatprep.mubr.bf16.mxu0 0
    %1818 = vmatmul.mubr.bf16.gmra.mxu0 %v1783
    %v1819 = vpop.f32.mrf.mxu0
    %v1820 = vadd.f32 %v1755, %v1819
    %v1821 = vpop.f32.mrf.mxu0
    %v1822 = vpop.f32.mrf.mxu0
    %v1823 = vadd.f32 %v1755, %v1822
    %v1824 = vpop.f32.mrf.mxu0
    %1825 = vdwg.mxu0
    %v1826 = vadd.f32 %v1820, %v1661
    %v1827 = vadd.f32 %v1823, %v1662
    %v1828 = vld [vmem:[%s14] sm:$0x1]
    %v1829 = vld [vmem:[%s15] sm:$0x1]
    %v1830 = vsel %vm59, %v1826, 0.0
    %1831 = vadd.xlane.f32.xlu0 %v1830
    %v1832 = vpop.xlane.xlu0 %1831
    %v1833 = vsel %vm59, %v1827, 0.0
    %1834 = vadd.xlane.f32.xlu0 %v1833
    %v1835 = vpop.xlane.xlu0 %1834
    %v1836 = vmul.f32 %v1832, %v66
    %v1837 = vmul.f32 %v1835, %v66
    %v1838 = vsub.f32 %v1826, %v1836
    %v1839 = vsub.f32 %v1827, %v1837
    %v1840 = vmul.f32 %v1838, %v1838
    %v1841 = vmul.f32 %v1839, %v1839
    %v1842 = vsel %vm59, %v1840, 0.0
    %1843 = vadd.xlane.f32.xlu0 %v1842
    %v1844 = vpop.xlane.xlu0 %1843
    %v1845 = vsel %vm59, %v1841, 0.0
    %1846 = vadd.xlane.f32.xlu0 %v1845
    %v1847 = vpop.xlane.xlu0 %1846
    %v1848 = vmul.f32 %v1844, %v66
    %v1849 = vmul.f32 %v1847, %v66
    %v1850 = vadd.f32 %v1848, 1e-12
    %v1851 = vadd.f32 %v1849, 1e-12
    %v1852 = vrsqrt.pop %v1850
    %v1853 = vrsqrt.pop %v1851
    %v1854 = vmul.f32 %v1838, %v1852
    %v1855 = vmul.f32 %v1839, %v1853
    %v1857 = vlaneseq
    %v1858 = vshrl.u32 %v1857, 7
    %v1859 = vsub.s32 0, %v1858
    %v1860 = vrot.slane %v1828, %v1859
    %v1862 = vmul.f32 %v1854, %v1860
    %v1863 = vmul.f32 %v1855, %v1860
    %v1865 = vlaneseq
    %v1866 = vshrl.u32 %v1865, 7
    %v1867 = vsub.s32 0, %v1866
    %v1868 = vrot.slane %v1829, %v1867
    %v1870 = vadd.f32 %v1862, %v1868
    %v1871 = vadd.f32 %v1863, %v1868
    %s1872 = scalar_lea.vmem %s4, 16
    %v1873 = vld [vmem:[%s1872] sm:$0xf]
    %v1874 = vld [vmem:[%s1872 + $0x4] sm:$0xf]
    %v1875 = vld [vmem:[%s1872 + $0x8] sm:$0xf]
    %v1876 = vld [vmem:[%s1872 + $0xc] sm:$0xf]
    %v1877 = vpack.c.bf16 %v1871, %v1870
    %s1878 = scalar_lea.vmem %s5, 1
    %v1879 = vld [vmem:[%s1878] sm:$0x1]
    %v1881 = vlaneseq
    %v1882 = vshrl.u32 %v1881, 7
    %v1883 = vsub.s32 0, %v1882
    %v1884 = vrot.slane %v1879, %v1883
    %v1890 = vunpack.c.l.b16 %v1873
    %v1891 = vunpack.c.l.b16 %v1874
    %v1892 = vunpack.c.l.b16 %v1875
    %v1893 = vunpack.c.l.b16 %v1876
    %v1894 = vpack.c.b16 %v1891, %v1890
    %v1895 = vpack.c.b16 %v1893, %v1892
    %v1899 = vsel %vm59, %v1877, 0
    %1901 = vmatprep.subr.bf16.mxu0 0
    %1902 = vmatpush1.bf16.msra.mxu0 0
    %1903 = vmatprep.subr.bf16.mxu0 0
    %1904 = vmatpush1.bf16.msra.mxu0 0
    %1905 = vmatprep.subr.bf16.mxu0 0
    %1906 = vmatpush1.bf16.msra.mxu0 0
    %1907 = vmatprep.subr.bf16.mxu0 0
    %1908 = vmatpush1.bf16.msra.mxu0 0
    %1909 = vmatprep.subr.bf16.mxu0 0
    %1910 = vmatpush1.bf16.msra.mxu0 0
    %1911 = vmatprep.subr.bf16.mxu0 0
    %1912 = vmatpush1.bf16.msra.mxu0 0
    %1913 = vmatprep.subr.bf16.mxu0 0
    %1914 = vmatpush1.bf16.msra.mxu0 %v1895
    %1915 = vmatprep.subr.bf16.mxu0 0
    %1916 = vmatpush1.bf16.msra.mxu0 %v1894
    %1917 = vmatprep.subr.bf16.mxu0 0
    %1918 = vmatpush2.bf16.msra.mxu0 0
    %1919 = vmatprep.subr.bf16.mxu0 0
    %1920 = vmatpush2.bf16.msra.mxu0 0
    %1921 = vmatprep.subr.bf16.mxu0 0
    %1922 = vmatpush2.bf16.msra.mxu0 0
    %1923 = vmatprep.subr.bf16.mxu0 0
    %1924 = vmatpush2.bf16.msra.mxu0 0
    %1925 = vmatprep.subr.bf16.mxu0 0
    %1926 = vmatpush2.bf16.msra.mxu0 0
    %1927 = vmatprep.subr.bf16.mxu0 0
    %1928 = vmatpush2.bf16.msra.mxu0 0
    %1929 = vmatprep.subr.bf16.mxu0 0
    %1930 = vmatpush2.bf16.msra.mxu0 0
    %1931 = vmatprep.subr.bf16.mxu0 0
    %1932 = vmatpush2.bf16.msra.mxu0 0
    %1933 = vmatprep.mubr.bf16.mxu0 0
    %1934 = vmatmul.mubr.bf16.gmra.mxu0 %v1899
    %v1935 = vpop.f32.mrf.mxu0
    %v1936 = vadd.f32 %v1884, %v1935
    %v1937 = vpop.f32.mrf.mxu0
    %v1938 = vpop.f32.mrf.mxu0
    %v1939 = vadd.f32 %v1884, %v1938
    %v1940 = vpop.f32.mrf.mxu0
    %1941 = vdwg.mxu0
    %1943 = vrot.lane.b32.xlu0 %v1936, 96
    %v1944 = vpop.permute.xlu0 %1943
    %v1945 = vsel %vm177, %v1936, 0
    %v1947 = vsel %vm177, %v1944, 0
    %1949 = vmatprep.subr.mxu0 0.0
    %1950 = vmatpush1.xpose.msra.mxu0 0.0
    %1951 = vmatprep.subr.mxu0 0.0
    %1952 = vmatpush1.xpose.msra.mxu0 0.0
    %1953 = vmatprep.subr.mxu0 0.0
    %1954 = vmatpush1.xpose.msra.mxu0 0.0
    %1955 = vmatprep.subr.mxu0 0.0
    %1956 = vmatpush1.xpose.msra.mxu0 0.0
    %1957 = vmatprep.subr.mxu0 0.0
    %1958 = vmatpush1.xpose.msra.mxu0 0.0
    %1959 = vmatprep.subr.mxu0 0.0
    %1960 = vmatpush1.xpose.msra.mxu0 0.0
    %1961 = vmatprep.subr.mxu0 0.0
    %1962 = vmatpush1.xpose.msra.mxu0 0.0
    %1963 = vmatprep.subr.mxu0 0.0
    %1964 = vmatpush1.xpose.msra.mxu0 0.0
    %1965 = vmatprep.subr.mxu0 0.0
    %1966 = vmatpush1.xpose.msra.mxu0 0.0
    %1967 = vmatprep.subr.mxu0 0.0
    %1968 = vmatpush1.xpose.msra.mxu0 0.0
    %1969 = vmatprep.subr.mxu0 0.0
    %1970 = vmatpush1.xpose.msra.mxu0 0.0
    %1971 = vmatprep.subr.mxu0 0.0
    %1972 = vmatpush1.xpose.msra.mxu0 0.0
    %1973 = vmatprep.subr.mxu0 0.0
    %1974 = vmatpush1.xpose.msra.mxu0 0.0
    %1975 = vmatprep.subr.mxu0 0.0
    %1976 = vmatpush1.xpose.msra.mxu0 0.0
    %1977 = vmatprep.subr.mxu0 0.0
    %1978 = vmatpush1.xpose.msra.mxu0 0.0
    %1979 = vmatprep.subr.mxu0 0.0
    %1980 = vmatpush1.xpose.msra.mxu0 %v1947
    %1981 = vmatprep.subr.mxu0 0.0
    %1982 = vmatpush2.xpose.msra.mxu0 0.0
    %1983 = vmatprep.subr.mxu0 0.0
    %1984 = vmatpush2.xpose.msra.mxu0 0.0
    %1985 = vmatprep.subr.mxu0 0.0
    %1986 = vmatpush2.xpose.msra.mxu0 0.0
    %1987 = vmatprep.subr.mxu0 0.0
    %1988 = vmatpush2.xpose.msra.mxu0 0.0
    %1989 = vmatprep.subr.mxu0 0.0
    %1990 = vmatpush2.xpose.msra.mxu0 0.0
    %1991 = vmatprep.subr.mxu0 0.0
    %1992 = vmatpush2.xpose.msra.mxu0 0.0
    %1993 = vmatprep.subr.mxu0 0.0
    %1994 = vmatpush2.xpose.msra.mxu0 0.0
    %1995 = vmatprep.subr.mxu0 0.0
    %1996 = vmatpush2.xpose.msra.mxu0 0.0
    %1997 = vmatprep.subr.mxu0 0.0
    %1998 = vmatpush2.xpose.msra.mxu0 0.0
    %1999 = vmatprep.subr.mxu0 0.0
    %2000 = vmatpush2.xpose.msra.mxu0 0.0
    %2001 = vmatprep.subr.mxu0 0.0
    %2002 = vmatpush2.xpose.msra.mxu0 0.0
    %2003 = vmatprep.subr.mxu0 0.0
    %2004 = vmatpush2.xpose.msra.mxu0 0.0
    %2005 = vmatprep.subr.mxu0 0.0
    %2006 = vmatpush2.xpose.msra.mxu0 0.0
    %2007 = vmatprep.subr.mxu0 0.0
    %2008 = vmatpush2.xpose.msra.mxu0 0.0
    %2009 = vmatprep.subr.mxu0 0.0
    %2010 = vmatpush2.xpose.msra.mxu0 0.0
    %2011 = vmatprep.subr.mxu0 0.0
    %2012 = vmatpush2.xpose.msra.mxu0 0.0
    %2013 = vmatprep.mubr.f32.mxu0 0.0
    %2014 = vmatmul.mubr.f32.gmra.mxu0 %v1945
    %v2015 = vpop.f32.mrf.mxu0
    %v2016 = vadd.f32 0.0, %v2015
    %v2017 = vpop.f32.mrf.mxu0
    %2018 = vdwg.mxu0
    %v2019 = vmul.f32 %v2016, 0.35355338
    %v2020 = vadd.f32 %v2019, %v256
    %v2021 = vsel %vm177, %v2020, -inf
    %2022 = vmax.xlane.f32.xlu0 %v2021
    %v2023 = vpop.xlane.xlu0 %2022
    %v2024 = vsub.f32 %v2020, %v2023
    %v2025 = vmul.f32 %v2024, 1.442695
    %v2026 = vpow.pop %v2025
    %v2027 = vsel %vm177, %v2026, 0.0
    %2028 = vadd.xlane.f32.xlu0 %v2027
    %v2029 = vpop.xlane.xlu0 %2028
    %v2030 = vrcp.pop %v2029
    %v2031 = vmul.f32 %v2026, %v2030
    %2032 = vrot.lane.b32.xlu0 %v1936, 64
    %v2033 = vpop.permute.xlu0 %2032
    %v2036 = vsel %vm177, %v2031, 0
    %2038 = vmatprep.subr.mxu0 0.0
    %2039 = vmatpush1.msra.mxu0 0.0
    %2040 = vmatprep.subr.mxu0 0.0
    %2041 = vmatpush1.msra.mxu0 0.0
    %2042 = vmatprep.subr.mxu0 0.0
    %2043 = vmatpush1.msra.mxu0 0.0
    %2044 = vmatprep.subr.mxu0 0.0
    %2045 = vmatpush1.msra.mxu0 0.0
    %2046 = vmatprep.subr.mxu0 0.0
    %2047 = vmatpush1.msra.mxu0 0.0
    %2048 = vmatprep.subr.mxu0 0.0
    %2049 = vmatpush1.msra.mxu0 0.0
    %2050 = vmatprep.subr.mxu0 0.0
    %2051 = vmatpush1.msra.mxu0 0.0
    %2052 = vmatprep.subr.mxu0 0.0
    %2053 = vmatpush1.msra.mxu0 0.0
    %2054 = vmatprep.subr.mxu0 0.0
    %2055 = vmatpush1.msra.mxu0 0.0
    %2056 = vmatprep.subr.mxu0 0.0
    %2057 = vmatpush1.msra.mxu0 0.0
    %2058 = vmatprep.subr.mxu0 0.0
    %2059 = vmatpush1.msra.mxu0 0.0
    %2060 = vmatprep.subr.mxu0 0.0
    %2061 = vmatpush1.msra.mxu0 0.0
    %2062 = vmatprep.subr.mxu0 0.0
    %2063 = vmatpush1.msra.mxu0 0.0
    %2064 = vmatprep.subr.mxu0 0.0
    %2065 = vmatpush1.msra.mxu0 0.0
    %2066 = vmatprep.subr.mxu0 0.0
    %2067 = vmatpush1.msra.mxu0 0.0
    %2068 = vmatprep.subr.mxu0 0.0
    %2069 = vmatpush1.msra.mxu0 %v2033
    %2070 = vmatprep.subr.mxu0 0.0
    %2071 = vmatpush2.msra.mxu0 0.0
    %2072 = vmatprep.subr.mxu0 0.0
    %2073 = vmatpush2.msra.mxu0 0.0
    %2074 = vmatprep.subr.mxu0 0.0
    %2075 = vmatpush2.msra.mxu0 0.0
    %2076 = vmatprep.subr.mxu0 0.0
    %2077 = vmatpush2.msra.mxu0 0.0
    %2078 = vmatprep.subr.mxu0 0.0
    %2079 = vmatpush2.msra.mxu0 0.0
    %2080 = vmatprep.subr.mxu0 0.0
    %2081 = vmatpush2.msra.mxu0 0.0
    %2082 = vmatprep.subr.mxu0 0.0
    %2083 = vmatpush2.msra.mxu0 0.0
    %2084 = vmatprep.subr.mxu0 0.0
    %2085 = vmatpush2.msra.mxu0 0.0
    %2086 = vmatprep.subr.mxu0 0.0
    %2087 = vmatpush2.msra.mxu0 0.0
    %2088 = vmatprep.subr.mxu0 0.0
    %2089 = vmatpush2.msra.mxu0 0.0
    %2090 = vmatprep.subr.mxu0 0.0
    %2091 = vmatpush2.msra.mxu0 0.0
    %2092 = vmatprep.subr.mxu0 0.0
    %2093 = vmatpush2.msra.mxu0 0.0
    %2094 = vmatprep.subr.mxu0 0.0
    %2095 = vmatpush2.msra.mxu0 0.0
    %2096 = vmatprep.subr.mxu0 0.0
    %2097 = vmatpush2.msra.mxu0 0.0
    %2098 = vmatprep.subr.mxu0 0.0
    %2099 = vmatpush2.msra.mxu0 0.0
    %2100 = vmatprep.subr.mxu0 0.0
    %2101 = vmatpush2.msra.mxu0 0.0
    %2102 = vmatprep.mubr.f32.mxu0 0.0
    %2103 = vmatmul.mubr.f32.gmra.mxu0 %v2036
    %v2104 = vpop.f32.mrf.mxu0
    %v2105 = vadd.f32 0.0, %v2104
    %v2106 = vpop.f32.mrf.mxu0
    %2107 = vdwg.mxu0
    %2108 = vrot.lane.b32.xlu0 %v1936, 120
    %v2109 = vpop.permute.xlu0 %2108
    %2110 = vrot.lane.b32.xlu0 %v1936, 88
    %v2111 = vpop.permute.xlu0 %2110
    %v2112 = vsel %vm177, %v2109, 0
    %v2114 = vsel %vm177, %v2111, 0
    %2116 = vmatprep.subr.mxu0 0.0
    %2117 = vmatpush1.xpose.msra.mxu0 0.0
    %2118 = vmatprep.subr.mxu0 0.0
    %2119 = vmatpush1.xpose.msra.mxu0 0.0
    %2120 = vmatprep.subr.mxu0 0.0
    %2121 = vmatpush1.xpose.msra.mxu0 0.0
    %2122 = vmatprep.subr.mxu0 0.0
    %2123 = vmatpush1.xpose.msra.mxu0 0.0
    %2124 = vmatprep.subr.mxu0 0.0
    %2125 = vmatpush1.xpose.msra.mxu0 0.0
    %2126 = vmatprep.subr.mxu0 0.0
    %2127 = vmatpush1.xpose.msra.mxu0 0.0
    %2128 = vmatprep.subr.mxu0 0.0
    %2129 = vmatpush1.xpose.msra.mxu0 0.0
    %2130 = vmatprep.subr.mxu0 0.0
    %2131 = vmatpush1.xpose.msra.mxu0 0.0
    %2132 = vmatprep.subr.mxu0 0.0
    %2133 = vmatpush1.xpose.msra.mxu0 0.0
    %2134 = vmatprep.subr.mxu0 0.0
    %2135 = vmatpush1.xpose.msra.mxu0 0.0
    %2136 = vmatprep.subr.mxu0 0.0
    %2137 = vmatpush1.xpose.msra.mxu0 0.0
    %2138 = vmatprep.subr.mxu0 0.0
    %2139 = vmatpush1.xpose.msra.mxu0 0.0
    %2140 = vmatprep.subr.mxu0 0.0
    %2141 = vmatpush1.xpose.msra.mxu0 0.0
    %2142 = vmatprep.subr.mxu0 0.0
    %2143 = vmatpush1.xpose.msra.mxu0 0.0
    %2144 = vmatprep.subr.mxu0 0.0
    %2145 = vmatpush1.xpose.msra.mxu0 0.0
    %2146 = vmatprep.subr.mxu0 0.0
    %2147 = vmatpush1.xpose.msra.mxu0 %v2114
    %2148 = vmatprep.subr.mxu0 0.0
    %2149 = vmatpush2.xpose.msra.mxu0 0.0
    %2150 = vmatprep.subr.mxu0 0.0
    %2151 = vmatpush2.xpose.msra.mxu0 0.0
    %2152 = vmatprep.subr.mxu0 0.0
    %2153 = vmatpush2.xpose.msra.mxu0 0.0
    %2154 = vmatprep.subr.mxu0 0.0
    %2155 = vmatpush2.xpose.msra.mxu0 0.0
    %2156 = vmatprep.subr.mxu0 0.0
    %2157 = vmatpush2.xpose.msra.mxu0 0.0
    %2158 = vmatprep.subr.mxu0 0.0
    %2159 = vmatpush2.xpose.msra.mxu0 0.0
    %2160 = vmatprep.subr.mxu0 0.0
    %2161 = vmatpush2.xpose.msra.mxu0 0.0
    %2162 = vmatprep.subr.mxu0 0.0
    %2163 = vmatpush2.xpose.msra.mxu0 0.0
    %2164 = vmatprep.subr.mxu0 0.0
    %2165 = vmatpush2.xpose.msra.mxu0 0.0
    %2166 = vmatprep.subr.mxu0 0.0
    %2167 = vmatpush2.xpose.msra.mxu0 0.0
    %2168 = vmatprep.subr.mxu0 0.0
    %2169 = vmatpush2.xpose.msra.mxu0 0.0
    %2170 = vmatprep.subr.mxu0 0.0
    %2171 = vmatpush2.xpose.msra.mxu0 0.0
    %2172 = vmatprep.subr.mxu0 0.0
    %2173 = vmatpush2.xpose.msra.mxu0 0.0
    %2174 = vmatprep.subr.mxu0 0.0
    %2175 = vmatpush2.xpose.msra.mxu0 0.0
    %2176 = vmatprep.subr.mxu0 0.0
    %2177 = vmatpush2.xpose.msra.mxu0 0.0
    %2178 = vmatprep.subr.mxu0 0.0
    %2179 = vmatpush2.xpose.msra.mxu0 0.0
    %2180 = vmatprep.mubr.f32.mxu0 0.0
    %2181 = vmatmul.mubr.f32.gmra.mxu0 %v2112
    %v2182 = vpop.f32.mrf.mxu0
    %v2183 = vadd.f32 0.0, %v2182
    %v2184 = vpop.f32.mrf.mxu0
    %2185 = vdwg.mxu0
    %v2186 = vmul.f32 %v2183, 0.35355338
    %v2187 = vadd.f32 %v2186, %v256
    %v2188 = vsel %vm177, %v2187, -inf
    %2189 = vmax.xlane.f32.xlu0 %v2188
    %v2190 = vpop.xlane.xlu0 %2189
    %v2191 = vsub.f32 %v2187, %v2190
    %v2192 = vmul.f32 %v2191, 1.442695
    %v2193 = vpow.pop %v2192
    %v2194 = vsel %vm177, %v2193, 0.0
    %2195 = vadd.xlane.f32.xlu0 %v2194
    %v2196 = vpop.xlane.xlu0 %2195
    %v2197 = vrcp.pop %v2196
    %v2198 = vmul.f32 %v2193, %v2197
    %2199 = vrot.lane.b32.xlu0 %v1936, 56
    %v2200 = vpop.permute.xlu0 %2199
    %v2203 = vsel %vm177, %v2198, 0
    %2205 = vmatprep.subr.mxu0 0.0
    %2206 = vmatpush1.msra.mxu0 0.0
    %2207 = vmatprep.subr.mxu0 0.0
    %2208 = vmatpush1.msra.mxu0 0.0
    %2209 = vmatprep.subr.mxu0 0.0
    %2210 = vmatpush1.msra.mxu0 0.0
    %2211 = vmatprep.subr.mxu0 0.0
    %2212 = vmatpush1.msra.mxu0 0.0
    %2213 = vmatprep.subr.mxu0 0.0
    %2214 = vmatpush1.msra.mxu0 0.0
    %2215 = vmatprep.subr.mxu0 0.0
    %2216 = vmatpush1.msra.mxu0 0.0
    %2217 = vmatprep.subr.mxu0 0.0
    %2218 = vmatpush1.msra.mxu0 0.0
    %2219 = vmatprep.subr.mxu0 0.0
    %2220 = vmatpush1.msra.mxu0 0.0
    %2221 = vmatprep.subr.mxu0 0.0
    %2222 = vmatpush1.msra.mxu0 0.0
    %2223 = vmatprep.subr.mxu0 0.0
    %2224 = vmatpush1.msra.mxu0 0.0
    %2225 = vmatprep.subr.mxu0 0.0
    %2226 = vmatpush1.msra.mxu0 0.0
    %2227 = vmatprep.subr.mxu0 0.0
    %2228 = vmatpush1.msra.mxu0 0.0
    %2229 = vmatprep.subr.mxu0 0.0
    %2230 = vmatpush1.msra.mxu0 0.0
    %2231 = vmatprep.subr.mxu0 0.0
    %2232 = vmatpush1.msra.mxu0 0.0
    %2233 = vmatprep.subr.mxu0 0.0
    %2234 = vmatpush1.msra.mxu0 0.0
    %2235 = vmatprep.subr.mxu0 0.0
    %2236 = vmatpush1.msra.mxu0 %v2200
    %2237 = vmatprep.subr.mxu0 0.0
    %2238 = vmatpush2.msra.mxu0 0.0
    %2239 = vmatprep.subr.mxu0 0.0
    %2240 = vmatpush2.msra.mxu0 0.0
    %2241 = vmatprep.subr.mxu0 0.0
    %2242 = vmatpush2.msra.mxu0 0.0
    %2243 = vmatprep.subr.mxu0 0.0
    %2244 = vmatpush2.msra.mxu0 0.0
    %2245 = vmatprep.subr.mxu0 0.0
    %2246 = vmatpush2.msra.mxu0 0.0
    %2247 = vmatprep.subr.mxu0 0.0
    %2248 = vmatpush2.msra.mxu0 0.0
    %2249 = vmatprep.subr.mxu0 0.0
    %2250 = vmatpush2.msra.mxu0 0.0
    %2251 = vmatprep.subr.mxu0 0.0
    %2252 = vmatpush2.msra.mxu0 0.0
    %2253 = vmatprep.subr.mxu0 0.0
    %2254 = vmatpush2.msra.mxu0 0.0
    %2255 = vmatprep.subr.mxu0 0.0
    %2256 = vmatpush2.msra.mxu0 0.0
    %2257 = vmatprep.subr.mxu0 0.0
    %2258 = vmatpush2.msra.mxu0 0.0
    %2259 = vmatprep.subr.mxu0 0.0
    %2260 = vmatpush2.msra.mxu0 0.0
    %2261 = vmatprep.subr.mxu0 0.0
    %2262 = vmatpush2.msra.mxu0 0.0
    %2263 = vmatprep.subr.mxu0 0.0
    %2264 = vmatpush2.msra.mxu0 0.0
    %2265 = vmatprep.subr.mxu0 0.0
    %2266 = vmatpush2.msra.mxu0 0.0
    %2267 = vmatprep.subr.mxu0 0.0
    %2268 = vmatpush2.msra.mxu0 0.0
    %2269 = vmatprep.mubr.f32.mxu0 0.0
    %2270 = vmatmul.mubr.f32.gmra.mxu0 %v2203
    %v2271 = vpop.f32.mrf.mxu0
    %v2272 = vadd.f32 0.0, %v2271
    %v2273 = vpop.f32.mrf.mxu0
    %2274 = vdwg.mxu0
    %2275 = vrot.lane.b32.xlu0 %v1936, 112
    %v2276 = vpop.permute.xlu0 %2275
    %2277 = vrot.lane.b32.xlu0 %v1936, 80
    %v2278 = vpop.permute.xlu0 %2277
    %v2279 = vsel %vm177, %v2276, 0
    %v2281 = vsel %vm177, %v2278, 0
    %2283 = vmatprep.subr.mxu0 0.0
    %2284 = vmatpush1.xpose.msra.mxu0 0.0
    %2285 = vmatprep.subr.mxu0 0.0
    %2286 = vmatpush1.xpose.msra.mxu0 0.0
    %2287 = vmatprep.subr.mxu0 0.0
    %2288 = vmatpush1.xpose.msra.mxu0 0.0
    %2289 = vmatprep.subr.mxu0 0.0
    %2290 = vmatpush1.xpose.msra.mxu0 0.0
    %2291 = vmatprep.subr.mxu0 0.0
    %2292 = vmatpush1.xpose.msra.mxu0 0.0
    %2293 = vmatprep.subr.mxu0 0.0
    %2294 = vmatpush1.xpose.msra.mxu0 0.0
    %2295 = vmatprep.subr.mxu0 0.0
    %2296 = vmatpush1.xpose.msra.mxu0 0.0
    %2297 = vmatprep.subr.mxu0 0.0
    %2298 = vmatpush1.xpose.msra.mxu0 0.0
    %2299 = vmatprep.subr.mxu0 0.0
    %2300 = vmatpush1.xpose.msra.mxu0 0.0
    %2301 = vmatprep.subr.mxu0 0.0
    %2302 = vmatpush1.xpose.msra.mxu0 0.0
    %2303 = vmatprep.subr.mxu0 0.0
    %2304 = vmatpush1.xpose.msra.mxu0 0.0
    %2305 = vmatprep.subr.mxu0 0.0
    %2306 = vmatpush1.xpose.msra.mxu0 0.0
    %2307 = vmatprep.subr.mxu0 0.0
    %2308 = vmatpush1.xpose.msra.mxu0 0.0
    %2309 = vmatprep.subr.mxu0 0.0
    %2310 = vmatpush1.xpose.msra.mxu0 0.0
    %2311 = vmatprep.subr.mxu0 0.0
    %2312 = vmatpush1.xpose.msra.mxu0 0.0
    %2313 = vmatprep.subr.mxu0 0.0
    %2314 = vmatpush1.xpose.msra.mxu0 %v2281
    %2315 = vmatprep.subr.mxu0 0.0
    %2316 = vmatpush2.xpose.msra.mxu0 0.0
    %2317 = vmatprep.subr.mxu0 0.0
    %2318 = vmatpush2.xpose.msra.mxu0 0.0
    %2319 = vmatprep.subr.mxu0 0.0
    %2320 = vmatpush2.xpose.msra.mxu0 0.0
    %2321 = vmatprep.subr.mxu0 0.0
    %2322 = vmatpush2.xpose.msra.mxu0 0.0
    %2323 = vmatprep.subr.mxu0 0.0
    %2324 = vmatpush2.xpose.msra.mxu0 0.0
    %2325 = vmatprep.subr.mxu0 0.0
    %2326 = vmatpush2.xpose.msra.mxu0 0.0
    %2327 = vmatprep.subr.mxu0 0.0
    %2328 = vmatpush2.xpose.msra.mxu0 0.0
    %2329 = vmatprep.subr.mxu0 0.0
    %2330 = vmatpush2.xpose.msra.mxu0 0.0
    %2331 = vmatprep.subr.mxu0 0.0
    %2332 = vmatpush2.xpose.msra.mxu0 0.0
    %2333 = vmatprep.subr.mxu0 0.0
    %2334 = vmatpush2.xpose.msra.mxu0 0.0
    %2335 = vmatprep.subr.mxu0 0.0
    %2336 = vmatpush2.xpose.msra.mxu0 0.0
    %2337 = vmatprep.subr.mxu0 0.0
    %2338 = vmatpush2.xpose.msra.mxu0 0.0
    %2339 = vmatprep.subr.mxu0 0.0
    %2340 = vmatpush2.xpose.msra.mxu0 0.0
    %2341 = vmatprep.subr.mxu0 0.0
    %2342 = vmatpush2.xpose.msra.mxu0 0.0
    %2343 = vmatprep.subr.mxu0 0.0
    %2344 = vmatpush2.xpose.msra.mxu0 0.0
    %2345 = vmatprep.subr.mxu0 0.0
    %2346 = vmatpush2.xpose.msra.mxu0 0.0
    %2347 = vmatprep.mubr.f32.mxu0 0.0
    %2348 = vmatmul.mubr.f32.gmra.mxu0 %v2279
    %v2349 = vpop.f32.mrf.mxu0
    %v2350 = vadd.f32 0.0, %v2349
    %v2351 = vpop.f32.mrf.mxu0
    %2352 = vdwg.mxu0
    %v2353 = vmul.f32 %v2350, 0.35355338
    %v2354 = vadd.f32 %v2353, %v256
    %v2355 = vsel %vm177, %v2354, -inf
    %2356 = vmax.xlane.f32.xlu0 %v2355
    %v2357 = vpop.xlane.xlu0 %2356
    %v2358 = vsub.f32 %v2354, %v2357
    %v2359 = vmul.f32 %v2358, 1.442695
    %v2360 = vpow.pop %v2359
    %v2361 = vsel %vm177, %v2360, 0.0
    %2362 = vadd.xlane.f32.xlu0 %v2361
    %v2363 = vpop.xlane.xlu0 %2362
    %v2364 = vrcp.pop %v2363
    %v2365 = vmul.f32 %v2360, %v2364
    %2366 = vrot.lane.b32.xlu0 %v1936, 48
    %v2367 = vpop.permute.xlu0 %2366
    %v2370 = vsel %vm177, %v2365, 0
    %2372 = vmatprep.subr.mxu0 0.0
    %2373 = vmatpush1.msra.mxu0 0.0
    %2374 = vmatprep.subr.mxu0 0.0
    %2375 = vmatpush1.msra.mxu0 0.0
    %2376 = vmatprep.subr.mxu0 0.0
    %2377 = vmatpush1.msra.mxu0 0.0
    %2378 = vmatprep.subr.mxu0 0.0
    %2379 = vmatpush1.msra.mxu0 0.0
    %2380 = vmatprep.subr.mxu0 0.0
    %2381 = vmatpush1.msra.mxu0 0.0
    %2382 = vmatprep.subr.mxu0 0.0
    %2383 = vmatpush1.msra.mxu0 0.0
    %2384 = vmatprep.subr.mxu0 0.0
    %2385 = vmatpush1.msra.mxu0 0.0
    %2386 = vmatprep.subr.mxu0 0.0
    %2387 = vmatpush1.msra.mxu0 0.0
    %2388 = vmatprep.subr.mxu0 0.0
    %2389 = vmatpush1.msra.mxu0 0.0
    %2390 = vmatprep.subr.mxu0 0.0
    %2391 = vmatpush1.msra.mxu0 0.0
    %2392 = vmatprep.subr.mxu0 0.0
    %2393 = vmatpush1.msra.mxu0 0.0
    %2394 = vmatprep.subr.mxu0 0.0
    %2395 = vmatpush1.msra.mxu0 0.0
    %2396 = vmatprep.subr.mxu0 0.0
    %2397 = vmatpush1.msra.mxu0 0.0
    %2398 = vmatprep.subr.mxu0 0.0
    %2399 = vmatpush1.msra.mxu0 0.0
    %2400 = vmatprep.subr.mxu0 0.0
    %2401 = vmatpush1.msra.mxu0 0.0
    %2402 = vmatprep.subr.mxu0 0.0
    %2403 = vmatpush1.msra.mxu0 %v2367
    %2404 = vmatprep.subr.mxu0 0.0
    %2405 = vmatpush2.msra.mxu0 0.0
    %2406 = vmatprep.subr.mxu0 0.0
    %2407 = vmatpush2.msra.mxu0 0.0
    %2408 = vmatprep.subr.mxu0 0.0
    %2409 = vmatpush2.msra.mxu0 0.0
    %2410 = vmatprep.subr.mxu0 0.0
    %2411 = vmatpush2.msra.mxu0 0.0
    %2412 = vmatprep.subr.mxu0 0.0
    %2413 = vmatpush2.msra.mxu0 0.0
    %2414 = vmatprep.subr.mxu0 0.0
    %2415 = vmatpush2.msra.mxu0 0.0
    %2416 = vmatprep.subr.mxu0 0.0
    %2417 = vmatpush2.msra.mxu0 0.0
    %2418 = vmatprep.subr.mxu0 0.0
    %2419 = vmatpush2.msra.mxu0 0.0
    %2420 = vmatprep.subr.mxu0 0.0
    %2421 = vmatpush2.msra.mxu0 0.0
    %2422 = vmatprep.subr.mxu0 0.0
    %2423 = vmatpush2.msra.mxu0 0.0
    %2424 = vmatprep.subr.mxu0 0.0
    %2425 = vmatpush2.msra.mxu0 0.0
    %2426 = vmatprep.subr.mxu0 0.0
    %2427 = vmatpush2.msra.mxu0 0.0
    %2428 = vmatprep.subr.mxu0 0.0
    %2429 = vmatpush2.msra.mxu0 0.0
    %2430 = vmatprep.subr.mxu0 0.0
    %2431 = vmatpush2.msra.mxu0 0.0
    %2432 = vmatprep.subr.mxu0 0.0
    %2433 = vmatpush2.msra.mxu0 0.0
    %2434 = vmatprep.subr.mxu0 0.0
    %2435 = vmatpush2.msra.mxu0 0.0
    %2436 = vmatprep.mubr.f32.mxu0 0.0
    %2437 = vmatmul.mubr.f32.gmra.mxu0 %v2370
    %v2438 = vpop.f32.mrf.mxu0
    %v2439 = vadd.f32 0.0, %v2438
    %v2440 = vpop.f32.mrf.mxu0
    %2441 = vdwg.mxu0
    %2442 = vrot.lane.b32.xlu0 %v1936, 104
    %v2443 = vpop.permute.xlu0 %2442
    %2444 = vrot.lane.b32.xlu0 %v1936, 72
    %v2445 = vpop.permute.xlu0 %2444
    %v2446 = vsel %vm177, %v2443, 0
    %v2448 = vsel %vm177, %v2445, 0
    %2450 = vmatprep.subr.mxu0 0.0
    %2451 = vmatpush1.xpose.msra.mxu0 0.0
    %2452 = vmatprep.subr.mxu0 0.0
    %2453 = vmatpush1.xpose.msra.mxu0 0.0
    %2454 = vmatprep.subr.mxu0 0.0
    %2455 = vmatpush1.xpose.msra.mxu0 0.0
    %2456 = vmatprep.subr.mxu0 0.0
    %2457 = vmatpush1.xpose.msra.mxu0 0.0
    %2458 = vmatprep.subr.mxu0 0.0
    %2459 = vmatpush1.xpose.msra.mxu0 0.0
    %2460 = vmatprep.subr.mxu0 0.0
    %2461 = vmatpush1.xpose.msra.mxu0 0.0
    %2462 = vmatprep.subr.mxu0 0.0
    %2463 = vmatpush1.xpose.msra.mxu0 0.0
    %2464 = vmatprep.subr.mxu0 0.0
    %2465 = vmatpush1.xpose.msra.mxu0 0.0
    %2466 = vmatprep.subr.mxu0 0.0
    %2467 = vmatpush1.xpose.msra.mxu0 0.0
    %2468 = vmatprep.subr.mxu0 0.0
    %2469 = vmatpush1.xpose.msra.mxu0 0.0
    %2470 = vmatprep.subr.mxu0 0.0
    %2471 = vmatpush1.xpose.msra.mxu0 0.0
    %2472 = vmatprep.subr.mxu0 0.0
    %2473 = vmatpush1.xpose.msra.mxu0 0.0
    %2474 = vmatprep.subr.mxu0 0.0
    %2475 = vmatpush1.xpose.msra.mxu0 0.0
    %2476 = vmatprep.subr.mxu0 0.0
    %2477 = vmatpush1.xpose.msra.mxu0 0.0
    %2478 = vmatprep.subr.mxu0 0.0
    %2479 = vmatpush1.xpose.msra.mxu0 0.0
    %2480 = vmatprep.subr.mxu0 0.0
    %2481 = vmatpush1.xpose.msra.mxu0 %v2448
    %2482 = vmatprep.subr.mxu0 0.0
    %2483 = vmatpush2.xpose.msra.mxu0 0.0
    %2484 = vmatprep.subr.mxu0 0.0
    %2485 = vmatpush2.xpose.msra.mxu0 0.0
    %2486 = vmatprep.subr.mxu0 0.0
    %2487 = vmatpush2.xpose.msra.mxu0 0.0
    %2488 = vmatprep.subr.mxu0 0.0
    %2489 = vmatpush2.xpose.msra.mxu0 0.0
    %2490 = vmatprep.subr.mxu0 0.0
    %2491 = vmatpush2.xpose.msra.mxu0 0.0
    %2492 = vmatprep.subr.mxu0 0.0
    %2493 = vmatpush2.xpose.msra.mxu0 0.0
    %2494 = vmatprep.subr.mxu0 0.0
    %2495 = vmatpush2.xpose.msra.mxu0 0.0
    %2496 = vmatprep.subr.mxu0 0.0
    %2497 = vmatpush2.xpose.msra.mxu0 0.0
    %2498 = vmatprep.subr.mxu0 0.0
    %2499 = vmatpush2.xpose.msra.mxu0 0.0
    %2500 = vmatprep.subr.mxu0 0.0
    %2501 = vmatpush2.xpose.msra.mxu0 0.0
    %2502 = vmatprep.subr.mxu0 0.0
    %2503 = vmatpush2.xpose.msra.mxu0 0.0
    %2504 = vmatprep.subr.mxu0 0.0
    %2505 = vmatpush2.xpose.msra.mxu0 0.0
    %2506 = vmatprep.subr.mxu0 0.0
    %2507 = vmatpush2.xpose.msra.mxu0 0.0
    %2508 = vmatprep.subr.mxu0 0.0
    %2509 = vmatpush2.xpose.msra.mxu0 0.0
    %2510 = vmatprep.subr.mxu0 0.0
    %2511 = vmatpush2.xpose.msra.mxu0 0.0
    %2512 = vmatprep.subr.mxu0 0.0
    %2513 = vmatpush2.xpose.msra.mxu0 0.0
    %2514 = vmatprep.mubr.f32.mxu0 0.0
    %2515 = vmatmul.mubr.f32.gmra.mxu0 %v2446
    %v2516 = vpop.f32.mrf.mxu0
    %v2517 = vadd.f32 0.0, %v2516
    %v2518 = vpop.f32.mrf.mxu0
    %2519 = vdwg.mxu0
    %v2520 = vmul.f32 %v2517, 0.35355338
    %v2521 = vadd.f32 %v2520, %v256
    %v2522 = vsel %vm177, %v2521, -inf
    %2523 = vmax.xlane.f32.xlu0 %v2522
    %v2524 = vpop.xlane.xlu0 %2523
    %v2525 = vsub.f32 %v2521, %v2524
    %v2526 = vmul.f32 %v2525, 1.442695
    %v2527 = vpow.pop %v2526
    %v2528 = vsel %vm177, %v2527, 0.0
    %2529 = vadd.xlane.f32.xlu0 %v2528
    %v2530 = vpop.xlane.xlu0 %2529
    %v2531 = vrcp.pop %v2530
    %v2532 = vmul.f32 %v2527, %v2531
    %2533 = vrot.lane.b32.xlu0 %v1936, 40
    %v2534 = vpop.permute.xlu0 %2533
    %v2537 = vsel %vm177, %v2532, 0
    %2539 = vmatprep.subr.mxu0 0.0
    %2540 = vmatpush1.msra.mxu0 0.0
    %2541 = vmatprep.subr.mxu0 0.0
    %2542 = vmatpush1.msra.mxu0 0.0
    %2543 = vmatprep.subr.mxu0 0.0
    %2544 = vmatpush1.msra.mxu0 0.0
    %2545 = vmatprep.subr.mxu0 0.0
    %2546 = vmatpush1.msra.mxu0 0.0
    %2547 = vmatprep.subr.mxu0 0.0
    %2548 = vmatpush1.msra.mxu0 0.0
    %2549 = vmatprep.subr.mxu0 0.0
    %2550 = vmatpush1.msra.mxu0 0.0
    %2551 = vmatprep.subr.mxu0 0.0
    %2552 = vmatpush1.msra.mxu0 0.0
    %2553 = vmatprep.subr.mxu0 0.0
    %2554 = vmatpush1.msra.mxu0 0.0
    %2555 = vmatprep.subr.mxu0 0.0
    %2556 = vmatpush1.msra.mxu0 0.0
    %2557 = vmatprep.subr.mxu0 0.0
    %2558 = vmatpush1.msra.mxu0 0.0
    %2559 = vmatprep.subr.mxu0 0.0
    %2560 = vmatpush1.msra.mxu0 0.0
    %2561 = vmatprep.subr.mxu0 0.0
    %2562 = vmatpush1.msra.mxu0 0.0
    %2563 = vmatprep.subr.mxu0 0.0
    %2564 = vmatpush1.msra.mxu0 0.0
    %2565 = vmatprep.subr.mxu0 0.0
    %2566 = vmatpush1.msra.mxu0 0.0
    %2567 = vmatprep.subr.mxu0 0.0
    %2568 = vmatpush1.msra.mxu0 0.0
    %2569 = vmatprep.subr.mxu0 0.0
    %2570 = vmatpush1.msra.mxu0 %v2534
    %2571 = vmatprep.subr.mxu0 0.0
    %2572 = vmatpush2.msra.mxu0 0.0
    %2573 = vmatprep.subr.mxu0 0.0
    %2574 = vmatpush2.msra.mxu0 0.0
    %2575 = vmatprep.subr.mxu0 0.0
    %2576 = vmatpush2.msra.mxu0 0.0
    %2577 = vmatprep.subr.mxu0 0.0
    %2578 = vmatpush2.msra.mxu0 0.0
    %2579 = vmatprep.subr.mxu0 0.0
    %2580 = vmatpush2.msra.mxu0 0.0
    %2581 = vmatprep.subr.mxu0 0.0
    %2582 = vmatpush2.msra.mxu0 0.0
    %2583 = vmatprep.subr.mxu0 0.0
    %2584 = vmatpush2.msra.mxu0 0.0
    %2585 = vmatprep.subr.mxu0 0.0
    %2586 = vmatpush2.msra.mxu0 0.0
    %2587 = vmatprep.subr.mxu0 0.0
    %2588 = vmatpush2.msra.mxu0 0.0
    %2589 = vmatprep.subr.mxu0 0.0
    %2590 = vmatpush2.msra.mxu0 0.0
    %2591 = vmatprep.subr.mxu0 0.0
    %2592 = vmatpush2.msra.mxu0 0.0
    %2593 = vmatprep.subr.mxu0 0.0
    %2594 = vmatpush2.msra.mxu0 0.0
    %2595 = vmatprep.subr.mxu0 0.0
    %2596 = vmatpush2.msra.mxu0 0.0
    %2597 = vmatprep.subr.mxu0 0.0
    %2598 = vmatpush2.msra.mxu0 0.0
    %2599 = vmatprep.subr.mxu0 0.0
    %2600 = vmatpush2.msra.mxu0 0.0
    %2601 = vmatprep.subr.mxu0 0.0
    %2602 = vmatpush2.msra.mxu0 0.0
    %2603 = vmatprep.mubr.f32.mxu0 0.0
    %2604 = vmatmul.mubr.f32.gmra.mxu0 %v2537
    %v2605 = vpop.f32.mrf.mxu0
    %v2606 = vadd.f32 0.0, %v2605
    %v2607 = vpop.f32.mrf.mxu0
    %2608 = vdwg.mxu0
    %2610 = vrot.lane.b32.xlu0 %v2272, 8
    %v2611 = vpop.permute.xlu0 %2610
    %2614 = vrot.lane.b32.xlu0 %v2439, 16
    %v2615 = vpop.permute.xlu0 %2614
    %2618 = vrot.lane.b32.xlu0 %v2606, 24
    %v2619 = vpop.permute.xlu0 %2618
    %v2621 = vsel %vm177, %v2105, %v2611
    %v2622 = vsel %vm859, %v2621, %v2615
    %v2623 = vsel %vm861, %v2622, %v2619
    %2625 = vrot.lane.b32.xlu0 %v1939, 96
    %v2626 = vpop.permute.xlu0 %2625
    %v2627 = vsel %vm177, %v1939, 0
    %v2629 = vsel %vm177, %v2626, 0
    %2631 = vmatprep.subr.mxu0 0.0
    %2632 = vmatpush1.xpose.msra.mxu0 0.0
    %2633 = vmatprep.subr.mxu0 0.0
    %2634 = vmatpush1.xpose.msra.mxu0 0.0
    %2635 = vmatprep.subr.mxu0 0.0
    %2636 = vmatpush1.xpose.msra.mxu0 0.0
    %2637 = vmatprep.subr.mxu0 0.0
    %2638 = vmatpush1.xpose.msra.mxu0 0.0
    %2639 = vmatprep.subr.mxu0 0.0
    %2640 = vmatpush1.xpose.msra.mxu0 0.0
    %2641 = vmatprep.subr.mxu0 0.0
    %2642 = vmatpush1.xpose.msra.mxu0 0.0
    %2643 = vmatprep.subr.mxu0 0.0
    %2644 = vmatpush1.xpose.msra.mxu0 0.0
    %2645 = vmatprep.subr.mxu0 0.0
    %2646 = vmatpush1.xpose.msra.mxu0 0.0
    %2647 = vmatprep.subr.mxu0 0.0
    %2648 = vmatpush1.xpose.msra.mxu0 0.0
    %2649 = vmatprep.subr.mxu0 0.0
    %2650 = vmatpush1.xpose.msra.mxu0 0.0
    %2651 = vmatprep.subr.mxu0 0.0
    %2652 = vmatpush1.xpose.msra.mxu0 0.0
    %2653 = vmatprep.subr.mxu0 0.0
    %2654 = vmatpush1.xpose.msra.mxu0 0.0
    %2655 = vmatprep.subr.mxu0 0.0
    %2656 = vmatpush1.xpose.msra.mxu0 0.0
    %2657 = vmatprep.subr.mxu0 0.0
    %2658 = vmatpush1.xpose.msra.mxu0 0.0
    %2659 = vmatprep.subr.mxu0 0.0
    %2660 = vmatpush1.xpose.msra.mxu0 0.0
    %2661 = vmatprep.subr.mxu0 0.0
    %2662 = vmatpush1.xpose.msra.mxu0 %v2629
    %2663 = vmatprep.subr.mxu0 0.0
    %2664 = vmatpush2.xpose.msra.mxu0 0.0
    %2665 = vmatprep.subr.mxu0 0.0
    %2666 = vmatpush2.xpose.msra.mxu0 0.0
    %2667 = vmatprep.subr.mxu0 0.0
    %2668 = vmatpush2.xpose.msra.mxu0 0.0
    %2669 = vmatprep.subr.mxu0 0.0
    %2670 = vmatpush2.xpose.msra.mxu0 0.0
    %2671 = vmatprep.subr.mxu0 0.0
    %2672 = vmatpush2.xpose.msra.mxu0 0.0
    %2673 = vmatprep.subr.mxu0 0.0
    %2674 = vmatpush2.xpose.msra.mxu0 0.0
    %2675 = vmatprep.subr.mxu0 0.0
    %2676 = vmatpush2.xpose.msra.mxu0 0.0
    %2677 = vmatprep.subr.mxu0 0.0
    %2678 = vmatpush2.xpose.msra.mxu0 0.0
    %2679 = vmatprep.subr.mxu0 0.0
    %2680 = vmatpush2.xpose.msra.mxu0 0.0
    %2681 = vmatprep.subr.mxu0 0.0
    %2682 = vmatpush2.xpose.msra.mxu0 0.0
    %2683 = vmatprep.subr.mxu0 0.0
    %2684 = vmatpush2.xpose.msra.mxu0 0.0
    %2685 = vmatprep.subr.mxu0 0.0
    %2686 = vmatpush2.xpose.msra.mxu0 0.0
    %2687 = vmatprep.subr.mxu0 0.0
    %2688 = vmatpush2.xpose.msra.mxu0 0.0
    %2689 = vmatprep.subr.mxu0 0.0
    %2690 = vmatpush2.xpose.msra.mxu0 0.0
    %2691 = vmatprep.subr.mxu0 0.0
    %2692 = vmatpush2.xpose.msra.mxu0 0.0
    %2693 = vmatprep.subr.mxu0 0.0
    %2694 = vmatpush2.xpose.msra.mxu0 0.0
    %2695 = vmatprep.mubr.f32.mxu0 0.0
    %2696 = vmatmul.mubr.f32.gmra.mxu0 %v2627
    %v2697 = vpop.f32.mrf.mxu0
    %v2698 = vadd.f32 0.0, %v2697
    %v2699 = vpop.f32.mrf.mxu0
    %2700 = vdwg.mxu0
    %v2701 = vmul.f32 %v2698, 0.35355338
    %v2702 = vadd.f32 %v2701, %v944
    %v2703 = vsel %vm177, %v2702, -inf
    %2704 = vmax.xlane.f32.xlu0 %v2703
    %v2705 = vpop.xlane.xlu0 %2704
    %v2706 = vsub.f32 %v2702, %v2705
    %v2707 = vmul.f32 %v2706, 1.442695
    %v2708 = vpow.pop %v2707
    %v2709 = vsel %vm177, %v2708, 0.0
    %2710 = vadd.xlane.f32.xlu0 %v2709
    %v2711 = vpop.xlane.xlu0 %2710
    %v2712 = vrcp.pop %v2711
    %v2713 = vmul.f32 %v2708, %v2712
    %2714 = vrot.lane.b32.xlu0 %v1939, 64
    %v2715 = vpop.permute.xlu0 %2714
    %v2718 = vsel %vm177, %v2713, 0
    %2720 = vmatprep.subr.mxu0 0.0
    %2721 = vmatpush1.msra.mxu0 0.0
    %2722 = vmatprep.subr.mxu0 0.0
    %2723 = vmatpush1.msra.mxu0 0.0
    %2724 = vmatprep.subr.mxu0 0.0
    %2725 = vmatpush1.msra.mxu0 0.0
    %2726 = vmatprep.subr.mxu0 0.0
    %2727 = vmatpush1.msra.mxu0 0.0
    %2728 = vmatprep.subr.mxu0 0.0
    %2729 = vmatpush1.msra.mxu0 0.0
    %2730 = vmatprep.subr.mxu0 0.0
    %2731 = vmatpush1.msra.mxu0 0.0
    %2732 = vmatprep.subr.mxu0 0.0
    %2733 = vmatpush1.msra.mxu0 0.0
    %2734 = vmatprep.subr.mxu0 0.0
    %2735 = vmatpush1.msra.mxu0 0.0
    %2736 = vmatprep.subr.mxu0 0.0
    %2737 = vmatpush1.msra.mxu0 0.0
    %2738 = vmatprep.subr.mxu0 0.0
    %2739 = vmatpush1.msra.mxu0 0.0
    %2740 = vmatprep.subr.mxu0 0.0
    %2741 = vmatpush1.msra.mxu0 0.0
    %2742 = vmatprep.subr.mxu0 0.0
    %2743 = vmatpush1.msra.mxu0 0.0
    %2744 = vmatprep.subr.mxu0 0.0
    %2745 = vmatpush1.msra.mxu0 0.0
    %2746 = vmatprep.subr.mxu0 0.0
    %2747 = vmatpush1.msra.mxu0 0.0
    %2748 = vmatprep.subr.mxu0 0.0
    %2749 = vmatpush1.msra.mxu0 0.0
    %2750 = vmatprep.subr.mxu0 0.0
    %2751 = vmatpush1.msra.mxu0 %v2715
    %2752 = vmatprep.subr.mxu0 0.0
    %2753 = vmatpush2.msra.mxu0 0.0
    %2754 = vmatprep.subr.mxu0 0.0
    %2755 = vmatpush2.msra.mxu0 0.0
    %2756 = vmatprep.subr.mxu0 0.0
    %2757 = vmatpush2.msra.mxu0 0.0
    %2758 = vmatprep.subr.mxu0 0.0
    %2759 = vmatpush2.msra.mxu0 0.0
    %2760 = vmatprep.subr.mxu0 0.0
    %2761 = vmatpush2.msra.mxu0 0.0
    %2762 = vmatprep.subr.mxu0 0.0
    %2763 = vmatpush2.msra.mxu0 0.0
    %2764 = vmatprep.subr.mxu0 0.0
    %2765 = vmatpush2.msra.mxu0 0.0
    %2766 = vmatprep.subr.mxu0 0.0
    %2767 = vmatpush2.msra.mxu0 0.0
    %2768 = vmatprep.subr.mxu0 0.0
    %2769 = vmatpush2.msra.mxu0 0.0
    %2770 = vmatprep.subr.mxu0 0.0
    %2771 = vmatpush2.msra.mxu0 0.0
    %2772 = vmatprep.subr.mxu0 0.0
    %2773 = vmatpush2.msra.mxu0 0.0
    %2774 = vmatprep.subr.mxu0 0.0
    %2775 = vmatpush2.msra.mxu0 0.0
    %2776 = vmatprep.subr.mxu0 0.0
    %2777 = vmatpush2.msra.mxu0 0.0
    %2778 = vmatprep.subr.mxu0 0.0
    %2779 = vmatpush2.msra.mxu0 0.0
    %2780 = vmatprep.subr.mxu0 0.0
    %2781 = vmatpush2.msra.mxu0 0.0
    %2782 = vmatprep.subr.mxu0 0.0
    %2783 = vmatpush2.msra.mxu0 0.0
    %2784 = vmatprep.mubr.f32.mxu0 0.0
    %2785 = vmatmul.mubr.f32.gmra.mxu0 %v2718
    %v2786 = vpop.f32.mrf.mxu0
    %v2787 = vadd.f32 0.0, %v2786
    %v2788 = vpop.f32.mrf.mxu0
    %2789 = vdwg.mxu0
    %2790 = vrot.lane.b32.xlu0 %v1939, 120
    %v2791 = vpop.permute.xlu0 %2790
    %2792 = vrot.lane.b32.xlu0 %v1939, 88
    %v2793 = vpop.permute.xlu0 %2792
    %v2794 = vsel %vm177, %v2791, 0
    %v2796 = vsel %vm177, %v2793, 0
    %2798 = vmatprep.subr.mxu0 0.0
    %2799 = vmatpush1.xpose.msra.mxu0 0.0
    %2800 = vmatprep.subr.mxu0 0.0
    %2801 = vmatpush1.xpose.msra.mxu0 0.0
    %2802 = vmatprep.subr.mxu0 0.0
    %2803 = vmatpush1.xpose.msra.mxu0 0.0
    %2804 = vmatprep.subr.mxu0 0.0
    %2805 = vmatpush1.xpose.msra.mxu0 0.0
    %2806 = vmatprep.subr.mxu0 0.0
    %2807 = vmatpush1.xpose.msra.mxu0 0.0
    %2808 = vmatprep.subr.mxu0 0.0
    %2809 = vmatpush1.xpose.msra.mxu0 0.0
    %2810 = vmatprep.subr.mxu0 0.0
    %2811 = vmatpush1.xpose.msra.mxu0 0.0
    %2812 = vmatprep.subr.mxu0 0.0
    %2813 = vmatpush1.xpose.msra.mxu0 0.0
    %2814 = vmatprep.subr.mxu0 0.0
    %2815 = vmatpush1.xpose.msra.mxu0 0.0
    %2816 = vmatprep.subr.mxu0 0.0
    %2817 = vmatpush1.xpose.msra.mxu0 0.0
    %2818 = vmatprep.subr.mxu0 0.0
    %2819 = vmatpush1.xpose.msra.mxu0 0.0
    %2820 = vmatprep.subr.mxu0 0.0
    %2821 = vmatpush1.xpose.msra.mxu0 0.0
    %2822 = vmatprep.subr.mxu0 0.0
    %2823 = vmatpush1.xpose.msra.mxu0 0.0
    %2824 = vmatprep.subr.mxu0 0.0
    %2825 = vmatpush1.xpose.msra.mxu0 0.0
    %2826 = vmatprep.subr.mxu0 0.0
    %2827 = vmatpush1.xpose.msra.mxu0 0.0
    %2828 = vmatprep.subr.mxu0 0.0
    %2829 = vmatpush1.xpose.msra.mxu0 %v2796
    %2830 = vmatprep.subr.mxu0 0.0
    %2831 = vmatpush2.xpose.msra.mxu0 0.0
    %2832 = vmatprep.subr.mxu0 0.0
    %2833 = vmatpush2.xpose.msra.mxu0 0.0
    %2834 = vmatprep.subr.mxu0 0.0
    %2835 = vmatpush2.xpose.msra.mxu0 0.0
    %2836 = vmatprep.subr.mxu0 0.0
    %2837 = vmatpush2.xpose.msra.mxu0 0.0
    %2838 = vmatprep.subr.mxu0 0.0
    %2839 = vmatpush2.xpose.msra.mxu0 0.0
    %2840 = vmatprep.subr.mxu0 0.0
    %2841 = vmatpush2.xpose.msra.mxu0 0.0
    %2842 = vmatprep.subr.mxu0 0.0
    %2843 = vmatpush2.xpose.msra.mxu0 0.0
    %2844 = vmatprep.subr.mxu0 0.0
    %2845 = vmatpush2.xpose.msra.mxu0 0.0
    %2846 = vmatprep.subr.mxu0 0.0
    %2847 = vmatpush2.xpose.msra.mxu0 0.0
    %2848 = vmatprep.subr.mxu0 0.0
    %2849 = vmatpush2.xpose.msra.mxu0 0.0
    %2850 = vmatprep.subr.mxu0 0.0
    %2851 = vmatpush2.xpose.msra.mxu0 0.0
    %2852 = vmatprep.subr.mxu0 0.0
    %2853 = vmatpush2.xpose.msra.mxu0 0.0
    %2854 = vmatprep.subr.mxu0 0.0
    %2855 = vmatpush2.xpose.msra.mxu0 0.0
    %2856 = vmatprep.subr.mxu0 0.0
    %2857 = vmatpush2.xpose.msra.mxu0 0.0
    %2858 = vmatprep.subr.mxu0 0.0
    %2859 = vmatpush2.xpose.msra.mxu0 0.0
    %2860 = vmatprep.subr.mxu0 0.0
    %2861 = vmatpush2.xpose.msra.mxu0 0.0
    %2862 = vmatprep.mubr.f32.mxu0 0.0
    %2863 = vmatmul.mubr.f32.gmra.mxu0 %v2794
    %v2864 = vpop.f32.mrf.mxu0
    %v2865 = vadd.f32 0.0, %v2864
    %v2866 = vpop.f32.mrf.mxu0
    %2867 = vdwg.mxu0
    %v2868 = vmul.f32 %v2865, 0.35355338
    %v2869 = vadd.f32 %v2868, %v944
    %v2870 = vsel %vm177, %v2869, -inf
    %2871 = vmax.xlane.f32.xlu0 %v2870
    %v2872 = vpop.xlane.xlu0 %2871
    %v2873 = vsub.f32 %v2869, %v2872
    %v2874 = vmul.f32 %v2873, 1.442695
    %v2875 = vpow.pop %v2874
    %v2876 = vsel %vm177, %v2875, 0.0
    %2877 = vadd.xlane.f32.xlu0 %v2876
    %v2878 = vpop.xlane.xlu0 %2877
    %v2879 = vrcp.pop %v2878
    %v2880 = vmul.f32 %v2875, %v2879
    %2881 = vrot.lane.b32.xlu0 %v1939, 56
    %v2882 = vpop.permute.xlu0 %2881
    %v2885 = vsel %vm177, %v2880, 0
    %2887 = vmatprep.subr.mxu0 0.0
    %2888 = vmatpush1.msra.mxu0 0.0
    %2889 = vmatprep.subr.mxu0 0.0
    %2890 = vmatpush1.msra.mxu0 0.0
    %2891 = vmatprep.subr.mxu0 0.0
    %2892 = vmatpush1.msra.mxu0 0.0
    %2893 = vmatprep.subr.mxu0 0.0
    %2894 = vmatpush1.msra.mxu0 0.0
    %2895 = vmatprep.subr.mxu0 0.0
    %2896 = vmatpush1.msra.mxu0 0.0
    %2897 = vmatprep.subr.mxu0 0.0
    %2898 = vmatpush1.msra.mxu0 0.0
    %2899 = vmatprep.subr.mxu0 0.0
    %2900 = vmatpush1.msra.mxu0 0.0
    %2901 = vmatprep.subr.mxu0 0.0
    %2902 = vmatpush1.msra.mxu0 0.0
    %2903 = vmatprep.subr.mxu0 0.0
    %2904 = vmatpush1.msra.mxu0 0.0
    %2905 = vmatprep.subr.mxu0 0.0
    %2906 = vmatpush1.msra.mxu0 0.0
    %2907 = vmatprep.subr.mxu0 0.0
    %2908 = vmatpush1.msra.mxu0 0.0
    %2909 = vmatprep.subr.mxu0 0.0
    %2910 = vmatpush1.msra.mxu0 0.0
    %2911 = vmatprep.subr.mxu0 0.0
    %2912 = vmatpush1.msra.mxu0 0.0
    %2913 = vmatprep.subr.mxu0 0.0
    %2914 = vmatpush1.msra.mxu0 0.0
    %2915 = vmatprep.subr.mxu0 0.0
    %2916 = vmatpush1.msra.mxu0 0.0
    %2917 = vmatprep.subr.mxu0 0.0
    %2918 = vmatpush1.msra.mxu0 %v2882
    %2919 = vmatprep.subr.mxu0 0.0
    %2920 = vmatpush2.msra.mxu0 0.0
    %2921 = vmatprep.subr.mxu0 0.0
    %2922 = vmatpush2.msra.mxu0 0.0
    %2923 = vmatprep.subr.mxu0 0.0
    %2924 = vmatpush2.msra.mxu0 0.0
    %2925 = vmatprep.subr.mxu0 0.0
    %2926 = vmatpush2.msra.mxu0 0.0
    %2927 = vmatprep.subr.mxu0 0.0
    %2928 = vmatpush2.msra.mxu0 0.0
    %2929 = vmatprep.subr.mxu0 0.0
    %2930 = vmatpush2.msra.mxu0 0.0
    %2931 = vmatprep.subr.mxu0 0.0
    %2932 = vmatpush2.msra.mxu0 0.0
    %2933 = vmatprep.subr.mxu0 0.0
    %2934 = vmatpush2.msra.mxu0 0.0
    %2935 = vmatprep.subr.mxu0 0.0
    %2936 = vmatpush2.msra.mxu0 0.0
    %2937 = vmatprep.subr.mxu0 0.0
    %2938 = vmatpush2.msra.mxu0 0.0
    %2939 = vmatprep.subr.mxu0 0.0
    %2940 = vmatpush2.msra.mxu0 0.0
    %2941 = vmatprep.subr.mxu0 0.0
    %2942 = vmatpush2.msra.mxu0 0.0
    %2943 = vmatprep.subr.mxu0 0.0
    %2944 = vmatpush2.msra.mxu0 0.0
    %2945 = vmatprep.subr.mxu0 0.0
    %2946 = vmatpush2.msra.mxu0 0.0
    %2947 = vmatprep.subr.mxu0 0.0
    %2948 = vmatpush2.msra.mxu0 0.0
    %2949 = vmatprep.subr.mxu0 0.0
    %2950 = vmatpush2.msra.mxu0 0.0
    %2951 = vmatprep.mubr.f32.mxu0 0.0
    %2952 = vmatmul.mubr.f32.gmra.mxu0 %v2885
    %v2953 = vpop.f32.mrf.mxu0
    %v2954 = vadd.f32 0.0, %v2953
    %v2955 = vpop.f32.mrf.mxu0
    %2956 = vdwg.mxu0
    %2957 = vrot.lane.b32.xlu0 %v1939, 112
    %v2958 = vpop.permute.xlu0 %2957
    %2959 = vrot.lane.b32.xlu0 %v1939, 80
    %v2960 = vpop.permute.xlu0 %2959
    %v2961 = vsel %vm177, %v2958, 0
    %v2963 = vsel %vm177, %v2960, 0
    %2965 = vmatprep.subr.mxu0 0.0
    %2966 = vmatpush1.xpose.msra.mxu0 0.0
    %2967 = vmatprep.subr.mxu0 0.0
    %2968 = vmatpush1.xpose.msra.mxu0 0.0
    %2969 = vmatprep.subr.mxu0 0.0
    %2970 = vmatpush1.xpose.msra.mxu0 0.0
    %2971 = vmatprep.subr.mxu0 0.0
    %2972 = vmatpush1.xpose.msra.mxu0 0.0
    %2973 = vmatprep.subr.mxu0 0.0
    %2974 = vmatpush1.xpose.msra.mxu0 0.0
    %2975 = vmatprep.subr.mxu0 0.0
    %2976 = vmatpush1.xpose.msra.mxu0 0.0
    %2977 = vmatprep.subr.mxu0 0.0
    %2978 = vmatpush1.xpose.msra.mxu0 0.0
    %2979 = vmatprep.subr.mxu0 0.0
    %2980 = vmatpush1.xpose.msra.mxu0 0.0
    %2981 = vmatprep.subr.mxu0 0.0
    %2982 = vmatpush1.xpose.msra.mxu0 0.0
    %2983 = vmatprep.subr.mxu0 0.0
    %2984 = vmatpush1.xpose.msra.mxu0 0.0
    %2985 = vmatprep.subr.mxu0 0.0
    %2986 = vmatpush1.xpose.msra.mxu0 0.0
    %2987 = vmatprep.subr.mxu0 0.0
    %2988 = vmatpush1.xpose.msra.mxu0 0.0
    %2989 = vmatprep.subr.mxu0 0.0
    %2990 = vmatpush1.xpose.msra.mxu0 0.0
    %2991 = vmatprep.subr.mxu0 0.0
    %2992 = vmatpush1.xpose.msra.mxu0 0.0
    %2993 = vmatprep.subr.mxu0 0.0
    %2994 = vmatpush1.xpose.msra.mxu0 0.0
    %2995 = vmatprep.subr.mxu0 0.0
    %2996 = vmatpush1.xpose.msra.mxu0 %v2963
    %2997 = vmatprep.subr.mxu0 0.0
    %2998 = vmatpush2.xpose.msra.mxu0 0.0
    %2999 = vmatprep.subr.mxu0 0.0
    %3000 = vmatpush2.xpose.msra.mxu0 0.0
    %3001 = vmatprep.subr.mxu0 0.0
    %3002 = vmatpush2.xpose.msra.mxu0 0.0
    %3003 = vmatprep.subr.mxu0 0.0
    %3004 = vmatpush2.xpose.msra.mxu0 0.0
    %3005 = vmatprep.subr.mxu0 0.0
    %3006 = vmatpush2.xpose.msra.mxu0 0.0
    %3007 = vmatprep.subr.mxu0 0.0
    %3008 = vmatpush2.xpose.msra.mxu0 0.0
    %3009 = vmatprep.subr.mxu0 0.0
    %3010 = vmatpush2.xpose.msra.mxu0 0.0
    %3011 = vmatprep.subr.mxu0 0.0
    %3012 = vmatpush2.xpose.msra.mxu0 0.0
    %3013 = vmatprep.subr.mxu0 0.0
    %3014 = vmatpush2.xpose.msra.mxu0 0.0
    %3015 = vmatprep.subr.mxu0 0.0
    %3016 = vmatpush2.xpose.msra.mxu0 0.0
    %3017 = vmatprep.subr.mxu0 0.0
    %3018 = vmatpush2.xpose.msra.mxu0 0.0
    %3019 = vmatprep.subr.mxu0 0.0
    %3020 = vmatpush2.xpose.msra.mxu0 0.0
    %3021 = vmatprep.subr.mxu0 0.0
    %3022 = vmatpush2.xpose.msra.mxu0 0.0
    %3023 = vmatprep.subr.mxu0 0.0
    %3024 = vmatpush2.xpose.msra.mxu0 0.0
    %3025 = vmatprep.subr.mxu0 0.0
    %3026 = vmatpush2.xpose.msra.mxu0 0.0
    %3027 = vmatprep.subr.mxu0 0.0
    %3028 = vmatpush2.xpose.msra.mxu0 0.0
    %3029 = vmatprep.mubr.f32.mxu0 0.0
    %3030 = vmatmul.mubr.f32.gmra.mxu0 %v2961
    %v3031 = vpop.f32.mrf.mxu0
    %v3032 = vadd.f32 0.0, %v3031
    %v3033 = vpop.f32.mrf.mxu0
    %3034 = vdwg.mxu0
    %v3035 = vmul.f32 %v3032, 0.35355338
    %v3036 = vadd.f32 %v3035, %v944
    %v3037 = vsel %vm177, %v3036, -inf
    %3038 = vmax.xlane.f32.xlu0 %v3037
    %v3039 = vpop.xlane.xlu0 %3038
    %v3040 = vsub.f32 %v3036, %v3039
    %v3041 = vmul.f32 %v3040, 1.442695
    %v3042 = vpow.pop %v3041
    %v3043 = vsel %vm177, %v3042, 0.0
    %3044 = vadd.xlane.f32.xlu0 %v3043
    %v3045 = vpop.xlane.xlu0 %3044
    %v3046 = vrcp.pop %v3045
    %v3047 = vmul.f32 %v3042, %v3046
    %3048 = vrot.lane.b32.xlu0 %v1939, 48
    %v3049 = vpop.permute.xlu0 %3048
    %v3052 = vsel %vm177, %v3047, 0
    %3054 = vmatprep.subr.mxu0 0.0
    %3055 = vmatpush1.msra.mxu0 0.0
    %3056 = vmatprep.subr.mxu0 0.0
    %3057 = vmatpush1.msra.mxu0 0.0
    %3058 = vmatprep.subr.mxu0 0.0
    %3059 = vmatpush1.msra.mxu0 0.0
    %3060 = vmatprep.subr.mxu0 0.0
    %3061 = vmatpush1.msra.mxu0 0.0
    %3062 = vmatprep.subr.mxu0 0.0
    %3063 = vmatpush1.msra.mxu0 0.0
    %3064 = vmatprep.subr.mxu0 0.0
    %3065 = vmatpush1.msra.mxu0 0.0
    %3066 = vmatprep.subr.mxu0 0.0
    %3067 = vmatpush1.msra.mxu0 0.0
    %3068 = vmatprep.subr.mxu0 0.0
    %3069 = vmatpush1.msra.mxu0 0.0
    %3070 = vmatprep.subr.mxu0 0.0
    %3071 = vmatpush1.msra.mxu0 0.0
    %3072 = vmatprep.subr.mxu0 0.0
    %3073 = vmatpush1.msra.mxu0 0.0
    %3074 = vmatprep.subr.mxu0 0.0
    %3075 = vmatpush1.msra.mxu0 0.0
    %3076 = vmatprep.subr.mxu0 0.0
    %3077 = vmatpush1.msra.mxu0 0.0
    %3078 = vmatprep.subr.mxu0 0.0
    %3079 = vmatpush1.msra.mxu0 0.0
    %3080 = vmatprep.subr.mxu0 0.0
    %3081 = vmatpush1.msra.mxu0 0.0
    %3082 = vmatprep.subr.mxu0 0.0
    %3083 = vmatpush1.msra.mxu0 0.0
    %3084 = vmatprep.subr.mxu0 0.0
    %3085 = vmatpush1.msra.mxu0 %v3049
    %3086 = vmatprep.subr.mxu0 0.0
    %3087 = vmatpush2.msra.mxu0 0.0
    %3088 = vmatprep.subr.mxu0 0.0
    %3089 = vmatpush2.msra.mxu0 0.0
    %3090 = vmatprep.subr.mxu0 0.0
    %3091 = vmatpush2.msra.mxu0 0.0
    %3092 = vmatprep.subr.mxu0 0.0
    %3093 = vmatpush2.msra.mxu0 0.0
    %3094 = vmatprep.subr.mxu0 0.0
    %3095 = vmatpush2.msra.mxu0 0.0
    %3096 = vmatprep.subr.mxu0 0.0
    %3097 = vmatpush2.msra.mxu0 0.0
    %3098 = vmatprep.subr.mxu0 0.0
    %3099 = vmatpush2.msra.mxu0 0.0
    %3100 = vmatprep.subr.mxu0 0.0
    %3101 = vmatpush2.msra.mxu0 0.0
    %3102 = vmatprep.subr.mxu0 0.0
    %3103 = vmatpush2.msra.mxu0 0.0
    %3104 = vmatprep.subr.mxu0 0.0
    %3105 = vmatpush2.msra.mxu0 0.0
    %3106 = vmatprep.subr.mxu0 0.0
    %3107 = vmatpush2.msra.mxu0 0.0
    %3108 = vmatprep.subr.mxu0 0.0
    %3109 = vmatpush2.msra.mxu0 0.0
    %3110 = vmatprep.subr.mxu0 0.0
    %3111 = vmatpush2.msra.mxu0 0.0
    %3112 = vmatprep.subr.mxu0 0.0
    %3113 = vmatpush2.msra.mxu0 0.0
    %3114 = vmatprep.subr.mxu0 0.0
    %3115 = vmatpush2.msra.mxu0 0.0
    %3116 = vmatprep.subr.mxu0 0.0
    %3117 = vmatpush2.msra.mxu0 0.0
    %3118 = vmatprep.mubr.f32.mxu0 0.0
    %3119 = vmatmul.mubr.f32.gmra.mxu0 %v3052
    %v3120 = vpop.f32.mrf.mxu0
    %v3121 = vadd.f32 0.0, %v3120
    %v3122 = vpop.f32.mrf.mxu0
    %3123 = vdwg.mxu0
    %3124 = vrot.lane.b32.xlu0 %v1939, 104
    %v3125 = vpop.permute.xlu0 %3124
    %3126 = vrot.lane.b32.xlu0 %v1939, 72
    %v3127 = vpop.permute.xlu0 %3126
    %v3128 = vsel %vm177, %v3125, 0
    %v3130 = vsel %vm177, %v3127, 0
    %3132 = vmatprep.subr.mxu0 0.0
    %3133 = vmatpush1.xpose.msra.mxu0 0.0
    %3134 = vmatprep.subr.mxu0 0.0
    %3135 = vmatpush1.xpose.msra.mxu0 0.0
    %3136 = vmatprep.subr.mxu0 0.0
    %3137 = vmatpush1.xpose.msra.mxu0 0.0
    %3138 = vmatprep.subr.mxu0 0.0
    %3139 = vmatpush1.xpose.msra.mxu0 0.0
    %3140 = vmatprep.subr.mxu0 0.0
    %3141 = vmatpush1.xpose.msra.mxu0 0.0
    %3142 = vmatprep.subr.mxu0 0.0
    %3143 = vmatpush1.xpose.msra.mxu0 0.0
    %3144 = vmatprep.subr.mxu0 0.0
    %3145 = vmatpush1.xpose.msra.mxu0 0.0
    %3146 = vmatprep.subr.mxu0 0.0
    %3147 = vmatpush1.xpose.msra.mxu0 0.0
    %3148 = vmatprep.subr.mxu0 0.0
    %3149 = vmatpush1.xpose.msra.mxu0 0.0
    %3150 = vmatprep.subr.mxu0 0.0
    %3151 = vmatpush1.xpose.msra.mxu0 0.0
    %3152 = vmatprep.subr.mxu0 0.0
    %3153 = vmatpush1.xpose.msra.mxu0 0.0
    %3154 = vmatprep.subr.mxu0 0.0
    %3155 = vmatpush1.xpose.msra.mxu0 0.0
    %3156 = vmatprep.subr.mxu0 0.0
    %3157 = vmatpush1.xpose.msra.mxu0 0.0
    %3158 = vmatprep.subr.mxu0 0.0
    %3159 = vmatpush1.xpose.msra.mxu0 0.0
    %3160 = vmatprep.subr.mxu0 0.0
    %3161 = vmatpush1.xpose.msra.mxu0 0.0
    %3162 = vmatprep.subr.mxu0 0.0
    %3163 = vmatpush1.xpose.msra.mxu0 %v3130
    %3164 = vmatprep.subr.mxu0 0.0
    %3165 = vmatpush2.xpose.msra.mxu0 0.0
    %3166 = vmatprep.subr.mxu0 0.0
    %3167 = vmatpush2.xpose.msra.mxu0 0.0
    %3168 = vmatprep.subr.mxu0 0.0
    %3169 = vmatpush2.xpose.msra.mxu0 0.0
    %3170 = vmatprep.subr.mxu0 0.0
    %3171 = vmatpush2.xpose.msra.mxu0 0.0
    %3172 = vmatprep.subr.mxu0 0.0
    %3173 = vmatpush2.xpose.msra.mxu0 0.0
    %3174 = vmatprep.subr.mxu0 0.0
    %3175 = vmatpush2.xpose.msra.mxu0 0.0
    %3176 = vmatprep.subr.mxu0 0.0
    %3177 = vmatpush2.xpose.msra.mxu0 0.0
    %3178 = vmatprep.subr.mxu0 0.0
    %3179 = vmatpush2.xpose.msra.mxu0 0.0
    %3180 = vmatprep.subr.mxu0 0.0
    %3181 = vmatpush2.xpose.msra.mxu0 0.0
    %3182 = vmatprep.subr.mxu0 0.0
    %3183 = vmatpush2.xpose.msra.mxu0 0.0
    %3184 = vmatprep.subr.mxu0 0.0
    %3185 = vmatpush2.xpose.msra.mxu0 0.0
    %3186 = vmatprep.subr.mxu0 0.0
    %3187 = vmatpush2.xpose.msra.mxu0 0.0
    %3188 = vmatprep.subr.mxu0 0.0
    %3189 = vmatpush2.xpose.msra.mxu0 0.0
    %3190 = vmatprep.subr.mxu0 0.0
    %3191 = vmatpush2.xpose.msra.mxu0 0.0
    %3192 = vmatprep.subr.mxu0 0.0
    %3193 = vmatpush2.xpose.msra.mxu0 0.0
    %3194 = vmatprep.subr.mxu0 0.0
    %3195 = vmatpush2.xpose.msra.mxu0 0.0
    %3196 = vmatprep.mubr.f32.mxu0 0.0
    %3197 = vmatmul.mubr.f32.gmra.mxu0 %v3128
    %v3198 = vpop.f32.mrf.mxu0
    %v3199 = vadd.f32 0.0, %v3198
    %v3200 = vpop.f32.mrf.mxu0
    %3201 = vdwg.mxu0
    %v3202 = vmul.f32 %v3199, 0.35355338
    %v3203 = vadd.f32 %v3202, %v944
    %v3204 = vsel %vm177, %v3203, -inf
    %3205 = vmax.xlane.f32.xlu0 %v3204
    %v3206 = vpop.xlane.xlu0 %3205
    %v3207 = vsub.f32 %v3203, %v3206
    %v3208 = vmul.f32 %v3207, 1.442695
    %v3209 = vpow.pop %v3208
    %v3210 = vsel %vm177, %v3209, 0.0
    %3211 = vadd.xlane.f32.xlu0 %v3210
    %v3212 = vpop.xlane.xlu0 %3211
    %v3213 = vrcp.pop %v3212
    %v3214 = vmul.f32 %v3209, %v3213
    %3215 = vrot.lane.b32.xlu0 %v1939, 40
    %v3216 = vpop.permute.xlu0 %3215
    %v3219 = vsel %vm177, %v3214, 0
    %3221 = vmatprep.subr.mxu0 0.0
    %3222 = vmatpush1.msra.mxu0 0.0
    %3223 = vmatprep.subr.mxu0 0.0
    %3224 = vmatpush1.msra.mxu0 0.0
    %3225 = vmatprep.subr.mxu0 0.0
    %3226 = vmatpush1.msra.mxu0 0.0
    %3227 = vmatprep.subr.mxu0 0.0
    %3228 = vmatpush1.msra.mxu0 0.0
    %3229 = vmatprep.subr.mxu0 0.0
    %3230 = vmatpush1.msra.mxu0 0.0
    %3231 = vmatprep.subr.mxu0 0.0
    %3232 = vmatpush1.msra.mxu0 0.0
    %3233 = vmatprep.subr.mxu0 0.0
    %3234 = vmatpush1.msra.mxu0 0.0
    %3235 = vmatprep.subr.mxu0 0.0
    %3236 = vmatpush1.msra.mxu0 0.0
    %3237 = vmatprep.subr.mxu0 0.0
    %3238 = vmatpush1.msra.mxu0 0.0
    %3239 = vmatprep.subr.mxu0 0.0
    %3240 = vmatpush1.msra.mxu0 0.0
    %3241 = vmatprep.subr.mxu0 0.0
    %3242 = vmatpush1.msra.mxu0 0.0
    %3243 = vmatprep.subr.mxu0 0.0
    %3244 = vmatpush1.msra.mxu0 0.0
    %3245 = vmatprep.subr.mxu0 0.0
    %3246 = vmatpush1.msra.mxu0 0.0
    %3247 = vmatprep.subr.mxu0 0.0
    %3248 = vmatpush1.msra.mxu0 0.0
    %3249 = vmatprep.subr.mxu0 0.0
    %3250 = vmatpush1.msra.mxu0 0.0
    %3251 = vmatprep.subr.mxu0 0.0
    %3252 = vmatpush1.msra.mxu0 %v3216
    %3253 = vmatprep.subr.mxu0 0.0
    %3254 = vmatpush2.msra.mxu0 0.0
    %3255 = vmatprep.subr.mxu0 0.0
    %3256 = vmatpush2.msra.mxu0 0.0
    %3257 = vmatprep.subr.mxu0 0.0
    %3258 = vmatpush2.msra.mxu0 0.0
    %3259 = vmatprep.subr.mxu0 0.0
    %3260 = vmatpush2.msra.mxu0 0.0
    %3261 = vmatprep.subr.mxu0 0.0
    %3262 = vmatpush2.msra.mxu0 0.0
    %3263 = vmatprep.subr.mxu0 0.0
    %3264 = vmatpush2.msra.mxu0 0.0
    %3265 = vmatprep.subr.mxu0 0.0
    %3266 = vmatpush2.msra.mxu0 0.0
    %3267 = vmatprep.subr.mxu0 0.0
    %3268 = vmatpush2.msra.mxu0 0.0
    %3269 = vmatprep.subr.mxu0 0.0
    %3270 = vmatpush2.msra.mxu0 0.0
    %3271 = vmatprep.subr.mxu0 0.0
    %3272 = vmatpush2.msra.mxu0 0.0
    %3273 = vmatprep.subr.mxu0 0.0
    %3274 = vmatpush2.msra.mxu0 0.0
    %3275 = vmatprep.subr.mxu0 0.0
    %3276 = vmatpush2.msra.mxu0 0.0
    %3277 = vmatprep.subr.mxu0 0.0
    %3278 = vmatpush2.msra.mxu0 0.0
    %3279 = vmatprep.subr.mxu0 0.0
    %3280 = vmatpush2.msra.mxu0 0.0
    %3281 = vmatprep.subr.mxu0 0.0
    %3282 = vmatpush2.msra.mxu0 0.0
    %3283 = vmatprep.subr.mxu0 0.0
    %3284 = vmatpush2.msra.mxu0 0.0
    %3285 = vmatprep.mubr.f32.mxu0 0.0
    %3286 = vmatmul.mubr.f32.gmra.mxu0 %v3219
    %v3287 = vpop.f32.mrf.mxu0
    %v3288 = vadd.f32 0.0, %v3287
    %v3289 = vpop.f32.mrf.mxu0
    %3290 = vdwg.mxu0
    %3292 = vrot.lane.b32.xlu0 %v2954, 8
    %v3293 = vpop.permute.xlu0 %3292
    %3296 = vrot.lane.b32.xlu0 %v3121, 16
    %v3297 = vpop.permute.xlu0 %3296
    %3300 = vrot.lane.b32.xlu0 %v3288, 24
    %v3301 = vpop.permute.xlu0 %3300
    %v3303 = vsel %vm177, %v2787, %v3293
    %v3304 = vsel %vm859, %v3303, %v3297
    %v3305 = vsel %vm861, %v3304, %v3301
    %s3306 = scalar_lea.vmem %s6, 16
    %v3307 = vld [vmem:[%s3306] sm:$0xf]
    %v3308 = vld [vmem:[%s3306 + $0x4] sm:$0xf]
    %v3309 = vld [vmem:[%s3306 + $0x8] sm:$0xf]
    %v3310 = vld [vmem:[%s3306 + $0xc] sm:$0xf]
    %v3311 = vpack.c.bf16 %v3305, %v2623
    %s3312 = scalar_lea.vmem %s7, 1
    %v3313 = vld [vmem:[%s3312] sm:$0x1]
    %v3315 = vlaneseq
    %v3316 = vshrl.u32 %v3315, 7
    %v3317 = vsub.s32 0, %v3316
    %v3318 = vrot.slane %v3313, %v3317
    %v3324 = vunpack.c.l.b16 %v3307
    %v3325 = vunpack.c.l.b16 %v3308
    %v3326 = vunpack.c.l.b16 %v3309
    %v3327 = vunpack.c.l.b16 %v3310
    %v3328 = vpack.c.b16 %v3325, %v3324
    %v3329 = vpack.c.b16 %v3327, %v3326
    %v3333 = vsel %vm59, %v3311, 0
    %3335 = vmatprep.subr.bf16.mxu0 0
    %3336 = vmatpush1.bf16.msra.mxu0 0
    %3337 = vmatprep.subr.bf16.mxu0 0
    %3338 = vmatpush1.bf16.msra.mxu0 0
    %3339 = vmatprep.subr.bf16.mxu0 0
    %3340 = vmatpush1.bf16.msra.mxu0 0
    %3341 = vmatprep.subr.bf16.mxu0 0
    %3342 = vmatpush1.bf16.msra.mxu0 0
    %3343 = vmatprep.subr.bf16.mxu0 0
    %3344 = vmatpush1.bf16.msra.mxu0 0
    %3345 = vmatprep.subr.bf16.mxu0 0
    %3346 = vmatpush1.bf16.msra.mxu0 0
    %3347 = vmatprep.subr.bf16.mxu0 0
    %3348 = vmatpush1.bf16.msra.mxu0 %v3329
    %3349 = vmatprep.subr.bf16.mxu0 0
    %3350 = vmatpush1.bf16.msra.mxu0 %v3328
    %3351 = vmatprep.subr.bf16.mxu0 0
    %3352 = vmatpush2.bf16.msra.mxu0 0
    %3353 = vmatprep.subr.bf16.mxu0 0
    %3354 = vmatpush2.bf16.msra.mxu0 0
    %3355 = vmatprep.subr.bf16.mxu0 0
    %3356 = vmatpush2.bf16.msra.mxu0 0
    %3357 = vmatprep.subr.bf16.mxu0 0
    %3358 = vmatpush2.bf16.msra.mxu0 0
    %3359 = vmatprep.subr.bf16.mxu0 0
    %3360 = vmatpush2.bf16.msra.mxu0 0
    %3361 = vmatprep.subr.bf16.mxu0 0
    %3362 = vmatpush2.bf16.msra.mxu0 0
    %3363 = vmatprep.subr.bf16.mxu0 0
    %3364 = vmatpush2.bf16.msra.mxu0 0
    %3365 = vmatprep.subr.bf16.mxu0 0
    %3366 = vmatpush2.bf16.msra.mxu0 0
    %3367 = vmatprep.mubr.bf16.mxu0 0
    %3368 = vmatmul.mubr.bf16.gmra.mxu0 %v3333
    %v3369 = vpop.f32.mrf.mxu0
    %v3370 = vadd.f32 %v3318, %v3369
    %v3371 = vpop.f32.mrf.mxu0
    %v3372 = vpop.f32.mrf.mxu0
    %v3373 = vadd.f32 %v3318, %v3372
    %v3374 = vpop.f32.mrf.mxu0
    %3375 = vdwg.mxu0
    %v3376 = vadd.f32 %v3370, %v1870
    %v3377 = vadd.f32 %v3373, %v1871
    %s3378 = scalar_lea.vmem %s8, 1
    %v3379 = vld [vmem:[%s3378] sm:$0x1]
    %s3380 = scalar_lea.vmem %s9, 1
    %v3381 = vld [vmem:[%s3380] sm:$0x1]
    %v3382 = vsel %vm59, %v3376, 0.0
    %3383 = vadd.xlane.f32.xlu0 %v3382
    %v3384 = vpop.xlane.xlu0 %3383
    %v3385 = vsel %vm59, %v3377, 0.0
    %3386 = vadd.xlane.f32.xlu0 %v3385
    %v3387 = vpop.xlane.xlu0 %3386
    %v3388 = vmul.f32 %v3384, %v66
    %v3389 = vmul.f32 %v3387, %v66
    %v3390 = vsub.f32 %v3376, %v3388
    %v3391 = vsub.f32 %v3377, %v3389
    %v3392 = vmul.f32 %v3390, %v3390
    %v3393 = vmul.f32 %v3391, %v3391
    %v3394 = vsel %vm59, %v3392, 0.0
    %3395 = vadd.xlane.f32.xlu0 %v3394
    %v3396 = vpop.xlane.xlu0 %3395
    %v3397 = vsel %vm59, %v3393, 0.0
    %3398 = vadd.xlane.f32.xlu0 %v3397
    %v3399 = vpop.xlane.xlu0 %3398
    %v3400 = vmul.f32 %v3396, %v66
    %v3401 = vmul.f32 %v3399, %v66
    %v3402 = vadd.f32 %v3400, 1e-12
    %v3403 = vadd.f32 %v3401, 1e-12
    %v3404 = vrsqrt.pop %v3402
    %v3405 = vrsqrt.pop %v3403
    %v3406 = vmul.f32 %v3390, %v3404
    %v3407 = vmul.f32 %v3391, %v3405
    %v3409 = vlaneseq
    %v3410 = vshrl.u32 %v3409, 7
    %v3411 = vsub.s32 0, %v3410
    %v3412 = vrot.slane %v3379, %v3411
    %v3414 = vmul.f32 %v3406, %v3412
    %v3415 = vmul.f32 %v3407, %v3412
    %v3417 = vlaneseq
    %v3418 = vshrl.u32 %v3417, 7
    %v3419 = vsub.s32 0, %v3418
    %v3420 = vrot.slane %v3381, %v3419
    %v3422 = vadd.f32 %v3414, %v3420
    %v3423 = vadd.f32 %v3415, %v3420
    %s3424 = scalar_lea.vmem %s10, 16
    %v3425 = vld [vmem:[%s3424] sm:$0xf]
    %v3426 = vld [vmem:[%s3424 + $0x4] sm:$0xf]
    %v3427 = vld [vmem:[%s3424 + $0x8] sm:$0xf]
    %v3428 = vld [vmem:[%s3424 + $0xc] sm:$0xf]
    %v3429 = vpack.c.bf16 %v3423, %v3422
    %s3430 = scalar_lea.vmem %s11, 1
    %v3431 = vld [vmem:[%s3430] sm:$0x1]
    %v3433 = vlaneseq
    %v3434 = vshrl.u32 %v3433, 7
    %v3435 = vsub.s32 0, %v3434
    %v3436 = vrot.slane %v3431, %v3435
    %v3442 = vunpack.c.l.b16 %v3425
    %v3443 = vunpack.c.l.b16 %v3426
    %v3444 = vunpack.c.l.b16 %v3427
    %v3445 = vunpack.c.l.b16 %v3428
    %v3446 = vpack.c.b16 %v3443, %v3442
    %v3447 = vpack.c.b16 %v3445, %v3444
    %v3451 = vsel %vm59, %v3429, 0
    %3453 = vmatprep.subr.bf16.mxu0 0
    %3454 = vmatpush1.bf16.msra.mxu0 0
    %3455 = vmatprep.subr.bf16.mxu0 0
    %3456 = vmatpush1.bf16.msra.mxu0 0
    %3457 = vmatprep.subr.bf16.mxu0 0
    %3458 = vmatpush1.bf16.msra.mxu0 0
    %3459 = vmatprep.subr.bf16.mxu0 0
    %3460 = vmatpush1.bf16.msra.mxu0 0
    %3461 = vmatprep.subr.bf16.mxu0 0
    %3462 = vmatpush1.bf16.msra.mxu0 0
    %3463 = vmatprep.subr.bf16.mxu0 0
    %3464 = vmatpush1.bf16.msra.mxu0 0
    %3465 = vmatprep.subr.bf16.mxu0 0
    %3466 = vmatpush1.bf16.msra.mxu0 %v3447
    %3467 = vmatprep.subr.bf16.mxu0 0
    %3468 = vmatpush1.bf16.msra.mxu0 %v3446
    %3469 = vmatprep.subr.bf16.mxu0 0
    %3470 = vmatpush2.bf16.msra.mxu0 0
    %3471 = vmatprep.subr.bf16.mxu0 0
    %3472 = vmatpush2.bf16.msra.mxu0 0
    %3473 = vmatprep.subr.bf16.mxu0 0
    %3474 = vmatpush2.bf16.msra.mxu0 0
    %3475 = vmatprep.subr.bf16.mxu0 0
    %3476 = vmatpush2.bf16.msra.mxu0 0
    %3477 = vmatprep.subr.bf16.mxu0 0
    %3478 = vmatpush2.bf16.msra.mxu0 0
    %3479 = vmatprep.subr.bf16.mxu0 0
    %3480 = vmatpush2.bf16.msra.mxu0 0
    %3481 = vmatprep.subr.bf16.mxu0 0
    %3482 = vmatpush2.bf16.msra.mxu0 0
    %3483 = vmatprep.subr.bf16.mxu0 0
    %3484 = vmatpush2.bf16.msra.mxu0 0
    %3485 = vmatprep.mubr.bf16.mxu0 0
    %3486 = vmatmul.mubr.bf16.gmra.mxu0 %v3451
    %v3487 = vpop.f32.mrf.mxu0
    %v3488 = vadd.f32 %v3436, %v3487
    %v3489 = vpop.f32.mrf.mxu0
    %v3490 = vpop.f32.mrf.mxu0
    %v3491 = vadd.f32 %v3436, %v3490
    %v3492 = vpop.f32.mrf.mxu0
    %3493 = vdwg.mxu0
    %v3494 = vmul.f32 %v3488, 0.5
    %v3495 = vmul.f32 %v3491, 0.5
    %v3496 = vmul.f32 %v3488, 0.70710677
    %v3497 = vmul.f32 %v3491, 0.70710677
    %v3498 = verf.f32.pop %v3496
    %v3499 = verf.f32.pop %v3497
    %v3500 = vadd.f32 %v3498, 1.0
    %v3501 = vadd.f32 %v3499, 1.0
    %v3502 = vmul.f32 %v3494, %v3500
    %v3503 = vmul.f32 %v3495, %v3501
    %s3504 = scalar_lea.vmem %s12, 32
    %v3505 = vld [vmem:[%s3504] sm:$0xf]
    %v3506 = vld [vmem:[%s3504 + $0x4] sm:$0xf]
    %v3507 = vld [vmem:[%s3504 + $0x8] sm:$0xf]
    %v3508 = vld [vmem:[%s3504 + $0xc] sm:$0xf]
    %v3509 = vld [vmem:[%s3504 + $0x10] sm:$0xf]
    %v3510 = vld [vmem:[%s3504 + $0x14] sm:$0xf]
    %v3511 = vld [vmem:[%s3504 + $0x18] sm:$0xf]
    %v3512 = vld [vmem:[%s3504 + $0x1c] sm:$0xf]
    %v3513 = vpack.c.bf16 %v3503, %v3502
    %s3514 = scalar_lea.vmem %s13, 1
    %v3515 = vld [vmem:[%s3514] sm:$0x1]
    %v3517 = vlaneseq
    %v3518 = vshrl.u32 %v3517, 7
    %v3519 = vsub.s32 0, %v3518
    %v3520 = vrot.slane %v3515, %v3519
    %v3530 = vunpack.c.l.b16 %v3505
    %v3531 = vunpack.c.l.b16 %v3506
    %v3532 = vunpack.c.l.b16 %v3507
    %v3533 = vunpack.c.l.b16 %v3508
    %v3534 = vunpack.c.l.b16 %v3509
    %v3535 = vunpack.c.l.b16 %v3510
    %v3536 = vunpack.c.l.b16 %v3511
    %v3537 = vunpack.c.l.b16 %v3512
    %v3538 = vpack.c.b16 %v3531, %v3530
    %v3539 = vpack.c.b16 %v3533, %v3532
    %v3540 = vpack.c.b16 %v3535, %v3534
    %v3541 = vpack.c.b16 %v3537, %v3536
    %v3547 = vsel %vm1781, %v3513, 0
    %3549 = vmatprep.subr.bf16.mxu0 0
    %3550 = vmatpush1.bf16.msra.mxu0 0
    %3551 = vmatprep.subr.bf16.mxu0 0
    %3552 = vmatpush1.bf16.msra.mxu0 0
    %3553 = vmatprep.subr.bf16.mxu0 0
    %3554 = vmatpush1.bf16.msra.mxu0 0
    %3555 = vmatprep.subr.bf16.mxu0 0
    %3556 = vmatpush1.bf16.msra.mxu0 0
    %3557 = vmatprep.subr.bf16.mxu0 0
    %3558 = vmatpush1.bf16.msra.mxu0 %v3541
    %3559 = vmatprep.subr.bf16.mxu0 0
    %3560 = vmatpush1.bf16.msra.mxu0 %v3540
    %3561 = vmatprep.subr.bf16.mxu0 0
    %3562 = vmatpush1.bf16.msra.mxu0 %v3539
    %3563 = vmatprep.subr.bf16.mxu0 0
    %3564 = vmatpush1.bf16.msra.mxu0 %v3538
    %3565 = vmatprep.subr.bf16.mxu0 0
    %3566 = vmatpush2.bf16.msra.mxu0 0
    %3567 = vmatprep.subr.bf16.mxu0 0
    %3568 = vmatpush2.bf16.msra.mxu0 0
    %3569 = vmatprep.subr.bf16.mxu0 0
    %3570 = vmatpush2.bf16.msra.mxu0 0
    %3571 = vmatprep.subr.bf16.mxu0 0
    %3572 = vmatpush2.bf16.msra.mxu0 0
    %3573 = vmatprep.subr.bf16.mxu0 0
    %3574 = vmatpush2.bf16.msra.mxu0 0
    %3575 = vmatprep.subr.bf16.mxu0 0
    %3576 = vmatpush2.bf16.msra.mxu0 0
    %3577 = vmatprep.subr.bf16.mxu0 0
    %3578 = vmatpush2.bf16.msra.mxu0 0
    %3579 = vmatprep.subr.bf16.mxu0 0
    %3580 = vmatpush2.bf16.msra.mxu0 0
    %3581 = vmatprep.mubr.bf16.mxu0 0
    %3582 = vmatmul.mubr.bf16.gmra.mxu0 %v3547
    %v3583 = vpop.f32.mrf.mxu0
    %v3584 = vadd.f32 %v3520, %v3583
    %v3585 = vpop.f32.mrf.mxu0
    %v3586 = vpop.f32.mrf.mxu0
    %v3587 = vadd.f32 %v3520, %v3586
    %v3588 = vpop.f32.mrf.mxu0
    %3589 = vdwg.mxu0
    %v3590 = vadd.f32 %v3584, %v3422
    %v3591 = vadd.f32 %v3587, %v3423
    %s3592 = scalar_lea.vmem %s14, 1
    %v3593 = vld [vmem:[%s3592] sm:$0x1]
    %s3594 = scalar_lea.vmem %s15, 1
    %v3595 = vld [vmem:[%s3594] sm:$0x1]
    %v3596 = vsel %vm59, %v3590, 0.0
    %3597 = vadd.xlane.f32.xlu0 %v3596
    %v3598 = vpop.xlane.xlu0 %3597
    %v3599 = vsel %vm59, %v3591, 0.0
    %3600 = vadd.xlane.f32.xlu0 %v3599
    %v3601 = vpop.xlane.xlu0 %3600
    %v3602 = vmul.f32 %v3598, %v66
    %v3603 = vmul.f32 %v3601, %v66
    %v3604 = vsub.f32 %v3590, %v3602
    %v3605 = vsub.f32 %v3591, %v3603
    %v3606 = vmul.f32 %v3604, %v3604
    %v3607 = vmul.f32 %v3605, %v3605
    %v3608 = vsel %vm59, %v3606, 0.0
    %3609 = vadd.xlane.f32.xlu0 %v3608
    %v3610 = vpop.xlane.xlu0 %3609
    %v3611 = vsel %vm59, %v3607, 0.0
    %3612 = vadd.xlane.f32.xlu0 %v3611
    %v3613 = vpop.xlane.xlu0 %3612
    %v3614 = vmul.f32 %v3610, %v66
    %v3615 = vmul.f32 %v3613, %v66
    %v3616 = vadd.f32 %v3614, 1e-12
    %v3617 = vadd.f32 %v3615, 1e-12
    %v3618 = vrsqrt.pop %v3616
    %v3619 = vrsqrt.pop %v3617
    %v3620 = vmul.f32 %v3604, %v3618
    %v3621 = vmul.f32 %v3605, %v3619
    %v3623 = vlaneseq
    %v3624 = vshrl.u32 %v3623, 7
    %v3625 = vsub.s32 0, %v3624
    %v3626 = vrot.slane %v3593, %v3625
    %v3628 = vmul.f32 %v3620, %v3626
    %v3629 = vmul.f32 %v3621, %v3626
    %v3631 = vlaneseq
    %v3632 = vshrl.u32 %v3631, 7
    %v3633 = vsub.s32 0, %v3632
    %v3634 = vrot.slane %v3595, %v3633
    %v3636 = vadd.f32 %v3628, %v3634
    %v3637 = vadd.f32 %v3629, %v3634
    %3638 = vst.msk [vmem:[#allocation2] sm:$0xff] %vm59, %v3636
    %3639 = vst.msk [vmem:[#allocation2 + $0x8] sm:$0xff] %vm59, %v3637
    // Predicated region
    $region66: #{bert_forward.1} parent=1 // pred_check
      _
    $region67: #{bert_forward.1} parent=1 // pred_check_branch
      %3641 = sbr.rel (0) target = $region69
    $region68: #{bert_forward.1} parent=1 // pred_region
      %s3643 = ssub.s32 256, 256
      %3644 = vsyncadd [#allocation3], %s3643
      %s3645 = sshll.u32 [#allocation2], 4
      %s3646 = int_to_ptr.vmem [resolvable:$true] %s3645
      %3651 = dma.vmem_to_hbm [thread:$0]  %s3646, 256, %s16, [#allocation3], 128, 128, 8
    $region69: #{bert_forward.1} parent=1 // pred_fallthru
      _
    // Predicated region
    $region70: #{bert_forward.1} parent=1 // pred_check
      _
    $region71: #{bert_forward.1} parent=1 // pred_check_branch
      %3653 = sbr.rel (0) target = $region73
    $region72: #{bert_forward.1} parent=1 // pred_region
      %3654 = dma.done [#allocation3], 256
    $region73: #{bert_forward.1} parent=1 // pred_fallthru
      _
    %3655 = vsyncpa [#allocation3], 1

</llo_original>
